<compile_context>
chip_gen: v7x
topology: tpu7x:2x2x1
jax: 0.10.0
libtpu: 0.0.40
codegen_flags: <defaults>
</compile_context>

<pallas_src>
import functools
import math

import jax
import jax.numpy as jnp
from jax.experimental import pallas as pl
from jax.experimental.pallas import tpu as pltpu


# ------------------------------ fused MHAtt kernel ----------------------------
def mhatt_kernel(q_ref, k_ref, v_ref, mask_ref,
                 wq_ref, bq_ref, wk_ref, bk_ref,
                 wv_ref, bv_ref, wm_ref, bm_ref,
                 o_ref, atted_ref, *, num_heads, head_dim):
    """One batch element: projections + per-head attention + merge projection."""
    f32 = jnp.float32
    q = q_ref[0]                                      # (Sq, H)
    k = k_ref[0]                                      # (Sk, H)
    v = v_ref[0]                                      # (Sk, H)
    sq = q.shape[0]
    sk = k.shape[0]

    # --- q/k/v projections (weights stay resident in VMEM across the grid) ----
    q_p = jnp.dot(q, wq_ref[...], preferred_element_type=f32) + bq_ref[...]
    k_p = jnp.dot(k, wk_ref[...], preferred_element_type=f32) + bk_ref[...]
    v_p = jnp.dot(v, wv_ref[...], preferred_element_type=f32) + bv_ref[...]

    # --- mask compare + broadcast hoisted out of the head loop (done once) ----
    mask_b = jnp.broadcast_to(mask_ref[0] > 0.0, (sq, sk))   # True = masked key

    scale = 1.0 / math.sqrt(head_dim)
    for h in range(num_heads):                        # static unroll over heads
        lo = h * head_dim
        hi = lo + head_dim
        qh = q_p[:, lo:hi]
        kh = k_p[:, lo:hi]
        vh = v_p[:, lo:hi]
        # scores = Q_h @ K_h^T / sqrt(d)  (contract last dims; no transpose)
        s = jax.lax.dot_general(qh, kh, (((1,), (1,)), ((), ())),
                                preferred_element_type=f32) * scale
        s = jnp.where(mask_b, -1e9, s)                # masked_fill(mask, -1e9)
        m = jnp.max(s, axis=-1, keepdims=True)
        p = jnp.exp(s - m)
        l = jnp.sum(p, axis=-1, keepdims=True)
        # TODO(synk): attention-map dropout omitted (eval / DROPOUT_R=0 semantics).
        o_h = jnp.dot(p, vh, preferred_element_type=f32)
        o_h = o_h * pl.reciprocal(l, approx=True)     # EUP recip, frees VPU slots
        # Write each head's slab immediately -> bounded live ranges, no concat.
        atted_ref[:, lo:hi] = o_h

    # --- linear_merge, single lane-dense (128-wide) store ---------------------
    out = jnp.dot(atted_ref[...], wm_ref[...], preferred_element_type=f32)
    out = out + bm_ref[...]
    o_ref[0] = out.astype(o_ref.dtype)


def mhatt_pallas(v, k, q, mask, params, *, num_heads):
    """Fused Pallas MHAtt forward.

    v, k, q : (B, S, HIDDEN) f32 (k/v may have a different seq length than q)
    mask    : (B, Sk) bool/int, True = masked key position (as in masked_fill)
    params  : weights in (in, out) layout (i.e. torch weight.T) + biases.
    """
    B, Sq, H = q.shape
    Sk = k.shape[1]
    assert H % num_heads == 0
    head_dim = H // num_heads

    mask_f = mask.astype(jnp.float32).reshape(B, 1, Sk)
    row = lambda b: b.reshape(1, H)
    const = lambda b: (0, 0)   # weights/biases: same block every step -> DMA'd once

    kernel = functools.partial(mhatt_kernel, num_heads=num_heads,
                               head_dim=head_dim)

    # TODO(synk): for large Sk, add a flash-style KV grid axis ("arbitrary") with
    # m/l/acc VMEM scratch instead of full-Sk K/V blocks (matters first on v7x's
    # 64 MiB VMEM).  At these shapes full-Sk blocks are a few KiB.
    return pl.pallas_call(
        kernel,
        out_shape=jax.ShapeDtypeStruct((B, Sq, H), q.dtype),
        grid_spec=pltpu.PrefetchScalarGridSpec(
            num_scalar_prefetch=0,
            grid=(B,),
            in_specs=[
                pl.BlockSpec((1, Sq, H), lambda b: (b, 0, 0)),   # q
                pl.BlockSpec((1, Sk, H), lambda b: (b, 0, 0)),   # k
                pl.BlockSpec((1, Sk, H), lambda b: (b, 0, 0)),   # v
                pl.BlockSpec((1, 1, Sk), lambda b: (b, 0, 0)),   # mask
                pl.BlockSpec((H, H), const), pl.BlockSpec((1, H), const),  # wq, bq
                pl.BlockSpec((H, H), const), pl.BlockSpec((1, H), const),  # wk, bk
                pl.BlockSpec((H, H), const), pl.BlockSpec((1, H), const),  # wv, bv
                pl.BlockSpec((H, H), const), pl.BlockSpec((1, H), const),  # wm, bm
            ],
            out_specs=pl.BlockSpec((1, Sq, H), lambda b: (b, 0, 0)),
            scratch_shapes=[pltpu.VMEM((Sq, H), jnp.float32)],
        ),
        compiler_params=pltpu.CompilerParams(
            dimension_semantics=("parallel",)),
    )(q, k, v, mask_f,
      params["wq"], row(params["bq"]),
      params["wk"], row(params["bk"]),
      params["wv"], row(params["bv"]),
      params["wm"], row(params["bm"]))


# --------------------------------- pure-JAX reference -------------------------
def mhatt_reference(v, k, q, mask, params, *, num_heads):
    B, Sq, H = q.shape
    d = H // num_heads
    hi = jax.lax.Precision.HIGHEST

    def lin(x, w, b):
        return jnp.dot(x, w, precision=hi) + b

    def split(x):
        return x.reshape(B, -1, num_heads, d).transpose(0, 2, 1, 3)

    qp = split(lin(q, params["wq"], params["bq"]))
    kp = split(lin(k, params["wk"], params["bk"]))
    vp = split(lin(v, params["wv"], params["bv"]))

    scores = jnp.einsum("bhqd,bhkd->bhqk", qp, kp, precision=hi) / math.sqrt(d)
    scores = jnp.where(mask[:, None, None, :], -1e9, scores)
    att = jax.nn.softmax(scores, axis=-1)
    atted = jnp.einsum("bhqk,bhkd->bhqd", att, vp, precision=hi)
    atted = atted.transpose(0, 2, 1, 3).reshape(B, Sq, H)
    return lin(atted, params["wm"], params["bm"])


if __name__ == "__main__":
    # __C: HIDDEN_SIZE=128, MULTI_HEAD=8, DROPOUT_R=0.0 (eval semantics)
    HIDDEN, HEADS = 128, 8
    B, S = 2, 16

    key = jax.random.PRNGKey(0)
    kv_, kk_, kq_, *wkeys = jax.random.split(key, 11)

    v_in = jax.random.normal(kv_, (B, S, HIDDEN), jnp.float32)
    k_in = jax.random.normal(kk_, (B, S, HIDDEN), jnp.float32)
    q_in = jax.random.normal(kq_, (B, S, HIDDEN), jnp.float32)

    # Padding mask: True = masked key position (like masked_fill in torch).
    lengths = jnp.array([S, S - 5], dtype=jnp.int32)
    mask = jnp.arange(S)[None, :] >= lengths[:, None]          # (B, S) bool

    bound = 1.0 / math.sqrt(HIDDEN)
    names = ["wq", "bq", "wk", "bk", "wv", "bv", "wm", "bm"]
    params = {}
    for i, name in enumerate(names):
        shape = (HIDDEN, HIDDEN) if name.startswith("w") else (HIDDEN,)
        params[name] = jax.random.uniform(wkeys[i], shape, jnp.float32,
                                          -bound, bound)

    y = mhatt_pallas(v_in, k_in, q_in, mask, params, num_heads=HEADS)
    jax.block_until_ready(y)

    y_ref = mhatt_reference(v_in, k_in, q_in, mask, params, num_heads=HEADS)
    assert y.shape == (B, S, HIDDEN)
    err = float(jnp.max(jnp.abs(y - y_ref)))
    # Slight extra slack for the approx (EUP) reciprocal on the softmax denom.
    assert jnp.allclose(y, y_ref, atol=2e-3, rtol=2e-3), f"max abs err {err}"

    print("KERNEL_OK")
</pallas_src>

<mosaic_0001>
module attributes {stable_mosaic.version = 11 : i64} {
  func.func @mhatt_kernel(%arg0: i32, %arg1: memref<1x16x128xf32, #tpu.memory_space<vmem>>, %arg2: memref<1x16x128xf32, #tpu.memory_space<vmem>>, %arg3: memref<1x16x128xf32, #tpu.memory_space<vmem>>, %arg4: memref<1x1x16xf32, #tpu.memory_space<vmem>>, %arg5: memref<128x128xf32, #tpu.memory_space<vmem>>, %arg6: memref<1x128xf32, #tpu.memory_space<vmem>>, %arg7: memref<128x128xf32, #tpu.memory_space<vmem>>, %arg8: memref<1x128xf32, #tpu.memory_space<vmem>>, %arg9: memref<128x128xf32, #tpu.memory_space<vmem>>, %arg10: memref<1x128xf32, #tpu.memory_space<vmem>>, %arg11: memref<128x128xf32, #tpu.memory_space<vmem>>, %arg12: memref<1x128xf32, #tpu.memory_space<vmem>>, %arg13: memref<1x16x128xf32, #tpu.memory_space<vmem>>, %arg14: memref<16x128xf32, #tpu.memory_space<vmem>>) attributes {dimension_semantics = [#tpu.dimension_semantics<parallel>], iteration_bounds = array<i64: 2>, scalar_prefetch = 0 : i64, scratch_operands = 1 : i64, tpu.core_type = #tpu.core_type<tc>, window_params = [{transform_indices = @transform_0, window_bounds = array<i64: 1, 16, 128>}, {transform_indices = @transform_1, window_bounds = array<i64: 1, 16, 128>}, {transform_indices = @transform_2, window_bounds = array<i64: 1, 16, 128>}, {transform_indices = @transform_3, window_bounds = array<i64: 1, 1, 16>}, {pipeline_mode = #tpu.pipeline_mode<synchronous>, transform_indices = @transform_4, window_bounds = array<i64: 128, 128>}, {pipeline_mode = #tpu.pipeline_mode<synchronous>, transform_indices = @transform_5, window_bounds = array<i64: 1, 128>}, {pipeline_mode = #tpu.pipeline_mode<synchronous>, transform_indices = @transform_6, window_bounds = array<i64: 128, 128>}, {pipeline_mode = #tpu.pipeline_mode<synchronous>, transform_indices = @transform_7, window_bounds = array<i64: 1, 128>}, {pipeline_mode = #tpu.pipeline_mode<synchronous>, transform_indices = @transform_8, window_bounds = array<i64: 128, 128>}, {pipeline_mode = #tpu.pipeline_mode<synchronous>, transform_indices = @transform_9, window_bounds = array<i64: 1, 128>}, {pipeline_mode = #tpu.pipeline_mode<synchronous>, transform_indices = @transform_10, window_bounds = array<i64: 128, 128>}, {pipeline_mode = #tpu.pipeline_mode<synchronous>, transform_indices = @transform_11, window_bounds = array<i64: 1, 128>}, {transform_indices = @transform_12, window_bounds = array<i64: 1, 16, 128>}]} {
    %c0 = arith.constant 0 : index
    %c0_0 = arith.constant 0 : index
    %c0_1 = arith.constant 0 : index
    %0 = vector.load %arg1[%c0, %c0_0, %c0_1] : memref<1x16x128xf32, #tpu.memory_space<vmem>>, vector<1x16x128xf32>
    %1 = vector.shape_cast %0 : vector<1x16x128xf32> to vector<16x128xf32>
    %c0_2 = arith.constant 0 : index
    %c0_3 = arith.constant 0 : index
    %c0_4 = arith.constant 0 : index
    %2 = vector.load %arg2[%c0_2, %c0_3, %c0_4] : memref<1x16x128xf32, #tpu.memory_space<vmem>>, vector<1x16x128xf32>
    %3 = vector.shape_cast %2 : vector<1x16x128xf32> to vector<16x128xf32>
    %c0_5 = arith.constant 0 : index
    %c0_6 = arith.constant 0 : index
    %c0_7 = arith.constant 0 : index
    %4 = vector.load %arg3[%c0_5, %c0_6, %c0_7] : memref<1x16x128xf32, #tpu.memory_space<vmem>>, vector<1x16x128xf32>
    %5 = vector.shape_cast %4 : vector<1x16x128xf32> to vector<16x128xf32>
    %c0_8 = arith.constant 0 : index
    %c0_9 = arith.constant 0 : index
    %6 = vector.load %arg5[%c0_8, %c0_9] : memref<128x128xf32, #tpu.memory_space<vmem>>, vector<128x128xf32>
    %cst = arith.constant dense<0.000000e+00> : vector<16x128xf32>
    %7 = tpu.matmul %1, %6, %cst {dimension_numbers = #tpu.dot_dimension_numbers<[1], [0], [0], [1], [0, 0, 1, 1], [], []>} : vector<16x128xf32>, vector<128x128xf32>, vector<16x128xf32> -> vector<16x128xf32>
    %c0_10 = arith.constant 0 : index
    %c0_11 = arith.constant 0 : index
    %8 = vector.load %arg6[%c0_10, %c0_11] : memref<1x128xf32, #tpu.memory_space<vmem>>, vector<1x128xf32>
    %9 = vector.broadcast %8 : vector<1x128xf32> to vector<16x128xf32>
    %10 = arith.addf %7, %9 : vector<16x128xf32>
    %c0_12 = arith.constant 0 : index
    %c0_13 = arith.constant 0 : index
    %11 = vector.load %arg7[%c0_12, %c0_13] : memref<128x128xf32, #tpu.memory_space<vmem>>, vector<128x128xf32>
    %cst_14 = arith.constant dense<0.000000e+00> : vector<16x128xf32>
    %12 = tpu.matmul %3, %11, %cst_14 {dimension_numbers = #tpu.dot_dimension_numbers<[1], [0], [0], [1], [0, 0, 1, 1], [], []>} : vector<16x128xf32>, vector<128x128xf32>, vector<16x128xf32> -> vector<16x128xf32>
    %c0_15 = arith.constant 0 : index
    %c0_16 = arith.constant 0 : index
    %13 = vector.load %arg8[%c0_15, %c0_16] : memref<1x128xf32, #tpu.memory_space<vmem>>, vector<1x128xf32>
    %14 = vector.broadcast %13 : vector<1x128xf32> to vector<16x128xf32>
    %15 = arith.addf %12, %14 : vector<16x128xf32>
    %c0_17 = arith.constant 0 : index
    %c0_18 = arith.constant 0 : index
    %16 = vector.load %arg9[%c0_17, %c0_18] : memref<128x128xf32, #tpu.memory_space<vmem>>, vector<128x128xf32>
    %cst_19 = arith.constant dense<0.000000e+00> : vector<16x128xf32>
    %17 = tpu.matmul %5, %16, %cst_19 {dimension_numbers = #tpu.dot_dimension_numbers<[1], [0], [0], [1], [0, 0, 1, 1], [], []>} : vector<16x128xf32>, vector<128x128xf32>, vector<16x128xf32> -> vector<16x128xf32>
    %c0_20 = arith.constant 0 : index
    %c0_21 = arith.constant 0 : index
    %18 = vector.load %arg10[%c0_20, %c0_21] : memref<1x128xf32, #tpu.memory_space<vmem>>, vector<1x128xf32>
    %19 = vector.broadcast %18 : vector<1x128xf32> to vector<16x128xf32>
    %20 = arith.addf %17, %19 : vector<16x128xf32>
    %c0_22 = arith.constant 0 : index
    %c0_23 = arith.constant 0 : index
    %c0_24 = arith.constant 0 : index
    %21 = vector.load %arg4[%c0_22, %c0_23, %c0_24] : memref<1x1x16xf32, #tpu.memory_space<vmem>>, vector<1x1x16xf32>
    %22 = vector.shape_cast %21 : vector<1x1x16xf32> to vector<1x16xf32>
    %cst_25 = arith.constant 0.000000e+00 : f32
    %23 = vector.broadcast %cst_25 : f32 to vector<1x16xf32>
    %24 = arith.cmpf ogt, %22, %23 : vector<1x16xf32>
    %25 = vector.shape_cast %24 : vector<1x16xi1> to vector<1x16xi1>
    %26 = vector.broadcast %25 : vector<1x16xi1> to vector<16x16xi1>
    %27 = vector.extract_strided_slice %10 {offsets = [0, 0], sizes = [16, 16], strides = [1, 1]} : vector<16x128xf32> to vector<16x16xf32>
    %28 = vector.extract_strided_slice %15 {offsets = [0, 0], sizes = [16, 16], strides = [1, 1]} : vector<16x128xf32> to vector<16x16xf32>
    %29 = vector.extract_strided_slice %20 {offsets = [0, 0], sizes = [16, 16], strides = [1, 1]} : vector<16x128xf32> to vector<16x16xf32>
    %cst_26 = arith.constant dense<0.000000e+00> : vector<16x16xf32>
    %30 = tpu.matmul %27, %28, %cst_26 {dimension_numbers = #tpu.dot_dimension_numbers<[1], [1], [0], [0], [0, 0, 1, 0], [], []>} : vector<16x16xf32>, vector<16x16xf32>, vector<16x16xf32> -> vector<16x16xf32>
    %cst_27 = arith.constant 2.500000e-01 : f32
    %31 = vector.broadcast %cst_27 : f32 to vector<16x16xf32>
    %32 = arith.mulf %30, %31 : vector<16x16xf32>
    %cst_28 = arith.constant -1.000000e+09 : f32
    %33 = vector.broadcast %cst_28 : f32 to vector<16x16xf32>
    %34 = arith.select %26, %33, %32 : vector<16x16xi1>, vector<16x16xf32>
    %cst_29 = arith.constant dense<0xFF800000> : vector<16xf32>
    %35 = vector.multi_reduction <maximumf>, %34, %cst_29 [1] : vector<16x16xf32> to vector<16xf32>
    %36 = vector.shape_cast %35 : vector<16xf32> to vector<16x1xf32>
    %37 = vector.broadcast %36 : vector<16x1xf32> to vector<16x16xf32>
    %38 = arith.subf %34, %37 : vector<16x16xf32>
    %39 = math.exp %38 : vector<16x16xf32>
    %cst_30 = arith.constant dense<0.000000e+00> : vector<16xf32>
    %40 = vector.multi_reduction <add>, %39, %cst_30 [1] : vector<16x16xf32> to vector<16xf32>
    %41 = vector.shape_cast %40 : vector<16xf32> to vector<16x1xf32>
    %cst_31 = arith.constant dense<0.000000e+00> : vector<16x16xf32>
    %42 = tpu.matmul %39, %29, %cst_31 {dimension_numbers = #tpu.dot_dimension_numbers<[1], [0], [0], [1], [0, 0, 1, 1], [], []>} : vector<16x16xf32>, vector<16x16xf32>, vector<16x16xf32> -> vector<16x16xf32>
    %43 = tpu.reciprocal %41 {approx = true} : vector<16x1xf32> -> vector<16x1xf32>
    %44 = vector.broadcast %43 : vector<16x1xf32> to vector<16x16xf32>
    %45 = arith.mulf %42, %44 : vector<16x16xf32>
    %c0_32 = arith.constant 0 : index
    %c0_33 = arith.constant 0 : index
    %46 = vector.load %arg14[%c0_32, %c0_33] : memref<16x128xf32, #tpu.memory_space<vmem>>, vector<16x16xf32>
    tpu.vector_store %arg14[%c0_32, %c0_33], %45 {strides = array<i32>} : memref<16x128xf32, #tpu.memory_space<vmem>>, vector<16x16xf32>,
    %47 = vector.extract_strided_slice %10 {offsets = [0, 16], sizes = [16, 16], strides = [1, 1]} : vector<16x128xf32> to vector<16x16xf32>
    %48 = vector.extract_strided_slice %15 {offsets = [0, 16], sizes = [16, 16], strides = [1, 1]} : vector<16x128xf32> to vector<16x16xf32>
    %49 = vector.extract_strided_slice %20 {offsets = [0, 16], sizes = [16, 16], strides = [1, 1]} : vector<16x128xf32> to vector<16x16xf32>
    %cst_34 = arith.constant dense<0.000000e+00> : vector<16x16xf32>
    %50 = tpu.matmul %47, %48, %cst_34 {dimension_numbers = #tpu.dot_dimension_numbers<[1], [1], [0], [0], [0, 0, 1, 0], [], []>} : vector<16x16xf32>, vector<16x16xf32>, vector<16x16xf32> -> vector<16x16xf32>
    %cst_35 = arith.constant 2.500000e-01 : f32
    %51 = vector.broadcast %cst_35 : f32 to vector<16x16xf32>
    %52 = arith.mulf %50, %51 : vector<16x16xf32>
    %cst_36 = arith.constant -1.000000e+09 : f32
    %53 = vector.broadcast %cst_36 : f32 to vector<16x16xf32>
    %54 = arith.select %26, %53, %52 : vector<16x16xi1>, vector<16x16xf32>
    %cst_37 = arith.constant dense<0xFF800000> : vector<16xf32>
    %55 = vector.multi_reduction <maximumf>, %54, %cst_37 [1] : vector<16x16xf32> to vector<16xf32>
    %56 = vector.shape_cast %55 : vector<16xf32> to vector<16x1xf32>
    %57 = vector.broadcast %56 : vector<16x1xf32> to vector<16x16xf32>
    %58 = arith.subf %54, %57 : vector<16x16xf32>
    %59 = math.exp %58 : vector<16x16xf32>
    %cst_38 = arith.constant dense<0.000000e+00> : vector<16xf32>
    %60 = vector.multi_reduction <add>, %59, %cst_38 [1] : vector<16x16xf32> to vector<16xf32>
    %61 = vector.shape_cast %60 : vector<16xf32> to vector<16x1xf32>
    %cst_39 = arith.constant dense<0.000000e+00> : vector<16x16xf32>
    %62 = tpu.matmul %59, %49, %cst_39 {dimension_numbers = #tpu.dot_dimension_numbers<[1], [0], [0], [1], [0, 0, 1, 1], [], []>} : vector<16x16xf32>, vector<16x16xf32>, vector<16x16xf32> -> vector<16x16xf32>
    %63 = tpu.reciprocal %61 {approx = true} : vector<16x1xf32> -> vector<16x1xf32>
    %64 = vector.broadcast %63 : vector<16x1xf32> to vector<16x16xf32>
    %65 = arith.mulf %62, %64 : vector<16x16xf32>
    %c0_40 = arith.constant 0 : index
    %c16 = arith.constant 16 : index
    %66 = vector.load %arg14[%c0_40, %c16] : memref<16x128xf32, #tpu.memory_space<vmem>>, vector<16x16xf32>
    tpu.vector_store %arg14[%c0_40, %c16], %65 {strides = array<i32>} : memref<16x128xf32, #tpu.memory_space<vmem>>, vector<16x16xf32>,
    %67 = vector.extract_strided_slice %10 {offsets = [0, 32], sizes = [16, 16], strides = [1, 1]} : vector<16x128xf32> to vector<16x16xf32>
    %68 = vector.extract_strided_slice %15 {offsets = [0, 32], sizes = [16, 16], strides = [1, 1]} : vector<16x128xf32> to vector<16x16xf32>
    %69 = vector.extract_strided_slice %20 {offsets = [0, 32], sizes = [16, 16], strides = [1, 1]} : vector<16x128xf32> to vector<16x16xf32>
    %cst_41 = arith.constant dense<0.000000e+00> : vector<16x16xf32>
    %70 = tpu.matmul %67, %68, %cst_41 {dimension_numbers = #tpu.dot_dimension_numbers<[1], [1], [0], [0], [0, 0, 1, 0], [], []>} : vector<16x16xf32>, vector<16x16xf32>, vector<16x16xf32> -> vector<16x16xf32>
    %cst_42 = arith.constant 2.500000e-01 : f32
    %71 = vector.broadcast %cst_42 : f32 to vector<16x16xf32>
    %72 = arith.mulf %70, %71 : vector<16x16xf32>
    %cst_43 = arith.constant -1.000000e+09 : f32
    %73 = vector.broadcast %cst_43 : f32 to vector<16x16xf32>
    %74 = arith.select %26, %73, %72 : vector<16x16xi1>, vector<16x16xf32>
    %cst_44 = arith.constant dense<0xFF800000> : vector<16xf32>
    %75 = vector.multi_reduction <maximumf>, %74, %cst_44 [1] : vector<16x16xf32> to vector<16xf32>
    %76 = vector.shape_cast %75 : vector<16xf32> to vector<16x1xf32>
    %77 = vector.broadcast %76 : vector<16x1xf32> to vector<16x16xf32>
    %78 = arith.subf %74, %77 : vector<16x16xf32>
    %79 = math.exp %78 : vector<16x16xf32>
    %cst_45 = arith.constant dense<0.000000e+00> : vector<16xf32>
    %80 = vector.multi_reduction <add>, %79, %cst_45 [1] : vector<16x16xf32> to vector<16xf32>
    %81 = vector.shape_cast %80 : vector<16xf32> to vector<16x1xf32>
    %cst_46 = arith.constant dense<0.000000e+00> : vector<16x16xf32>
    %82 = tpu.matmul %79, %69, %cst_46 {dimension_numbers = #tpu.dot_dimension_numbers<[1], [0], [0], [1], [0, 0, 1, 1], [], []>} : vector<16x16xf32>, vector<16x16xf32>, vector<16x16xf32> -> vector<16x16xf32>
    %83 = tpu.reciprocal %81 {approx = true} : vector<16x1xf32> -> vector<16x1xf32>
    %84 = vector.broadcast %83 : vector<16x1xf32> to vector<16x16xf32>
    %85 = arith.mulf %82, %84 : vector<16x16xf32>
    %c0_47 = arith.constant 0 : index
    %c32 = arith.constant 32 : index
    %86 = vector.load %arg14[%c0_47, %c32] : memref<16x128xf32, #tpu.memory_space<vmem>>, vector<16x16xf32>
    tpu.vector_store %arg14[%c0_47, %c32], %85 {strides = array<i32>} : memref<16x128xf32, #tpu.memory_space<vmem>>, vector<16x16xf32>,
    %87 = vector.extract_strided_slice %10 {offsets = [0, 48], sizes = [16, 16], strides = [1, 1]} : vector<16x128xf32> to vector<16x16xf32>
    %88 = vector.extract_strided_slice %15 {offsets = [0, 48], sizes = [16, 16], strides = [1, 1]} : vector<16x128xf32> to vector<16x16xf32>
    %89 = vector.extract_strided_slice %20 {offsets = [0, 48], sizes = [16, 16], strides = [1, 1]} : vector<16x128xf32> to vector<16x16xf32>
    %cst_48 = arith.constant dense<0.000000e+00> : vector<16x16xf32>
    %90 = tpu.matmul %87, %88, %cst_48 {dimension_numbers = #tpu.dot_dimension_numbers<[1], [1], [0], [0], [0, 0, 1, 0], [], []>} : vector<16x16xf32>, vector<16x16xf32>, vector<16x16xf32> -> vector<16x16xf32>
    %cst_49 = arith.constant 2.500000e-01 : f32
    %91 = vector.broadcast %cst_49 : f32 to vector<16x16xf32>
    %92 = arith.mulf %90, %91 : vector<16x16xf32>
    %cst_50 = arith.constant -1.000000e+09 : f32
    %93 = vector.broadcast %cst_50 : f32 to vector<16x16xf32>
    %94 = arith.select %26, %93, %92 : vector<16x16xi1>, vector<16x16xf32>
    %cst_51 = arith.constant dense<0xFF800000> : vector<16xf32>
    %95 = vector.multi_reduction <maximumf>, %94, %cst_51 [1] : vector<16x16xf32> to vector<16xf32>
    %96 = vector.shape_cast %95 : vector<16xf32> to vector<16x1xf32>
    %97 = vector.broadcast %96 : vector<16x1xf32> to vector<16x16xf32>
    %98 = arith.subf %94, %97 : vector<16x16xf32>
    %99 = math.exp %98 : vector<16x16xf32>
    %cst_52 = arith.constant dense<0.000000e+00> : vector<16xf32>
    %100 = vector.multi_reduction <add>, %99, %cst_52 [1] : vector<16x16xf32> to vector<16xf32>
    %101 = vector.shape_cast %100 : vector<16xf32> to vector<16x1xf32>
    %cst_53 = arith.constant dense<0.000000e+00> : vector<16x16xf32>
    %102 = tpu.matmul %99, %89, %cst_53 {dimension_numbers = #tpu.dot_dimension_numbers<[1], [0], [0], [1], [0, 0, 1, 1], [], []>} : vector<16x16xf32>, vector<16x16xf32>, vector<16x16xf32> -> vector<16x16xf32>
    %103 = tpu.reciprocal %101 {approx = true} : vector<16x1xf32> -> vector<16x1xf32>
    %104 = vector.broadcast %103 : vector<16x1xf32> to vector<16x16xf32>
    %105 = arith.mulf %102, %104 : vector<16x16xf32>
    %c0_54 = arith.constant 0 : index
    %c48 = arith.constant 48 : index
    %106 = vector.load %arg14[%c0_54, %c48] : memref<16x128xf32, #tpu.memory_space<vmem>>, vector<16x16xf32>
    tpu.vector_store %arg14[%c0_54, %c48], %105 {strides = array<i32>} : memref<16x128xf32, #tpu.memory_space<vmem>>, vector<16x16xf32>,
    %107 = vector.extract_strided_slice %10 {offsets = [0, 64], sizes = [16, 16], strides = [1, 1]} : vector<16x128xf32> to vector<16x16xf32>
    %108 = vector.extract_strided_slice %15 {offsets = [0, 64], sizes = [16, 16], strides = [1, 1]} : vector<16x128xf32> to vector<16x16xf32>
    %109 = vector.extract_strided_slice %20 {offsets = [0, 64], sizes = [16, 16], strides = [1, 1]} : vector<16x128xf32> to vector<16x16xf32>
    %cst_55 = arith.constant dense<0.000000e+00> : vector<16x16xf32>
    %110 = tpu.matmul %107, %108, %cst_55 {dimension_numbers = #tpu.dot_dimension_numbers<[1], [1], [0], [0], [0, 0, 1, 0], [], []>} : vector<16x16xf32>, vector<16x16xf32>, vector<16x16xf32> -> vector<16x16xf32>
    %cst_56 = arith.constant 2.500000e-01 : f32
    %111 = vector.broadcast %cst_56 : f32 to vector<16x16xf32>
    %112 = arith.mulf %110, %111 : vector<16x16xf32>
    %cst_57 = arith.constant -1.000000e+09 : f32
    %113 = vector.broadcast %cst_57 : f32 to vector<16x16xf32>
    %114 = arith.select %26, %113, %112 : vector<16x16xi1>, vector<16x16xf32>
    %cst_58 = arith.constant dense<0xFF800000> : vector<16xf32>
    %115 = vector.multi_reduction <maximumf>, %114, %cst_58 [1] : vector<16x16xf32> to vector<16xf32>
    %116 = vector.shape_cast %115 : vector<16xf32> to vector<16x1xf32>
    %117 = vector.broadcast %116 : vector<16x1xf32> to vector<16x16xf32>
    %118 = arith.subf %114, %117 : vector<16x16xf32>
    %119 = math.exp %118 : vector<16x16xf32>
    %cst_59 = arith.constant dense<0.000000e+00> : vector<16xf32>
    %120 = vector.multi_reduction <add>, %119, %cst_59 [1] : vector<16x16xf32> to vector<16xf32>
    %121 = vector.shape_cast %120 : vector<16xf32> to vector<16x1xf32>
    %cst_60 = arith.constant dense<0.000000e+00> : vector<16x16xf32>
    %122 = tpu.matmul %119, %109, %cst_60 {dimension_numbers = #tpu.dot_dimension_numbers<[1], [0], [0], [1], [0, 0, 1, 1], [], []>} : vector<16x16xf32>, vector<16x16xf32>, vector<16x16xf32> -> vector<16x16xf32>
    %123 = tpu.reciprocal %121 {approx = true} : vector<16x1xf32> -> vector<16x1xf32>
    %124 = vector.broadcast %123 : vector<16x1xf32> to vector<16x16xf32>
    %125 = arith.mulf %122, %124 : vector<16x16xf32>
    %c0_61 = arith.constant 0 : index
    %c64 = arith.constant 64 : index
    %126 = vector.load %arg14[%c0_61, %c64] : memref<16x128xf32, #tpu.memory_space<vmem>>, vector<16x16xf32>
    tpu.vector_store %arg14[%c0_61, %c64], %125 {strides = array<i32>} : memref<16x128xf32, #tpu.memory_space<vmem>>, vector<16x16xf32>,
    %127 = vector.extract_strided_slice %10 {offsets = [0, 80], sizes = [16, 16], strides = [1, 1]} : vector<16x128xf32> to vector<16x16xf32>
    %128 = vector.extract_strided_slice %15 {offsets = [0, 80], sizes = [16, 16], strides = [1, 1]} : vector<16x128xf32> to vector<16x16xf32>
    %129 = vector.extract_strided_slice %20 {offsets = [0, 80], sizes = [16, 16], strides = [1, 1]} : vector<16x128xf32> to vector<16x16xf32>
    %cst_62 = arith.constant dense<0.000000e+00> : vector<16x16xf32>
    %130 = tpu.matmul %127, %128, %cst_62 {dimension_numbers = #tpu.dot_dimension_numbers<[1], [1], [0], [0], [0, 0, 1, 0], [], []>} : vector<16x16xf32>, vector<16x16xf32>, vector<16x16xf32> -> vector<16x16xf32>
    %cst_63 = arith.constant 2.500000e-01 : f32
    %131 = vector.broadcast %cst_63 : f32 to vector<16x16xf32>
    %132 = arith.mulf %130, %131 : vector<16x16xf32>
    %cst_64 = arith.constant -1.000000e+09 : f32
    %133 = vector.broadcast %cst_64 : f32 to vector<16x16xf32>
    %134 = arith.select %26, %133, %132 : vector<16x16xi1>, vector<16x16xf32>
    %cst_65 = arith.constant dense<0xFF800000> : vector<16xf32>
    %135 = vector.multi_reduction <maximumf>, %134, %cst_65 [1] : vector<16x16xf32> to vector<16xf32>
    %136 = vector.shape_cast %135 : vector<16xf32> to vector<16x1xf32>
    %137 = vector.broadcast %136 : vector<16x1xf32> to vector<16x16xf32>
    %138 = arith.subf %134, %137 : vector<16x16xf32>
    %139 = math.exp %138 : vector<16x16xf32>
    %cst_66 = arith.constant dense<0.000000e+00> : vector<16xf32>
    %140 = vector.multi_reduction <add>, %139, %cst_66 [1] : vector<16x16xf32> to vector<16xf32>
    %141 = vector.shape_cast %140 : vector<16xf32> to vector<16x1xf32>
    %cst_67 = arith.constant dense<0.000000e+00> : vector<16x16xf32>
    %142 = tpu.matmul %139, %129, %cst_67 {dimension_numbers = #tpu.dot_dimension_numbers<[1], [0], [0], [1], [0, 0, 1, 1], [], []>} : vector<16x16xf32>, vector<16x16xf32>, vector<16x16xf32> -> vector<16x16xf32>
    %143 = tpu.reciprocal %141 {approx = true} : vector<16x1xf32> -> vector<16x1xf32>
    %144 = vector.broadcast %143 : vector<16x1xf32> to vector<16x16xf32>
    %145 = arith.mulf %142, %144 : vector<16x16xf32>
    %c0_68 = arith.constant 0 : index
    %c80 = arith.constant 80 : index
    %146 = vector.load %arg14[%c0_68, %c80] : memref<16x128xf32, #tpu.memory_space<vmem>>, vector<16x16xf32>
    tpu.vector_store %arg14[%c0_68, %c80], %145 {strides = array<i32>} : memref<16x128xf32, #tpu.memory_space<vmem>>, vector<16x16xf32>,
    %147 = vector.extract_strided_slice %10 {offsets = [0, 96], sizes = [16, 16], strides = [1, 1]} : vector<16x128xf32> to vector<16x16xf32>
    %148 = vector.extract_strided_slice %15 {offsets = [0, 96], sizes = [16, 16], strides = [1, 1]} : vector<16x128xf32> to vector<16x16xf32>
    %149 = vector.extract_strided_slice %20 {offsets = [0, 96], sizes = [16, 16], strides = [1, 1]} : vector<16x128xf32> to vector<16x16xf32>
    %cst_69 = arith.constant dense<0.000000e+00> : vector<16x16xf32>
    %150 = tpu.matmul %147, %148, %cst_69 {dimension_numbers = #tpu.dot_dimension_numbers<[1], [1], [0], [0], [0, 0, 1, 0], [], []>} : vector<16x16xf32>, vector<16x16xf32>, vector<16x16xf32> -> vector<16x16xf32>
    %cst_70 = arith.constant 2.500000e-01 : f32
    %151 = vector.broadcast %cst_70 : f32 to vector<16x16xf32>
    %152 = arith.mulf %150, %151 : vector<16x16xf32>
    %cst_71 = arith.constant -1.000000e+09 : f32
    %153 = vector.broadcast %cst_71 : f32 to vector<16x16xf32>
    %154 = arith.select %26, %153, %152 : vector<16x16xi1>, vector<16x16xf32>
    %cst_72 = arith.constant dense<0xFF800000> : vector<16xf32>
    %155 = vector.multi_reduction <maximumf>, %154, %cst_72 [1] : vector<16x16xf32> to vector<16xf32>
    %156 = vector.shape_cast %155 : vector<16xf32> to vector<16x1xf32>
    %157 = vector.broadcast %156 : vector<16x1xf32> to vector<16x16xf32>
    %158 = arith.subf %154, %157 : vector<16x16xf32>
    %159 = math.exp %158 : vector<16x16xf32>
    %cst_73 = arith.constant dense<0.000000e+00> : vector<16xf32>
    %160 = vector.multi_reduction <add>, %159, %cst_73 [1] : vector<16x16xf32> to vector<16xf32>
    %161 = vector.shape_cast %160 : vector<16xf32> to vector<16x1xf32>
    %cst_74 = arith.constant dense<0.000000e+00> : vector<16x16xf32>
    %162 = tpu.matmul %159, %149, %cst_74 {dimension_numbers = #tpu.dot_dimension_numbers<[1], [0], [0], [1], [0, 0, 1, 1], [], []>} : vector<16x16xf32>, vector<16x16xf32>, vector<16x16xf32> -> vector<16x16xf32>
    %163 = tpu.reciprocal %161 {approx = true} : vector<16x1xf32> -> vector<16x1xf32>
    %164 = vector.broadcast %163 : vector<16x1xf32> to vector<16x16xf32>
    %165 = arith.mulf %162, %164 : vector<16x16xf32>
    %c0_75 = arith.constant 0 : index
    %c96 = arith.constant 96 : index
    %166 = vector.load %arg14[%c0_75, %c96] : memref<16x128xf32, #tpu.memory_space<vmem>>, vector<16x16xf32>
    tpu.vector_store %arg14[%c0_75, %c96], %165 {strides = array<i32>} : memref<16x128xf32, #tpu.memory_space<vmem>>, vector<16x16xf32>,
    %167 = vector.extract_strided_slice %10 {offsets = [0, 112], sizes = [16, 16], strides = [1, 1]} : vector<16x128xf32> to vector<16x16xf32>
    %168 = vector.extract_strided_slice %15 {offsets = [0, 112], sizes = [16, 16], strides = [1, 1]} : vector<16x128xf32> to vector<16x16xf32>
    %169 = vector.extract_strided_slice %20 {offsets = [0, 112], sizes = [16, 16], strides = [1, 1]} : vector<16x128xf32> to vector<16x16xf32>
    %cst_76 = arith.constant dense<0.000000e+00> : vector<16x16xf32>
    %170 = tpu.matmul %167, %168, %cst_76 {dimension_numbers = #tpu.dot_dimension_numbers<[1], [1], [0], [0], [0, 0, 1, 0], [], []>} : vector<16x16xf32>, vector<16x16xf32>, vector<16x16xf32> -> vector<16x16xf32>
    %cst_77 = arith.constant 2.500000e-01 : f32
    %171 = vector.broadcast %cst_77 : f32 to vector<16x16xf32>
    %172 = arith.mulf %170, %171 : vector<16x16xf32>
    %cst_78 = arith.constant -1.000000e+09 : f32
    %173 = vector.broadcast %cst_78 : f32 to vector<16x16xf32>
    %174 = arith.select %26, %173, %172 : vector<16x16xi1>, vector<16x16xf32>
    %cst_79 = arith.constant dense<0xFF800000> : vector<16xf32>
    %175 = vector.multi_reduction <maximumf>, %174, %cst_79 [1] : vector<16x16xf32> to vector<16xf32>
    %176 = vector.shape_cast %175 : vector<16xf32> to vector<16x1xf32>
    %177 = vector.broadcast %176 : vector<16x1xf32> to vector<16x16xf32>
    %178 = arith.subf %174, %177 : vector<16x16xf32>
    %179 = math.exp %178 : vector<16x16xf32>
    %cst_80 = arith.constant dense<0.000000e+00> : vector<16xf32>
    %180 = vector.multi_reduction <add>, %179, %cst_80 [1] : vector<16x16xf32> to vector<16xf32>
    %181 = vector.shape_cast %180 : vector<16xf32> to vector<16x1xf32>
    %cst_81 = arith.constant dense<0.000000e+00> : vector<16x16xf32>
    %182 = tpu.matmul %179, %169, %cst_81 {dimension_numbers = #tpu.dot_dimension_numbers<[1], [0], [0], [1], [0, 0, 1, 1], [], []>} : vector<16x16xf32>, vector<16x16xf32>, vector<16x16xf32> -> vector<16x16xf32>
    %183 = tpu.reciprocal %181 {approx = true} : vector<16x1xf32> -> vector<16x1xf32>
    %184 = vector.broadcast %183 : vector<16x1xf32> to vector<16x16xf32>
    %185 = arith.mulf %182, %184 : vector<16x16xf32>
    %c0_82 = arith.constant 0 : index
    %c112 = arith.constant 112 : index
    %186 = vector.load %arg14[%c0_82, %c112] : memref<16x128xf32, #tpu.memory_space<vmem>>, vector<16x16xf32>
    tpu.vector_store %arg14[%c0_82, %c112], %185 {strides = array<i32>} : memref<16x128xf32, #tpu.memory_space<vmem>>, vector<16x16xf32>,
    %c0_83 = arith.constant 0 : index
    %c0_84 = arith.constant 0 : index
    %187 = vector.load %arg14[%c0_83, %c0_84] : memref<16x128xf32, #tpu.memory_space<vmem>>, vector<16x128xf32>
    %c0_85 = arith.constant 0 : index
    %c0_86 = arith.constant 0 : index
    %188 = vector.load %arg11[%c0_85, %c0_86] : memref<128x128xf32, #tpu.memory_space<vmem>>, vector<128x128xf32>
    %cst_87 = arith.constant dense<0.000000e+00> : vector<16x128xf32>
    %189 = tpu.matmul %187, %188, %cst_87 {dimension_numbers = #tpu.dot_dimension_numbers<[1], [0], [0], [1], [0, 0, 1, 1], [], []>} : vector<16x128xf32>, vector<128x128xf32>, vector<16x128xf32> -> vector<16x128xf32>
    %c0_88 = arith.constant 0 : index
    %c0_89 = arith.constant 0 : index
    %190 = vector.load %arg12[%c0_88, %c0_89] : memref<1x128xf32, #tpu.memory_space<vmem>>, vector<1x128xf32>
    %191 = vector.broadcast %190 : vector<1x128xf32> to vector<16x128xf32>
    %192 = arith.addf %189, %191 : vector<16x128xf32>
    %c0_90 = arith.constant 0 : index
    %c0_91 = arith.constant 0 : index
    %c0_92 = arith.constant 0 : index
    %193 = vector.load %arg13[%c0_90, %c0_91, %c0_92] : memref<1x16x128xf32, #tpu.memory_space<vmem>>, vector<1x16x128xf32>
    %194 = vector.shape_cast %193 : vector<1x16x128xf32> to vector<16x128xf32>
    %195 = vector.shape_cast %192 : vector<16x128xf32> to vector<1x16x128xf32>
    tpu.vector_store %arg13[%c0_90, %c0_91, %c0_92], %195 {strides = array<i32>} : memref<1x16x128xf32, #tpu.memory_space<vmem>>, vector<1x16x128xf32>,
    return
  }
  func.func @transform_0(%arg0: i32) -> (i32, i32, i32) {
    %c0_i32 = arith.constant 0 : i32
    %c0_i32_0 = arith.constant 0 : i32
    %c0_i32_1 = arith.constant 0 : i32
    return %arg0, %c0_i32, %c0_i32_0 : i32, i32, i32
  }
  func.func @transform_1(%arg0: i32) -> (i32, i32, i32) {
    %c0_i32 = arith.constant 0 : i32
    %c0_i32_0 = arith.constant 0 : i32
    %c0_i32_1 = arith.constant 0 : i32
    return %arg0, %c0_i32, %c0_i32_0 : i32, i32, i32
  }
  func.func @transform_2(%arg0: i32) -> (i32, i32, i32) {
    %c0_i32 = arith.constant 0 : i32
    %c0_i32_0 = arith.constant 0 : i32
    %c0_i32_1 = arith.constant 0 : i32
    return %arg0, %c0_i32, %c0_i32_0 : i32, i32, i32
  }
  func.func @transform_3(%arg0: i32) -> (i32, i32, i32) {
    %c0_i32 = arith.constant 0 : i32
    %c0_i32_0 = arith.constant 0 : i32
    %c0_i32_1 = arith.constant 0 : i32
    return %arg0, %c0_i32, %c0_i32_0 : i32, i32, i32
  }
  func.func @transform_4(%arg0: i32) -> (i32, i32) {
    %c0_i32 = arith.constant 0 : i32
    %c0_i32_0 = arith.constant 0 : i32
    %c0_i32_1 = arith.constant 0 : i32
    return %c0_i32, %c0_i32_0 : i32, i32
  }
  func.func @transform_5(%arg0: i32) -> (i32, i32) {
    %c0_i32 = arith.constant 0 : i32
    %c0_i32_0 = arith.constant 0 : i32
    %c0_i32_1 = arith.constant 0 : i32
    return %c0_i32, %c0_i32_0 : i32, i32
  }
  func.func @transform_6(%arg0: i32) -> (i32, i32) {
    %c0_i32 = arith.constant 0 : i32
    %c0_i32_0 = arith.constant 0 : i32
    %c0_i32_1 = arith.constant 0 : i32
    return %c0_i32, %c0_i32_0 : i32, i32
  }
  func.func @transform_7(%arg0: i32) -> (i32, i32) {
    %c0_i32 = arith.constant 0 : i32
    %c0_i32_0 = arith.constant 0 : i32
    %c0_i32_1 = arith.constant 0 : i32
    return %c0_i32, %c0_i32_0 : i32, i32
  }
  func.func @transform_8(%arg0: i32) -> (i32, i32) {
    %c0_i32 = arith.constant 0 : i32
    %c0_i32_0 = arith.constant 0 : i32
    %c0_i32_1 = arith.constant 0 : i32
    return %c0_i32, %c0_i32_0 : i32, i32
  }
  func.func @transform_9(%arg0: i32) -> (i32, i32) {
    %c0_i32 = arith.constant 0 : i32
    %c0_i32_0 = arith.constant 0 : i32
    %c0_i32_1 = arith.constant 0 : i32
    return %c0_i32, %c0_i32_0 : i32, i32
  }
  func.func @transform_10(%arg0: i32) -> (i32, i32) {
    %c0_i32 = arith.constant 0 : i32
    %c0_i32_0 = arith.constant 0 : i32
    %c0_i32_1 = arith.constant 0 : i32
    return %c0_i32, %c0_i32_0 : i32, i32
  }
  func.func @transform_11(%arg0: i32) -> (i32, i32) {
    %c0_i32 = arith.constant 0 : i32
    %c0_i32_0 = arith.constant 0 : i32
    %c0_i32_1 = arith.constant 0 : i32
    return %c0_i32, %c0_i32_0 : i32, i32
  }
  func.func @transform_12(%arg0: i32) -> (i32, i32, i32) {
    %c0_i32 = arith.constant 0 : i32
    %c0_i32_0 = arith.constant 0 : i32
    %c0_i32_1 = arith.constant 0 : i32
    return %arg0, %c0_i32, %c0_i32_0 : i32, i32, i32
  }
}

</mosaic_0001>

<llo_original>
// kernel: tpu_custom_call.1
$region0: #{tpu_custom_call.1}
  #allocation0 [shape = 'u32[]', space=smem, size = 0x4, offset = 0x4, fixed_abs, tag = 'smem constant byte address 0x4 - core index']
  #allocation1 [shape = 'u32[144,128]{1,0:T(1,128)}', space=vmem, size = 0x12000, scoped, tag = 'internal scratch']
  #allocation2 [shape = 'f32[16,128]{1,0:T(8,128)}', space=vmem, size = 0x2000, scoped, tag = 'scratch operand']
  %s0 = inlined_call_operand.hbm [shape: f32[2,16,128], index: 0, kind: input, shape index: {}]
  %s1 = inlined_call_operand.hbm [shape: f32[2,16,128], index: 1, kind: input, shape index: {}]
  %s2 = inlined_call_operand.hbm [shape: f32[2,16,128], index: 2, kind: input, shape index: {}]
  %s3 = inlined_call_operand.vmem [shape: f32[2,1,16], index: 3, kind: input, shape index: {}]
  %s4 = inlined_call_operand.hbm [shape: f32[128,128], index: 4, kind: input, shape index: {}]
  %s5 = inlined_call_operand.vmem [shape: f32[1,128], index: 5, kind: input, shape index: {}]
  %s6 = inlined_call_operand.hbm [shape: f32[128,128], index: 6, kind: input, shape index: {}]
  %s7 = inlined_call_operand.vmem [shape: f32[1,128], index: 7, kind: input, shape index: {}]
  %s8 = inlined_call_operand.hbm [shape: f32[128,128], index: 8, kind: input, shape index: {}]
  %s9 = inlined_call_operand.vmem [shape: f32[1,128], index: 9, kind: input, shape index: {}]
  %s10 = inlined_call_operand.hbm [shape: f32[128,128], index: 10, kind: input, shape index: {}]
  %s11 = inlined_call_operand.vmem [shape: f32[1,128], index: 11, kind: input, shape index: {}]
  %s12 = inlined_call_operand.hbm [shape: f32[2,16,128], index: 12, kind: output, shape index: {}]
  %s13 = sld [smem:[#allocation0]]
  $region109: #{tpu_custom_call.1} parent=0
    _
  %s15 = ssub.s32 1, %s13
  %s16 = scalar_select 0, %s15, %s13
  $region1: #{tpu_custom_call.1} parent=0
    #allocation3 [shape = 'u8[16384]{0}', space=vmem, size = 0x4000, scoped, tag = 'input window, operand 0']
    #allocation4 [shape = 's32[2]{0}', space=sflag, size = 0x8, scoped, tag = 'scoped memory for tpu_custom_call.1']
    #allocation5 [shape = 's32[2]{0}', space=sflag, size = 0x8, scoped, tag = 'scoped memory for tpu_custom_call.1']
    #allocation6 [shape = 'u8[16384]{0}', space=vmem, size = 0x4000, scoped, tag = 'input window, operand 1']
    #allocation7 [shape = 's32[2]{0}', space=sflag, size = 0x8, scoped, tag = 'scoped memory for tpu_custom_call.1']
    #allocation8 [shape = 'u8[16384]{0}', space=vmem, size = 0x4000, scoped, tag = 'input window, operand 2']
    #allocation9 [shape = 'u8[65536]{0}', space=vmem, size = 0x10000, scoped, tag = 'input window, operand 4, single buffered']
    #allocation10 [shape = 's32[1]{0}', space=sflag, size = 0x4, scoped, tag = 'scoped memory for tpu_custom_call.1']
    #allocation11 [shape = 'u8[65536]{0}', space=vmem, size = 0x10000, scoped, tag = 'input window, operand 6, single buffered']
    #allocation12 [shape = 'u8[65536]{0}', space=vmem, size = 0x10000, scoped, tag = 'input window, operand 8, single buffered']
    #allocation13 [shape = 's32[1]{0}', space=sflag, size = 0x4, scoped, tag = 'scoped memory for tpu_custom_call.1']
    #allocation14 [shape = 'u8[65536]{0}', space=vmem, size = 0x10000, scoped, tag = 'input window, operand 10, single buffered']
    #allocation15 [shape = 'u8[16384]{0}', space=vmem, size = 0x4000, scoped, tag = 'output window, operand 0']
    %17 = vsyncpa [#allocation4], 0
    %s18 = scalar_lea.sflag [#allocation4], 1
    %19 = vsyncpa %s18, 0
    %20 = vsyncpa [#allocation7], 0
    %s21 = scalar_lea.sflag [#allocation7], 1
    %22 = vsyncpa %s21, 0
    %23 = vsyncpa [#allocation10], 0
    %24 = vsyncpa [#allocation13], 0
    %25 = vsyncpa [#allocation5], 0
    %s26 = scalar_lea.sflag [#allocation5], 1
    %27 = vsyncpa %s26, 0
    loop: start=0, step=1, limit=4
    $region2: #{tpu_custom_call.1} parent=1 // loop_pre_header
      _
    $region3: #{tpu_custom_call.1} parent=1 // loop_header
      %s29 = sphi 0, %s33
      %p30 = scmp.ge.s32.totalorder %s29, 4
      %s39 = sphi 0, %s41
      %s42 = sphi 0, %s39
      %s43 = sphi 0, %s42
      %s59 = sphi 0, %s43
      %s65 = sphi 0, %s67
      %s68 = sphi 0, %s65
      %s69 = sphi 0, %s68
      %s85 = sphi 0, %s69
      %s91 = sphi 0, %s93
      %s94 = sphi 0, %s91
      %s95 = sphi 0, %s94
      %s111 = sphi 0, %s95
      %s117 = sphi 0, %s119
      %s120 = sphi 0, %s117
      %s121 = sphi 0, %s120
      %s137 = sphi 0, %s121
      %s141 = sphi 0, %s141
      %s143 = sphi 0, %s141
      %s144 = sphi 0, %s143
      %s158 = sphi 0, %s144
      %s162 = sphi 0, %s162
      %s164 = sphi 0, %s162
      %s165 = sphi 0, %s164
      %s179 = sphi 0, %s165
      %s183 = sphi 0, %s183
      %s185 = sphi 0, %s183
      %s186 = sphi 0, %s185
      %s200 = sphi 0, %s186
      %s204 = sphi 0, %s204
      %s206 = sphi 0, %s204
      %s207 = sphi 0, %s206
      %s221 = sphi 0, %s207
      %s225 = sphi 0, %s225
      %s227 = sphi 0, %s225
      %s228 = sphi 0, %s227
      %s242 = sphi 0, %s228
      %s246 = sphi 0, %s246
      %s248 = sphi 0, %s246
      %s249 = sphi 0, %s248
      %s263 = sphi 0, %s249
      %s267 = sphi 0, %s267
      %s269 = sphi 0, %s267
      %s270 = sphi 0, %s269
      %s284 = sphi 0, %s270
      %s288 = sphi 0, %s288
      %s290 = sphi 0, %s288
      %s291 = sphi 0, %s290
      %s305 = sphi 0, %s291
      %s311 = sphi 0, %s313
      %s314 = sphi 0, %s311
      %s315 = sphi 0, %s314
      %s331 = sphi 0, %s315
    $region4: #{tpu_custom_call.1} parent=1 // loop_header_branch
      %32 = sbr.rel (%p30) target = $region8
    $region5: #{tpu_custom_call.1} parent=1 // loop_body
      %s34 = ssub.s32 %s29, 1
      %s35 = ssub.s32 %s29, 2
      %s36 = sadd.s32 %s29, 1
      %s37 = ssub.s32 %s29, %s36
      %p38 = scmp.eq.s32.totalorder %s37, 0
      %s40 = sadd.s32 %s39, 1
      %s41 = scalar_select %p38, %s39, %s40
      %p44 = pneg %p38
      %p45 = scmp.eq.s32.totalorder %s29, 1
      %p46 = por %p44, %p45
      %p47 = scmp.ne.s32.totalorder %s39, %s42
      %p48 = scmp.eq.s32.totalorder %s29, 0
      %p49 = por %p47, %p48
      %p50 = scmp.ne.s32.totalorder %s39, %s42
      %p51 = scmp.eq.s32.totalorder %s34, 1
      %p52 = por %p50, %p51
      %p53 = scmp.ne.s32.totalorder %s42, %s43
      %p54 = scmp.eq.s32.totalorder %s34, 0
      %p55 = por %p53, %p54
      %p56 = scmp.ne.s32.totalorder %s42, %s43
      %p57 = scmp.eq.s32.totalorder %s35, 1
      %p58 = por %p56, %p57
      %p60 = scmp.ne.s32.totalorder %s43, %s59
      %p61 = scmp.eq.s32.totalorder %s35, 0
      %p62 = por %p60, %p61
      %s63 = ssub.s32 %s29, %s36
      %p64 = scmp.eq.s32.totalorder %s63, 0
      %s66 = sadd.s32 %s65, 1
      %s67 = scalar_select %p64, %s65, %s66
      %p70 = pneg %p64
      %p71 = scmp.eq.s32.totalorder %s29, 1
      %p72 = por %p70, %p71
      %p73 = scmp.ne.s32.totalorder %s65, %s68
      %p74 = scmp.eq.s32.totalorder %s29, 0
      %p75 = por %p73, %p74
      %p76 = scmp.ne.s32.totalorder %s65, %s68
      %p77 = scmp.eq.s32.totalorder %s34, 1
      %p78 = por %p76, %p77
      %p79 = scmp.ne.s32.totalorder %s68, %s69
      %p80 = scmp.eq.s32.totalorder %s34, 0
      %p81 = por %p79, %p80
      %p82 = scmp.ne.s32.totalorder %s68, %s69
      %p83 = scmp.eq.s32.totalorder %s35, 1
      %p84 = por %p82, %p83
      %p86 = scmp.ne.s32.totalorder %s69, %s85
      %p87 = scmp.eq.s32.totalorder %s35, 0
      %p88 = por %p86, %p87
      %s89 = ssub.s32 %s29, %s36
      %p90 = scmp.eq.s32.totalorder %s89, 0
      %s92 = sadd.s32 %s91, 1
      %s93 = scalar_select %p90, %s91, %s92
      %p96 = pneg %p90
      %p97 = scmp.eq.s32.totalorder %s29, 1
      %p98 = por %p96, %p97
      %p99 = scmp.ne.s32.totalorder %s91, %s94
      %p100 = scmp.eq.s32.totalorder %s29, 0
      %p101 = por %p99, %p100
      %p102 = scmp.ne.s32.totalorder %s91, %s94
      %p103 = scmp.eq.s32.totalorder %s34, 1
      %p104 = por %p102, %p103
      %p105 = scmp.ne.s32.totalorder %s94, %s95
      %p106 = scmp.eq.s32.totalorder %s34, 0
      %p107 = por %p105, %p106
      %p108 = scmp.ne.s32.totalorder %s94, %s95
      %p109 = scmp.eq.s32.totalorder %s35, 1
      %p110 = por %p108, %p109
      %p112 = scmp.ne.s32.totalorder %s95, %s111
      %p113 = scmp.eq.s32.totalorder %s35, 0
      %p114 = por %p112, %p113
      %s115 = ssub.s32 %s29, %s36
      %p116 = scmp.eq.s32.totalorder %s115, 0
      %s118 = sadd.s32 %s117, 1
      %s119 = scalar_select %p116, %s117, %s118
      %p122 = pneg %p116
      %p123 = scmp.eq.s32.totalorder %s29, 1
      %p124 = por %p122, %p123
      %p125 = scmp.ne.s32.totalorder %s117, %s120
      %p126 = scmp.eq.s32.totalorder %s29, 0
      %p127 = por %p125, %p126
      %p128 = scmp.ne.s32.totalorder %s117, %s120
      %p129 = scmp.eq.s32.totalorder %s34, 1
      %p130 = por %p128, %p129
      %p131 = scmp.ne.s32.totalorder %s120, %s121
      %p132 = scmp.eq.s32.totalorder %s34, 0
      %p133 = por %p131, %p132
      %p134 = scmp.ne.s32.totalorder %s120, %s121
      %p135 = scmp.eq.s32.totalorder %s35, 1
      %p136 = por %p134, %p135
      %p138 = scmp.ne.s32.totalorder %s121, %s137
      %p139 = scmp.eq.s32.totalorder %s35, 0
      %p140 = por %p138, %p139
      %s142 = sadd.s32 %s141, 1
      %p145 = scmp.eq.s32.totalorder %s29, 1
      %p146 = scmp.ne.s32.totalorder %s141, %s143
      %p147 = scmp.eq.s32.totalorder %s29, 0
      %p148 = por %p146, %p147
      %p149 = scmp.ne.s32.totalorder %s141, %s143
      %p150 = scmp.eq.s32.totalorder %s34, 1
      %p151 = por %p149, %p150
      %p152 = scmp.ne.s32.totalorder %s143, %s144
      %p153 = scmp.eq.s32.totalorder %s34, 0
      %p154 = por %p152, %p153
      %p155 = scmp.ne.s32.totalorder %s143, %s144
      %p156 = scmp.eq.s32.totalorder %s35, 1
      %p157 = por %p155, %p156
      %p159 = scmp.ne.s32.totalorder %s144, %s158
      %p160 = scmp.eq.s32.totalorder %s35, 0
      %p161 = por %p159, %p160
      %s163 = sadd.s32 %s162, 1
      %p166 = scmp.eq.s32.totalorder %s29, 1
      %p167 = scmp.ne.s32.totalorder %s162, %s164
      %p168 = scmp.eq.s32.totalorder %s29, 0
      %p169 = por %p167, %p168
      %p170 = scmp.ne.s32.totalorder %s162, %s164
      %p171 = scmp.eq.s32.totalorder %s34, 1
      %p172 = por %p170, %p171
      %p173 = scmp.ne.s32.totalorder %s164, %s165
      %p174 = scmp.eq.s32.totalorder %s34, 0
      %p175 = por %p173, %p174
      %p176 = scmp.ne.s32.totalorder %s164, %s165
      %p177 = scmp.eq.s32.totalorder %s35, 1
      %p178 = por %p176, %p177
      %p180 = scmp.ne.s32.totalorder %s165, %s179
      %p181 = scmp.eq.s32.totalorder %s35, 0
      %p182 = por %p180, %p181
      %s184 = sadd.s32 %s183, 1
      %p187 = scmp.eq.s32.totalorder %s29, 1
      %p188 = scmp.ne.s32.totalorder %s183, %s185
      %p189 = scmp.eq.s32.totalorder %s29, 0
      %p190 = por %p188, %p189
      %p191 = scmp.ne.s32.totalorder %s183, %s185
      %p192 = scmp.eq.s32.totalorder %s34, 1
      %p193 = por %p191, %p192
      %p194 = scmp.ne.s32.totalorder %s185, %s186
      %p195 = scmp.eq.s32.totalorder %s34, 0
      %p196 = por %p194, %p195
      %p197 = scmp.ne.s32.totalorder %s185, %s186
      %p198 = scmp.eq.s32.totalorder %s35, 1
      %p199 = por %p197, %p198
      %p201 = scmp.ne.s32.totalorder %s186, %s200
      %p202 = scmp.eq.s32.totalorder %s35, 0
      %p203 = por %p201, %p202
      %s205 = sadd.s32 %s204, 1
      %p208 = scmp.eq.s32.totalorder %s29, 1
      %p209 = scmp.ne.s32.totalorder %s204, %s206
      %p210 = scmp.eq.s32.totalorder %s29, 0
      %p211 = por %p209, %p210
      %p212 = scmp.ne.s32.totalorder %s204, %s206
      %p213 = scmp.eq.s32.totalorder %s34, 1
      %p214 = por %p212, %p213
      %p215 = scmp.ne.s32.totalorder %s206, %s207
      %p216 = scmp.eq.s32.totalorder %s34, 0
      %p217 = por %p215, %p216
      %p218 = scmp.ne.s32.totalorder %s206, %s207
      %p219 = scmp.eq.s32.totalorder %s35, 1
      %p220 = por %p218, %p219
      %p222 = scmp.ne.s32.totalorder %s207, %s221
      %p223 = scmp.eq.s32.totalorder %s35, 0
      %p224 = por %p222, %p223
      %s226 = sadd.s32 %s225, 1
      %p229 = scmp.eq.s32.totalorder %s29, 1
      %p230 = scmp.ne.s32.totalorder %s225, %s227
      %p231 = scmp.eq.s32.totalorder %s29, 0
      %p232 = por %p230, %p231
      %p233 = scmp.ne.s32.totalorder %s225, %s227
      %p234 = scmp.eq.s32.totalorder %s34, 1
      %p235 = por %p233, %p234
      %p236 = scmp.ne.s32.totalorder %s227, %s228
      %p237 = scmp.eq.s32.totalorder %s34, 0
      %p238 = por %p236, %p237
      %p239 = scmp.ne.s32.totalorder %s227, %s228
      %p240 = scmp.eq.s32.totalorder %s35, 1
      %p241 = por %p239, %p240
      %p243 = scmp.ne.s32.totalorder %s228, %s242
      %p244 = scmp.eq.s32.totalorder %s35, 0
      %p245 = por %p243, %p244
      %s247 = sadd.s32 %s246, 1
      %p250 = scmp.eq.s32.totalorder %s29, 1
      %p251 = scmp.ne.s32.totalorder %s246, %s248
      %p252 = scmp.eq.s32.totalorder %s29, 0
      %p253 = por %p251, %p252
      %p254 = scmp.ne.s32.totalorder %s246, %s248
      %p255 = scmp.eq.s32.totalorder %s34, 1
      %p256 = por %p254, %p255
      %p257 = scmp.ne.s32.totalorder %s248, %s249
      %p258 = scmp.eq.s32.totalorder %s34, 0
      %p259 = por %p257, %p258
      %p260 = scmp.ne.s32.totalorder %s248, %s249
      %p261 = scmp.eq.s32.totalorder %s35, 1
      %p262 = por %p260, %p261
      %p264 = scmp.ne.s32.totalorder %s249, %s263
      %p265 = scmp.eq.s32.totalorder %s35, 0
      %p266 = por %p264, %p265
      %s268 = sadd.s32 %s267, 1
      %p271 = scmp.eq.s32.totalorder %s29, 1
      %p272 = scmp.ne.s32.totalorder %s267, %s269
      %p273 = scmp.eq.s32.totalorder %s29, 0
      %p274 = por %p272, %p273
      %p275 = scmp.ne.s32.totalorder %s267, %s269
      %p276 = scmp.eq.s32.totalorder %s34, 1
      %p277 = por %p275, %p276
      %p278 = scmp.ne.s32.totalorder %s269, %s270
      %p279 = scmp.eq.s32.totalorder %s34, 0
      %p280 = por %p278, %p279
      %p281 = scmp.ne.s32.totalorder %s269, %s270
      %p282 = scmp.eq.s32.totalorder %s35, 1
      %p283 = por %p281, %p282
      %p285 = scmp.ne.s32.totalorder %s270, %s284
      %p286 = scmp.eq.s32.totalorder %s35, 0
      %p287 = por %p285, %p286
      %s289 = sadd.s32 %s288, 1
      %p292 = scmp.eq.s32.totalorder %s29, 1
      %p293 = scmp.ne.s32.totalorder %s288, %s290
      %p294 = scmp.eq.s32.totalorder %s29, 0
      %p295 = por %p293, %p294
      %p296 = scmp.ne.s32.totalorder %s288, %s290
      %p297 = scmp.eq.s32.totalorder %s34, 1
      %p298 = por %p296, %p297
      %p299 = scmp.ne.s32.totalorder %s290, %s291
      %p300 = scmp.eq.s32.totalorder %s34, 0
      %p301 = por %p299, %p300
      %p302 = scmp.ne.s32.totalorder %s290, %s291
      %p303 = scmp.eq.s32.totalorder %s35, 1
      %p304 = por %p302, %p303
      %p306 = scmp.ne.s32.totalorder %s291, %s305
      %p307 = scmp.eq.s32.totalorder %s35, 0
      %p308 = por %p306, %p307
      %s309 = ssub.s32 %s29, %s36
      %p310 = scmp.eq.s32.totalorder %s309, 0
      %s312 = sadd.s32 %s311, 1
      %s313 = scalar_select %p310, %s311, %s312
      %p316 = pneg %p310
      %p317 = scmp.eq.s32.totalorder %s29, 1
      %p318 = por %p316, %p317
      %p319 = scmp.ne.s32.totalorder %s311, %s314
      %p320 = scmp.eq.s32.totalorder %s29, 0
      %p321 = por %p319, %p320
      %p322 = scmp.ne.s32.totalorder %s311, %s314
      %p323 = scmp.eq.s32.totalorder %s34, 1
      %p324 = por %p322, %p323
      %p325 = scmp.ne.s32.totalorder %s314, %s315
      %p326 = scmp.eq.s32.totalorder %s34, 0
      %p327 = por %p325, %p326
      %p328 = scmp.ne.s32.totalorder %s314, %s315
      %p329 = scmp.eq.s32.totalorder %s35, 1
      %p330 = por %p328, %p329
      %p332 = scmp.ne.s32.totalorder %s315, %s331
      %p333 = scmp.eq.s32.totalorder %s35, 0
      %p334 = por %p332, %p333
      %p335 = scmp.le.s32.totalorder 1, %s29
      %p336 = scmp.lt.s32.totalorder %s29, 3
      %p337 = pnand %p335, %p336
      %p338 = pneg %p337
      // Predicated region
      $region9: #{tpu_custom_call.1} parent=5 // pred_check
        _
      $region10: #{tpu_custom_call.1} parent=5 // pred_check_branch
        %340 = sbr.rel (%p337) target = $region12
      $region11: #{tpu_custom_call.1} parent=5 // pred_region
        %s341 = ssub.s32 %s29, 1
        // Predicated region
        $region13: #{tpu_custom_call.1} parent=11 // pred_check
          %p342 = pneg %p154
        $region14: #{tpu_custom_call.1} parent=11 // pred_check_branch
          %344 = sbr.rel (%p342) target = $region16
        $region15: #{tpu_custom_call.1} parent=11 // pred_region
          %s346 = ssub.s32 2048, 2048
          %347 = vsyncadd [#allocation10], %s346
          %s348 = sshll.u32 [#allocation9], 4
          %s349 = int_to_ptr.vmem [resolvable:$true] %s348
          %354 = dma.hbm_to_vmem [thread:$0]  %s4, 2048, %s349, [#allocation10], 128, 128, 8
        $region16: #{tpu_custom_call.1} parent=11 // pred_fallthru
          _
        // Predicated region
        $region17: #{tpu_custom_call.1} parent=11 // pred_check
          %p355 = pneg %p175
        $region18: #{tpu_custom_call.1} parent=11 // pred_check_branch
          %357 = sbr.rel (%p355) target = $region20
        $region19: #{tpu_custom_call.1} parent=11 // pred_region
          _
        $region20: #{tpu_custom_call.1} parent=11 // pred_fallthru
          _
        // Predicated region
        $region21: #{tpu_custom_call.1} parent=11 // pred_check
          %p358 = pneg %p196
        $region22: #{tpu_custom_call.1} parent=11 // pred_check_branch
          %360 = sbr.rel (%p358) target = $region24
        $region23: #{tpu_custom_call.1} parent=11 // pred_region
          %s362 = ssub.s32 2048, 2048
          %363 = vsyncadd [#allocation10], %s362
          %s364 = sshll.u32 [#allocation11], 4
          %s365 = int_to_ptr.vmem [resolvable:$true] %s364
          %370 = dma.hbm_to_vmem [thread:$0]  %s6, 2048, %s365, [#allocation10], 128, 128, 8
        $region24: #{tpu_custom_call.1} parent=11 // pred_fallthru
          _
        // Predicated region
        $region25: #{tpu_custom_call.1} parent=11 // pred_check
          %p371 = pneg %p217
        $region26: #{tpu_custom_call.1} parent=11 // pred_check_branch
          %373 = sbr.rel (%p371) target = $region28
        $region27: #{tpu_custom_call.1} parent=11 // pred_region
          _
        $region28: #{tpu_custom_call.1} parent=11 // pred_fallthru
          _
        // Predicated region
        $region29: #{tpu_custom_call.1} parent=11 // pred_check
          %p374 = pneg %p238
        $region30: #{tpu_custom_call.1} parent=11 // pred_check_branch
          %376 = sbr.rel (%p374) target = $region32
        $region31: #{tpu_custom_call.1} parent=11 // pred_region
          %s378 = ssub.s32 2048, 2048
          %379 = vsyncadd [#allocation13], %s378
          %s380 = sshll.u32 [#allocation12], 4
          %s381 = int_to_ptr.vmem [resolvable:$true] %s380
          %386 = dma.hbm_to_vmem [thread:$0]  %s8, 2048, %s381, [#allocation13], 128, 128, 8
        $region32: #{tpu_custom_call.1} parent=11 // pred_fallthru
          _
        // Predicated region
        $region33: #{tpu_custom_call.1} parent=11 // pred_check
          %p387 = pneg %p259
        $region34: #{tpu_custom_call.1} parent=11 // pred_check_branch
          %389 = sbr.rel (%p387) target = $region36
        $region35: #{tpu_custom_call.1} parent=11 // pred_region
          _
        $region36: #{tpu_custom_call.1} parent=11 // pred_fallthru
          _
        // Predicated region
        $region37: #{tpu_custom_call.1} parent=11 // pred_check
          %p390 = pneg %p280
        $region38: #{tpu_custom_call.1} parent=11 // pred_check_branch
          %392 = sbr.rel (%p390) target = $region40
        $region39: #{tpu_custom_call.1} parent=11 // pred_region
          %s394 = ssub.s32 2048, 2048
          %395 = vsyncadd [#allocation13], %s394
          %s396 = sshll.u32 [#allocation14], 4
          %s397 = int_to_ptr.vmem [resolvable:$true] %s396
          %402 = dma.hbm_to_vmem [thread:$0]  %s10, 2048, %s397, [#allocation13], 128, 128, 8
        $region40: #{tpu_custom_call.1} parent=11 // pred_fallthru
          _
        // Predicated region
        $region41: #{tpu_custom_call.1} parent=11 // pred_check
          %p403 = pneg %p301
        $region42: #{tpu_custom_call.1} parent=11 // pred_check_branch
          %405 = sbr.rel (%p403) target = $region44
        $region43: #{tpu_custom_call.1} parent=11 // pred_region
          _
        $region44: #{tpu_custom_call.1} parent=11 // pred_fallthru
          _
      $region12: #{tpu_custom_call.1} parent=5 // pred_fallthru
        _
      %p406 = scmp.lt.s32.totalorder %s29, 2
      // Predicated region
      $region45: #{tpu_custom_call.1} parent=5 // pred_check
        %p407 = pneg %p406
      $region46: #{tpu_custom_call.1} parent=5 // pred_check_branch
        %409 = sbr.rel (%p407) target = $region48
      $region47: #{tpu_custom_call.1} parent=5 // pred_region
        // Predicated region
        $region49: #{tpu_custom_call.1} parent=47 // pred_check
          %p410 = pneg %p49
        $region50: #{tpu_custom_call.1} parent=47 // pred_check_branch
          %412 = sbr.rel (%p410) target = $region52
        $region51: #{tpu_custom_call.1} parent=47 // pred_region
          %s413 = sand.u32 %s39, 1
          %s414 = scalar_lea.sflag [#allocation4], %s413
          %s415 = sand.u32 %s39, 1
          %s416 = smul.addr %s415, 16
          %s417 = scalar_lea.vmem [#allocation3], %s416
          %s419 = ssub.s32 256, 256
          %420 = vsyncadd %s414, %s419
          %s421 = smul.addr %s29, 2
          %s422 = smul.addr %s421, 128
          %s423 = scalar_lea.hbm %s0, %s422
          %s424 = sshll.u32 %s417, 4
          %s425 = int_to_ptr.vmem [resolvable:$true] %s424
          %430 = dma.hbm_to_vmem [thread:$0]  %s423, 256, %s425, %s414, 128, 128, 8
        $region52: #{tpu_custom_call.1} parent=47 // pred_fallthru
          _
        // Predicated region
        $region53: #{tpu_custom_call.1} parent=47 // pred_check
          %p431 = pneg %p75
        $region54: #{tpu_custom_call.1} parent=47 // pred_check_branch
          %433 = sbr.rel (%p431) target = $region56
        $region55: #{tpu_custom_call.1} parent=47 // pred_region
          %s434 = sand.u32 %s29, 1
          %s435 = scalar_lea.sflag [#allocation7], %s434
          %s436 = sand.u32 %s65, 1
          %s437 = smul.addr %s436, 16
          %s438 = scalar_lea.vmem [#allocation6], %s437
          %s440 = ssub.s32 256, 256
          %441 = vsyncadd %s435, %s440
          %s442 = smul.addr %s29, 2
          %s443 = smul.addr %s442, 128
          %s444 = scalar_lea.hbm %s1, %s443
          %s445 = sshll.u32 %s438, 4
          %s446 = int_to_ptr.vmem [resolvable:$true] %s445
          %451 = dma.hbm_to_vmem [thread:$0]  %s444, 256, %s446, %s435, 128, 128, 8
        $region56: #{tpu_custom_call.1} parent=47 // pred_fallthru
          _
        // Predicated region
        $region57: #{tpu_custom_call.1} parent=47 // pred_check
          %p452 = pneg %p101
        $region58: #{tpu_custom_call.1} parent=47 // pred_check_branch
          %454 = sbr.rel (%p452) target = $region60
        $region59: #{tpu_custom_call.1} parent=47 // pred_region
          %s455 = sand.u32 %s29, 1
          %s456 = scalar_lea.sflag [#allocation7], %s455
          %s457 = sand.u32 %s91, 1
          %s458 = smul.addr %s457, 16
          %s459 = scalar_lea.vmem [#allocation8], %s458
          %s461 = ssub.s32 256, 256
          %462 = vsyncadd %s456, %s461
          %s463 = smul.addr %s29, 2
          %s464 = smul.addr %s463, 128
          %s465 = scalar_lea.hbm %s2, %s464
          %s466 = sshll.u32 %s459, 4
          %s467 = int_to_ptr.vmem [resolvable:$true] %s466
          %472 = dma.hbm_to_vmem [thread:$0]  %s465, 256, %s467, %s456, 128, 128, 8
        $region60: #{tpu_custom_call.1} parent=47 // pred_fallthru
          _
        // Predicated region
        $region61: #{tpu_custom_call.1} parent=47 // pred_check
          %p473 = pneg %p127
        $region62: #{tpu_custom_call.1} parent=47 // pred_check_branch
          %475 = sbr.rel (%p473) target = $region64
        $region63: #{tpu_custom_call.1} parent=47 // pred_region
          %p476 = scmp.lt.s32.totalorder %s29, 1
          %s477 = scalar_select %p476, %s29, 1
          %s478 = scalar_lea.vmem %s3, %s477
        $region64: #{tpu_custom_call.1} parent=47 // pred_fallthru
          _
      $region48: #{tpu_custom_call.1} parent=5 // pred_fallthru
        _
      %p479 = scmp.le.s32.totalorder 1, %s29
      %p480 = scmp.lt.s32.totalorder %s29, 3
      %p481 = pnand %p479, %p480
      %p482 = pneg %p481
      // Predicated region
      $region65: #{tpu_custom_call.1} parent=5 // pred_check
        _
      $region66: #{tpu_custom_call.1} parent=5 // pred_check_branch
        %484 = sbr.rel (%p481) target = $region68
      $region67: #{tpu_custom_call.1} parent=5 // pred_region
        %s485 = ssub.s32 %s29, 1
        %s486 = sand.u32 %s42, 1
        %s487 = scalar_lea.sflag [#allocation4], %s486
        %s488 = sand.u32 %s42, 1
        %s489 = smul.addr %s488, 16
        %s490 = scalar_lea.vmem [#allocation3], %s489
        // Predicated region
        $region69: #{tpu_custom_call.1} parent=67 // pred_check
          %p491 = pneg %p55
        $region70: #{tpu_custom_call.1} parent=67 // pred_check_branch
          %493 = sbr.rel (%p491) target = $region72
        $region71: #{tpu_custom_call.1} parent=67 // pred_region
          %494 = dma.done %s487, 256
        $region72: #{tpu_custom_call.1} parent=67 // pred_fallthru
          _
        %s495 = sand.u32 %s34, 1
        %s496 = scalar_lea.sflag [#allocation7], %s495
        %s497 = sand.u32 %s68, 1
        %s498 = smul.addr %s497, 16
        %s499 = scalar_lea.vmem [#allocation6], %s498
        // Predicated region
        $region73: #{tpu_custom_call.1} parent=67 // pred_check
          %p500 = pneg %p81
        $region74: #{tpu_custom_call.1} parent=67 // pred_check_branch
          %502 = sbr.rel (%p500) target = $region76
        $region75: #{tpu_custom_call.1} parent=67 // pred_region
          %503 = dma.done %s496, 256
        $region76: #{tpu_custom_call.1} parent=67 // pred_fallthru
          _
        %s504 = sand.u32 %s34, 1
        %s505 = scalar_lea.sflag [#allocation7], %s504
        %s506 = sand.u32 %s94, 1
        %s507 = smul.addr %s506, 16
        %s508 = scalar_lea.vmem [#allocation8], %s507
        // Predicated region
        $region77: #{tpu_custom_call.1} parent=67 // pred_check
          %p509 = pneg %p107
        $region78: #{tpu_custom_call.1} parent=67 // pred_check_branch
          %511 = sbr.rel (%p509) target = $region80
        $region79: #{tpu_custom_call.1} parent=67 // pred_region
          %512 = dma.done %s505, 256
        $region80: #{tpu_custom_call.1} parent=67 // pred_fallthru
          _
        // Predicated region
        $region81: #{tpu_custom_call.1} parent=67 // pred_check
          %p513 = pneg %p154
        $region82: #{tpu_custom_call.1} parent=67 // pred_check_branch
          %515 = sbr.rel (%p513) target = $region84
        $region83: #{tpu_custom_call.1} parent=67 // pred_region
          %516 = dma.done [#allocation10], 2048
        $region84: #{tpu_custom_call.1} parent=67 // pred_fallthru
          _
        // Predicated region
        $region85: #{tpu_custom_call.1} parent=67 // pred_check
          %p517 = pneg %p196
        $region86: #{tpu_custom_call.1} parent=67 // pred_check_branch
          %519 = sbr.rel (%p517) target = $region88
        $region87: #{tpu_custom_call.1} parent=67 // pred_region
          %520 = dma.done [#allocation10], 2048
        $region88: #{tpu_custom_call.1} parent=67 // pred_fallthru
          _
        // Predicated region
        $region89: #{tpu_custom_call.1} parent=67 // pred_check
          %p521 = pneg %p238
        $region90: #{tpu_custom_call.1} parent=67 // pred_check_branch
          %523 = sbr.rel (%p521) target = $region92
        $region91: #{tpu_custom_call.1} parent=67 // pred_region
          %524 = dma.done [#allocation13], 2048
        $region92: #{tpu_custom_call.1} parent=67 // pred_fallthru
          _
        // Predicated region
        $region93: #{tpu_custom_call.1} parent=67 // pred_check
          %p525 = pneg %p280
        $region94: #{tpu_custom_call.1} parent=67 // pred_check_branch
          %527 = sbr.rel (%p525) target = $region96
        $region95: #{tpu_custom_call.1} parent=67 // pred_region
          %528 = dma.done [#allocation13], 2048
        $region96: #{tpu_custom_call.1} parent=67 // pred_fallthru
          _
        %s529 = sand.u32 %s42, 1
        %s530 = scalar_lea.sflag [#allocation4], %s529
        %s531 = sand.u32 %s42, 1
        %s532 = smul.addr %s531, 16
        %s533 = scalar_lea.vmem [#allocation3], %s532
        %p534 = pneg %p55
        %p535 = pneg %p52
        %s536 = sand.u32 %s34, 1
        %s537 = scalar_lea.sflag [#allocation7], %s536
        %s538 = sand.u32 %s68, 1
        %s539 = smul.addr %s538, 16
        %s540 = scalar_lea.vmem [#allocation6], %s539
        %p541 = pneg %p81
        %p542 = pneg %p78
        %s543 = sand.u32 %s34, 1
        %s544 = scalar_lea.sflag [#allocation7], %s543
        %s545 = sand.u32 %s94, 1
        %s546 = smul.addr %s545, 16
        %s547 = scalar_lea.vmem [#allocation8], %s546
        %p548 = pneg %p107
        %p549 = pneg %p104
        %p550 = scmp.lt.s32.totalorder %s34, 1
        %s551 = scalar_select %p550, %s34, 1
        %s552 = scalar_lea.vmem %s3, %s551
        %p553 = pneg %p133
        %p554 = pneg %p130
        %p555 = pneg %p154
        %p556 = pneg %p151
        %p557 = pneg %p175
        %p558 = pneg %p172
        %p559 = pneg %p196
        %p560 = pneg %p193
        %p561 = pneg %p217
        %p562 = pneg %p214
        %p563 = pneg %p238
        %p564 = pneg %p235
        %p565 = pneg %p259
        %p566 = pneg %p256
        %p567 = pneg %p280
        %p568 = pneg %p277
        %p569 = pneg %p301
        %p570 = pneg %p298
        %p571 = pneg %p327
        %p572 = pneg %p324
        %s573 = sand.u32 %s314, 1
        %s574 = scalar_lea.sflag [#allocation5], %s573
        %s575 = sand.u32 %s314, 1
        %s576 = smul.addr %s575, 16
        %s577 = scalar_lea.vmem [#allocation15], %s576
        %p578 = scmp.lt.s32.totalorder %s34, 1
        %s579 = scalar_select %p578, %s34, 1
        %s580 = scalar_lea.vmem %s3, %s579
        %v581 = vld [vmem:[%s490] sm:$0xff]
        %v582 = vld [vmem:[%s490 + $0x8] sm:$0xff]
        %v583 = vld [vmem:[%s499] sm:$0xff]
        %v584 = vld [vmem:[%s499 + $0x8] sm:$0xff]
        %v585 = vld [vmem:[%s508] sm:$0xff]
        %v586 = vld [vmem:[%s508 + $0x8] sm:$0xff]
        %v587 = vld [vmem:[#allocation9] sm:$0xff]
        %v588 = vld [vmem:[#allocation9 + $0x8] sm:$0xff]
        %v589 = vld [vmem:[#allocation9 + $0x10] sm:$0xff]
        %v590 = vld [vmem:[#allocation9 + $0x18] sm:$0xff]
        %v591 = vld [vmem:[#allocation9 + $0x20] sm:$0xff]
        %v592 = vld [vmem:[#allocation9 + $0x28] sm:$0xff]
        %v593 = vld [vmem:[#allocation9 + $0x30] sm:$0xff]
        %v594 = vld [vmem:[#allocation9 + $0x38] sm:$0xff]
        %v595 = vld [vmem:[#allocation9 + $0x40] sm:$0xff]
        %v596 = vld [vmem:[#allocation9 + $0x48] sm:$0xff]
        %v597 = vld [vmem:[#allocation9 + $0x50] sm:$0xff]
        %v598 = vld [vmem:[#allocation9 + $0x58] sm:$0xff]
        %v599 = vld [vmem:[#allocation9 + $0x60] sm:$0xff]
        %v600 = vld [vmem:[#allocation9 + $0x68] sm:$0xff]
        %v601 = vld [vmem:[#allocation9 + $0x70] sm:$0xff]
        %v602 = vld [vmem:[#allocation9 + $0x78] sm:$0xff]
        %v603 = vld [vmem:[%s5] sm:$0x1]
        %v605 = vlaneseq
        %v606 = vshrl.u32 %v605, 7
        %v607 = vsub.s32 0, %v606
        %v608 = vrot.slane %v603, %v607
        %610 = vmatprep.subr.mxu0 0.0
        %611 = vmatpush1.msra.mxu0 %v587
        %612 = vmatprep.subr.mxu0 0.0
        %613 = vmatpush1.msra.mxu0 %v588
        %614 = vmatprep.subr.mxu0 0.0
        %615 = vmatpush1.msra.mxu0 %v589
        %616 = vmatprep.subr.mxu0 0.0
        %617 = vmatpush1.msra.mxu0 %v590
        %618 = vmatprep.subr.mxu0 0.0
        %619 = vmatpush1.msra.mxu0 %v591
        %620 = vmatprep.subr.mxu0 0.0
        %621 = vmatpush1.msra.mxu0 %v592
        %622 = vmatprep.subr.mxu0 0.0
        %623 = vmatpush1.msra.mxu0 %v593
        %624 = vmatprep.subr.mxu0 0.0
        %625 = vmatpush1.msra.mxu0 %v594
        %626 = vmatprep.subr.mxu0 0.0
        %627 = vmatpush1.msra.mxu0 %v595
        %628 = vmatprep.subr.mxu0 0.0
        %629 = vmatpush1.msra.mxu0 %v596
        %630 = vmatprep.subr.mxu0 0.0
        %631 = vmatpush1.msra.mxu0 %v597
        %632 = vmatprep.subr.mxu0 0.0
        %633 = vmatpush1.msra.mxu0 %v598
        %634 = vmatprep.subr.mxu0 0.0
        %635 = vmatpush1.msra.mxu0 %v599
        %636 = vmatprep.subr.mxu0 0.0
        %637 = vmatpush1.msra.mxu0 %v600
        %638 = vmatprep.subr.mxu0 0.0
        %639 = vmatpush1.msra.mxu0 %v601
        %640 = vmatprep.subr.mxu0 0.0
        %641 = vmatpush1.msra.mxu0 %v602
        %642 = vmatprep.subr.mxu0 0.0
        %643 = vmatpush1.msra.mxu0 0.0
        %644 = vmatprep.subr.mxu0 0.0
        %645 = vmatpush1.msra.mxu0 0.0
        %646 = vmatprep.subr.mxu0 0.0
        %647 = vmatpush1.msra.mxu0 0.0
        %648 = vmatprep.subr.mxu0 0.0
        %649 = vmatpush1.msra.mxu0 0.0
        %650 = vmatprep.subr.mxu0 0.0
        %651 = vmatpush1.msra.mxu0 0.0
        %652 = vmatprep.subr.mxu0 0.0
        %653 = vmatpush1.msra.mxu0 0.0
        %654 = vmatprep.subr.mxu0 0.0
        %655 = vmatpush1.msra.mxu0 0.0
        %656 = vmatprep.subr.mxu0 0.0
        %657 = vmatpush1.msra.mxu0 0.0
        %658 = vmatprep.subr.mxu0 0.0
        %659 = vmatpush1.msra.mxu0 0.0
        %660 = vmatprep.subr.mxu0 0.0
        %661 = vmatpush1.msra.mxu0 0.0
        %662 = vmatprep.subr.mxu0 0.0
        %663 = vmatpush1.msra.mxu0 0.0
        %664 = vmatprep.subr.mxu0 0.0
        %665 = vmatpush1.msra.mxu0 0.0
        %666 = vmatprep.subr.mxu0 0.0
        %667 = vmatpush1.msra.mxu0 0.0
        %668 = vmatprep.subr.mxu0 0.0
        %669 = vmatpush1.msra.mxu0 0.0
        %670 = vmatprep.subr.mxu0 0.0
        %671 = vmatpush1.msra.mxu0 0.0
        %672 = vmatprep.subr.mxu0 0.0
        %673 = vmatpush1.msra.mxu0 0.0
        %674 = vmatprep.mubr.f32.mxu0 0.0
        %675 = vmatmul.mubr.f32.gmra.mrb[0].mxu0 %v581
        %v676 = vpop.f32.mrb[0].mxu0
        %v677 = vadd.f32 %v608, %v676
        %v678 = vpop.f32.mrb[0].mxu0
        %679 = vmatprep.mubr.f32.mxu0 0.0
        %680 = vmatmul.mubr.f32.gmra.mrb[0].mxu0 %v582
        %v681 = vpop.f32.mrb[0].mxu0
        %v682 = vadd.f32 %v608, %v681
        %v683 = vpop.f32.mrb[0].mxu0
        %684 = vdwg.mxu0
        %v685 = vld [vmem:[#allocation11] sm:$0xff]
        %v686 = vld [vmem:[#allocation11 + $0x8] sm:$0xff]
        %v687 = vld [vmem:[#allocation11 + $0x10] sm:$0xff]
        %v688 = vld [vmem:[#allocation11 + $0x18] sm:$0xff]
        %v689 = vld [vmem:[#allocation11 + $0x20] sm:$0xff]
        %v690 = vld [vmem:[#allocation11 + $0x28] sm:$0xff]
        %v691 = vld [vmem:[#allocation11 + $0x30] sm:$0xff]
        %v692 = vld [vmem:[#allocation11 + $0x38] sm:$0xff]
        %v693 = vld [vmem:[#allocation11 + $0x40] sm:$0xff]
        %v694 = vld [vmem:[#allocation11 + $0x48] sm:$0xff]
        %v695 = vld [vmem:[#allocation11 + $0x50] sm:$0xff]
        %v696 = vld [vmem:[#allocation11 + $0x58] sm:$0xff]
        %v697 = vld [vmem:[#allocation11 + $0x60] sm:$0xff]
        %v698 = vld [vmem:[#allocation11 + $0x68] sm:$0xff]
        %v699 = vld [vmem:[#allocation11 + $0x70] sm:$0xff]
        %v700 = vld [vmem:[#allocation11 + $0x78] sm:$0xff]
        %v701 = vld [vmem:[%s7] sm:$0x1]
        %v703 = vlaneseq
        %v704 = vshrl.u32 %v703, 7
        %v705 = vsub.s32 0, %v704
        %v706 = vrot.slane %v701, %v705
        %708 = vmatprep.subr.mxu0 0.0
        %709 = vmatpush1.msra.mxu0 %v685
        %710 = vmatprep.subr.mxu0 0.0
        %711 = vmatpush1.msra.mxu0 %v686
        %712 = vmatprep.subr.mxu0 0.0
        %713 = vmatpush1.msra.mxu0 %v687
        %714 = vmatprep.subr.mxu0 0.0
        %715 = vmatpush1.msra.mxu0 %v688
        %716 = vmatprep.subr.mxu0 0.0
        %717 = vmatpush1.msra.mxu0 %v689
        %718 = vmatprep.subr.mxu0 0.0
        %719 = vmatpush1.msra.mxu0 %v690
        %720 = vmatprep.subr.mxu0 0.0
        %721 = vmatpush1.msra.mxu0 %v691
        %722 = vmatprep.subr.mxu0 0.0
        %723 = vmatpush1.msra.mxu0 %v692
        %724 = vmatprep.subr.mxu0 0.0
        %725 = vmatpush1.msra.mxu0 %v693
        %726 = vmatprep.subr.mxu0 0.0
        %727 = vmatpush1.msra.mxu0 %v694
        %728 = vmatprep.subr.mxu0 0.0
        %729 = vmatpush1.msra.mxu0 %v695
        %730 = vmatprep.subr.mxu0 0.0
        %731 = vmatpush1.msra.mxu0 %v696
        %732 = vmatprep.subr.mxu0 0.0
        %733 = vmatpush1.msra.mxu0 %v697
        %734 = vmatprep.subr.mxu0 0.0
        %735 = vmatpush1.msra.mxu0 %v698
        %736 = vmatprep.subr.mxu0 0.0
        %737 = vmatpush1.msra.mxu0 %v699
        %738 = vmatprep.subr.mxu0 0.0
        %739 = vmatpush1.msra.mxu0 %v700
        %740 = vmatprep.subr.mxu0 0.0
        %741 = vmatpush1.msra.mxu0 0.0
        %742 = vmatprep.subr.mxu0 0.0
        %743 = vmatpush1.msra.mxu0 0.0
        %744 = vmatprep.subr.mxu0 0.0
        %745 = vmatpush1.msra.mxu0 0.0
        %746 = vmatprep.subr.mxu0 0.0
        %747 = vmatpush1.msra.mxu0 0.0
        %748 = vmatprep.subr.mxu0 0.0
        %749 = vmatpush1.msra.mxu0 0.0
        %750 = vmatprep.subr.mxu0 0.0
        %751 = vmatpush1.msra.mxu0 0.0
        %752 = vmatprep.subr.mxu0 0.0
        %753 = vmatpush1.msra.mxu0 0.0
        %754 = vmatprep.subr.mxu0 0.0
        %755 = vmatpush1.msra.mxu0 0.0
        %756 = vmatprep.subr.mxu0 0.0
        %757 = vmatpush1.msra.mxu0 0.0
        %758 = vmatprep.subr.mxu0 0.0
        %759 = vmatpush1.msra.mxu0 0.0
        %760 = vmatprep.subr.mxu0 0.0
        %761 = vmatpush1.msra.mxu0 0.0
        %762 = vmatprep.subr.mxu0 0.0
        %763 = vmatpush1.msra.mxu0 0.0
        %764 = vmatprep.subr.mxu0 0.0
        %765 = vmatpush1.msra.mxu0 0.0
        %766 = vmatprep.subr.mxu0 0.0
        %767 = vmatpush1.msra.mxu0 0.0
        %768 = vmatprep.subr.mxu0 0.0
        %769 = vmatpush1.msra.mxu0 0.0
        %770 = vmatprep.subr.mxu0 0.0
        %771 = vmatpush1.msra.mxu0 0.0
        %772 = vmatprep.mubr.f32.mxu0 0.0
        %773 = vmatmul.mubr.f32.gmra.mrb[0].mxu0 %v583
        %v774 = vpop.f32.mrb[0].mxu0
        %v775 = vadd.f32 %v706, %v774
        %v776 = vpop.f32.mrb[0].mxu0
        %777 = vmatprep.mubr.f32.mxu0 0.0
        %778 = vmatmul.mubr.f32.gmra.mrb[0].mxu0 %v584
        %v779 = vpop.f32.mrb[0].mxu0
        %v780 = vadd.f32 %v706, %v779
        %v781 = vpop.f32.mrb[0].mxu0
        %782 = vdwg.mxu0
        %v783 = vld [vmem:[#allocation12] sm:$0xff]
        %v784 = vld [vmem:[#allocation12 + $0x8] sm:$0xff]
        %v785 = vld [vmem:[#allocation12 + $0x10] sm:$0xff]
        %v786 = vld [vmem:[#allocation12 + $0x18] sm:$0xff]
        %v787 = vld [vmem:[#allocation12 + $0x20] sm:$0xff]
        %v788 = vld [vmem:[#allocation12 + $0x28] sm:$0xff]
        %v789 = vld [vmem:[#allocation12 + $0x30] sm:$0xff]
        %v790 = vld [vmem:[#allocation12 + $0x38] sm:$0xff]
        %v791 = vld [vmem:[#allocation12 + $0x40] sm:$0xff]
        %v792 = vld [vmem:[#allocation12 + $0x48] sm:$0xff]
        %v793 = vld [vmem:[#allocation12 + $0x50] sm:$0xff]
        %v794 = vld [vmem:[#allocation12 + $0x58] sm:$0xff]
        %v795 = vld [vmem:[#allocation12 + $0x60] sm:$0xff]
        %v796 = vld [vmem:[#allocation12 + $0x68] sm:$0xff]
        %v797 = vld [vmem:[#allocation12 + $0x70] sm:$0xff]
        %v798 = vld [vmem:[#allocation12 + $0x78] sm:$0xff]
        %v799 = vld [vmem:[%s9] sm:$0x1]
        %v801 = vlaneseq
        %v802 = vshrl.u32 %v801, 7
        %v803 = vsub.s32 0, %v802
        %v804 = vrot.slane %v799, %v803
        %806 = vmatprep.subr.mxu0 0.0
        %807 = vmatpush1.msra.mxu0 %v783
        %808 = vmatprep.subr.mxu0 0.0
        %809 = vmatpush1.msra.mxu0 %v784
        %810 = vmatprep.subr.mxu0 0.0
        %811 = vmatpush1.msra.mxu0 %v785
        %812 = vmatprep.subr.mxu0 0.0
        %813 = vmatpush1.msra.mxu0 %v786
        %814 = vmatprep.subr.mxu0 0.0
        %815 = vmatpush1.msra.mxu0 %v787
        %816 = vmatprep.subr.mxu0 0.0
        %817 = vmatpush1.msra.mxu0 %v788
        %818 = vmatprep.subr.mxu0 0.0
        %819 = vmatpush1.msra.mxu0 %v789
        %820 = vmatprep.subr.mxu0 0.0
        %821 = vmatpush1.msra.mxu0 %v790
        %822 = vmatprep.subr.mxu0 0.0
        %823 = vmatpush1.msra.mxu0 %v791
        %824 = vmatprep.subr.mxu0 0.0
        %825 = vmatpush1.msra.mxu0 %v792
        %826 = vmatprep.subr.mxu0 0.0
        %827 = vmatpush1.msra.mxu0 %v793
        %828 = vmatprep.subr.mxu0 0.0
        %829 = vmatpush1.msra.mxu0 %v794
        %830 = vmatprep.subr.mxu0 0.0
        %831 = vmatpush1.msra.mxu0 %v795
        %832 = vmatprep.subr.mxu0 0.0
        %833 = vmatpush1.msra.mxu0 %v796
        %834 = vmatprep.subr.mxu0 0.0
        %835 = vmatpush1.msra.mxu0 %v797
        %836 = vmatprep.subr.mxu0 0.0
        %837 = vmatpush1.msra.mxu0 %v798
        %838 = vmatprep.subr.mxu0 0.0
        %839 = vmatpush1.msra.mxu0 0.0
        %840 = vmatprep.subr.mxu0 0.0
        %841 = vmatpush1.msra.mxu0 0.0
        %842 = vmatprep.subr.mxu0 0.0
        %843 = vmatpush1.msra.mxu0 0.0
        %844 = vmatprep.subr.mxu0 0.0
        %845 = vmatpush1.msra.mxu0 0.0
        %846 = vmatprep.subr.mxu0 0.0
        %847 = vmatpush1.msra.mxu0 0.0
        %848 = vmatprep.subr.mxu0 0.0
        %849 = vmatpush1.msra.mxu0 0.0
        %850 = vmatprep.subr.mxu0 0.0
        %851 = vmatpush1.msra.mxu0 0.0
        %852 = vmatprep.subr.mxu0 0.0
        %853 = vmatpush1.msra.mxu0 0.0
        %854 = vmatprep.subr.mxu0 0.0
        %855 = vmatpush1.msra.mxu0 0.0
        %856 = vmatprep.subr.mxu0 0.0
        %857 = vmatpush1.msra.mxu0 0.0
        %858 = vmatprep.subr.mxu0 0.0
        %859 = vmatpush1.msra.mxu0 0.0
        %860 = vmatprep.subr.mxu0 0.0
        %861 = vmatpush1.msra.mxu0 0.0
        %862 = vmatprep.subr.mxu0 0.0
        %863 = vmatpush1.msra.mxu0 0.0
        %864 = vmatprep.subr.mxu0 0.0
        %865 = vmatpush1.msra.mxu0 0.0
        %866 = vmatprep.subr.mxu0 0.0
        %867 = vmatpush1.msra.mxu0 0.0
        %868 = vmatprep.subr.mxu0 0.0
        %869 = vmatpush1.msra.mxu0 0.0
        %870 = vmatprep.mubr.f32.mxu0 0.0
        %871 = vmatmul.mubr.f32.gmra.mrb[0].mxu0 %v585
        %v872 = vpop.f32.mrb[0].mxu0
        %v873 = vadd.f32 %v804, %v872
        %v874 = vpop.f32.mrb[0].mxu0
        %875 = vmatprep.mubr.f32.mxu0 0.0
        %876 = vmatmul.mubr.f32.gmra.mrb[0].mxu0 %v586
        %v877 = vpop.f32.mrb[0].mxu0
        %v878 = vadd.f32 %v804, %v877
        %v879 = vpop.f32.mrb[0].mxu0
        %880 = vdwg.mxu0
        %v881 = vld [vmem:[%s580] sm:$0x1]
        %vm882 = vcmp.gt.f32.partialorder %v881, 0.0
        %v883 = vsel %vm882, 1, 0
        %v884 = vlaneseq
        %v885 = vshrl.u32 %v884, 7
        %v886 = vsub.s32 0, %v885
        %v887 = vrot.slane %v883, %v886
        %vm888 = vcmp.eq.s32.totalorder %v887, 1
        %vm889 = vcmask 130048
        %v891 = vsel %vm889, %v677, 0
        %v894 = vsel %vm889, %v682, 0
        %v897 = vsel %vm889, %v775, 0
        %v900 = vsel %vm889, %v780, 0
        %902 = vmatprep.subr.mxu0 0.0
        %903 = vmatpush1.xpose.msra.mxu0 %v897
        %904 = vmatprep.subr.mxu0 0.0
        %905 = vmatpush1.xpose.msra.mxu0 %v900
        %906 = vmatprep.subr.mxu0 0.0
        %907 = vmatpush1.xpose.msra.mxu0 0.0
        %908 = vmatprep.subr.mxu0 0.0
        %909 = vmatpush1.xpose.msra.mxu0 0.0
        %910 = vmatprep.subr.mxu0 0.0
        %911 = vmatpush1.xpose.msra.mxu0 0.0
        %912 = vmatprep.subr.mxu0 0.0
        %913 = vmatpush1.xpose.msra.mxu0 0.0
        %914 = vmatprep.subr.mxu0 0.0
        %915 = vmatpush1.xpose.msra.mxu0 0.0
        %916 = vmatprep.subr.mxu0 0.0
        %917 = vmatpush1.xpose.msra.mxu0 0.0
        %918 = vmatprep.subr.mxu0 0.0
        %919 = vmatpush1.xpose.msra.mxu0 0.0
        %920 = vmatprep.subr.mxu0 0.0
        %921 = vmatpush1.xpose.msra.mxu0 0.0
        %922 = vmatprep.subr.mxu0 0.0
        %923 = vmatpush1.xpose.msra.mxu0 0.0
        %924 = vmatprep.subr.mxu0 0.0
        %925 = vmatpush1.xpose.msra.mxu0 0.0
        %926 = vmatprep.subr.mxu0 0.0
        %927 = vmatpush1.xpose.msra.mxu0 0.0
        %928 = vmatprep.subr.mxu0 0.0
        %929 = vmatpush1.xpose.msra.mxu0 0.0
        %930 = vmatprep.subr.mxu0 0.0
        %931 = vmatpush1.xpose.msra.mxu0 0.0
        %932 = vmatprep.subr.mxu0 0.0
        %933 = vmatpush1.xpose.msra.mxu0 0.0
        %934 = vmatprep.subr.mxu0 0.0
        %935 = vmatpush1.xpose.msra.mxu0 0.0
        %936 = vmatprep.subr.mxu0 0.0
        %937 = vmatpush1.xpose.msra.mxu0 0.0
        %938 = vmatprep.subr.mxu0 0.0
        %939 = vmatpush1.xpose.msra.mxu0 0.0
        %940 = vmatprep.subr.mxu0 0.0
        %941 = vmatpush1.xpose.msra.mxu0 0.0
        %942 = vmatprep.subr.mxu0 0.0
        %943 = vmatpush1.xpose.msra.mxu0 0.0
        %944 = vmatprep.subr.mxu0 0.0
        %945 = vmatpush1.xpose.msra.mxu0 0.0
        %946 = vmatprep.subr.mxu0 0.0
        %947 = vmatpush1.xpose.msra.mxu0 0.0
        %948 = vmatprep.subr.mxu0 0.0
        %949 = vmatpush1.xpose.msra.mxu0 0.0
        %950 = vmatprep.subr.mxu0 0.0
        %951 = vmatpush1.xpose.msra.mxu0 0.0
        %952 = vmatprep.subr.mxu0 0.0
        %953 = vmatpush1.xpose.msra.mxu0 0.0
        %954 = vmatprep.subr.mxu0 0.0
        %955 = vmatpush1.xpose.msra.mxu0 0.0
        %956 = vmatprep.subr.mxu0 0.0
        %957 = vmatpush1.xpose.msra.mxu0 0.0
        %958 = vmatprep.subr.mxu0 0.0
        %959 = vmatpush1.xpose.msra.mxu0 0.0
        %960 = vmatprep.subr.mxu0 0.0
        %961 = vmatpush1.xpose.msra.mxu0 0.0
        %962 = vmatprep.subr.mxu0 0.0
        %963 = vmatpush1.xpose.msra.mxu0 0.0
        %964 = vmatprep.subr.mxu0 0.0
        %965 = vmatpush1.xpose.msra.mxu0 0.0
        %966 = vmatprep.mubr.f32.mxu0 0.0
        %967 = vmatmul.mubr.f32.gmra.mrb[0].mxu0 %v891
        %v968 = vpop.f32.mrb[0].mxu0
        %v969 = vadd.f32 0.0, %v968
        %v970 = vpop.f32.mrb[0].mxu0
        %971 = vmatprep.mubr.f32.mxu0 0.0
        %972 = vmatmul.mubr.f32.gmra.mrb[0].mxu0 %v894
        %v973 = vpop.f32.mrb[0].mxu0
        %v974 = vadd.f32 0.0, %v973
        %v975 = vpop.f32.mrb[0].mxu0
        %976 = vdwg.mxu0
        %v977 = vmul.f32 %v969, 0.25
        %v978 = vmul.f32 %v974, 0.25
        %v979 = vsel %vm888, -1e+09, %v977
        %v980 = vsel %vm888, -1e+09, %v978
        %v981 = vsel %vm889, %v979, -inf
        %982 = vmax.xlane.f32.xlu0 %v981
        %v983 = vpop.xlane.xlu0 %982
        %v984 = vsel %vm889, %v980, -inf
        %985 = vmax.xlane.f32.xlu0 %v984
        %v986 = vpop.xlane.xlu0 %985
        %v987 = vsub.f32 %v979, %v983
        %v988 = vsub.f32 %v980, %v986
        %v989 = vmul.f32 %v987, 1.442695
        %v990 = vpow.pop %v989
        %v991 = vmul.f32 %v988, 1.442695
        %v992 = vpow.pop %v991
        %v993 = vsel %vm889, %v990, 0.0
        %994 = vadd.xlane.f32.xlu0 %v993
        %v995 = vpop.xlane.xlu0 %994
        %v996 = vsel %vm889, %v992, 0.0
        %997 = vadd.xlane.f32.xlu0 %v996
        %v998 = vpop.xlane.xlu0 %997
        %v1000 = vsel %vm889, %v990, 0
        %v1003 = vsel %vm889, %v992, 0
        %1005 = vmatprep.subr.mxu0 0.0
        %1006 = vmatpush1.msra.mxu0 %v873
        %1007 = vmatprep.subr.mxu0 0.0
        %1008 = vmatpush1.msra.mxu0 %v878
        %1009 = vmatprep.subr.mxu0 0.0
        %1010 = vmatpush1.msra.mxu0 0.0
        %1011 = vmatprep.subr.mxu0 0.0
        %1012 = vmatpush1.msra.mxu0 0.0
        %1013 = vmatprep.subr.mxu0 0.0
        %1014 = vmatpush1.msra.mxu0 0.0
        %1015 = vmatprep.subr.mxu0 0.0
        %1016 = vmatpush1.msra.mxu0 0.0
        %1017 = vmatprep.subr.mxu0 0.0
        %1018 = vmatpush1.msra.mxu0 0.0
        %1019 = vmatprep.subr.mxu0 0.0
        %1020 = vmatpush1.msra.mxu0 0.0
        %1021 = vmatprep.subr.mxu0 0.0
        %1022 = vmatpush1.msra.mxu0 0.0
        %1023 = vmatprep.subr.mxu0 0.0
        %1024 = vmatpush1.msra.mxu0 0.0
        %1025 = vmatprep.subr.mxu0 0.0
        %1026 = vmatpush1.msra.mxu0 0.0
        %1027 = vmatprep.subr.mxu0 0.0
        %1028 = vmatpush1.msra.mxu0 0.0
        %1029 = vmatprep.subr.mxu0 0.0
        %1030 = vmatpush1.msra.mxu0 0.0
        %1031 = vmatprep.subr.mxu0 0.0
        %1032 = vmatpush1.msra.mxu0 0.0
        %1033 = vmatprep.subr.mxu0 0.0
        %1034 = vmatpush1.msra.mxu0 0.0
        %1035 = vmatprep.subr.mxu0 0.0
        %1036 = vmatpush1.msra.mxu0 0.0
        %1037 = vmatprep.subr.mxu0 0.0
        %1038 = vmatpush1.msra.mxu0 0.0
        %1039 = vmatprep.subr.mxu0 0.0
        %1040 = vmatpush1.msra.mxu0 0.0
        %1041 = vmatprep.subr.mxu0 0.0
        %1042 = vmatpush1.msra.mxu0 0.0
        %1043 = vmatprep.subr.mxu0 0.0
        %1044 = vmatpush1.msra.mxu0 0.0
        %1045 = vmatprep.subr.mxu0 0.0
        %1046 = vmatpush1.msra.mxu0 0.0
        %1047 = vmatprep.subr.mxu0 0.0
        %1048 = vmatpush1.msra.mxu0 0.0
        %1049 = vmatprep.subr.mxu0 0.0
        %1050 = vmatpush1.msra.mxu0 0.0
        %1051 = vmatprep.subr.mxu0 0.0
        %1052 = vmatpush1.msra.mxu0 0.0
        %1053 = vmatprep.subr.mxu0 0.0
        %1054 = vmatpush1.msra.mxu0 0.0
        %1055 = vmatprep.subr.mxu0 0.0
        %1056 = vmatpush1.msra.mxu0 0.0
        %1057 = vmatprep.subr.mxu0 0.0
        %1058 = vmatpush1.msra.mxu0 0.0
        %1059 = vmatprep.subr.mxu0 0.0
        %1060 = vmatpush1.msra.mxu0 0.0
        %1061 = vmatprep.subr.mxu0 0.0
        %1062 = vmatpush1.msra.mxu0 0.0
        %1063 = vmatprep.subr.mxu0 0.0
        %1064 = vmatpush1.msra.mxu0 0.0
        %1065 = vmatprep.subr.mxu0 0.0
        %1066 = vmatpush1.msra.mxu0 0.0
        %1067 = vmatprep.subr.mxu0 0.0
        %1068 = vmatpush1.msra.mxu0 0.0
        %1069 = vmatprep.mubr.f32.mxu0 0.0
        %1070 = vmatmul.mubr.f32.gmra.mrb[0].mxu0 %v1000
        %v1071 = vpop.f32.mrb[0].mxu0
        %v1072 = vadd.f32 0.0, %v1071
        %v1073 = vpop.f32.mrb[0].mxu0
        %1074 = vmatprep.mubr.f32.mxu0 0.0
        %1075 = vmatmul.mubr.f32.gmra.mrb[0].mxu0 %v1003
        %v1076 = vpop.f32.mrb[0].mxu0
        %v1077 = vadd.f32 0.0, %v1076
        %v1078 = vpop.f32.mrb[0].mxu0
        %1079 = vdwg.mxu0
        %v1080 = vrcp.pop %v995
        %v1081 = vrcp.pop %v998
        %v1082 = vmul.f32 %v1072, %v1080
        %v1083 = vmul.f32 %v1077, %v1081
        %1084 = vst.msk [vmem:[#allocation2] sm:$0xff] %vm889, %v1082
        %1085 = vst.msk [vmem:[#allocation2 + $0x8] sm:$0xff] %vm889, %v1083
        %1086 = vrot.lane.b32.xlu0 %v677, 112
        %v1087 = vpop.permute.xlu0 %1086
        %1088 = vrot.lane.b32.xlu0 %v682, 112
        %v1089 = vpop.permute.xlu0 %1088
        %1090 = vrot.lane.b32.xlu0 %v775, 112
        %v1091 = vpop.permute.xlu0 %1090
        %1092 = vrot.lane.b32.xlu0 %v780, 112
        %v1093 = vpop.permute.xlu0 %1092
        %v1094 = vsel %vm889, %v1087, 0
        %v1096 = vsel %vm889, %v1089, 0
        %v1098 = vsel %vm889, %v1091, 0
        %v1100 = vsel %vm889, %v1093, 0
        %1102 = vmatprep.subr.mxu0 0.0
        %1103 = vmatpush1.xpose.msra.mxu0 %v1098
        %1104 = vmatprep.subr.mxu0 0.0
        %1105 = vmatpush1.xpose.msra.mxu0 %v1100
        %1106 = vmatprep.subr.mxu0 0.0
        %1107 = vmatpush1.xpose.msra.mxu0 0.0
        %1108 = vmatprep.subr.mxu0 0.0
        %1109 = vmatpush1.xpose.msra.mxu0 0.0
        %1110 = vmatprep.subr.mxu0 0.0
        %1111 = vmatpush1.xpose.msra.mxu0 0.0
        %1112 = vmatprep.subr.mxu0 0.0
        %1113 = vmatpush1.xpose.msra.mxu0 0.0
        %1114 = vmatprep.subr.mxu0 0.0
        %1115 = vmatpush1.xpose.msra.mxu0 0.0
        %1116 = vmatprep.subr.mxu0 0.0
        %1117 = vmatpush1.xpose.msra.mxu0 0.0
        %1118 = vmatprep.subr.mxu0 0.0
        %1119 = vmatpush1.xpose.msra.mxu0 0.0
        %1120 = vmatprep.subr.mxu0 0.0
        %1121 = vmatpush1.xpose.msra.mxu0 0.0
        %1122 = vmatprep.subr.mxu0 0.0
        %1123 = vmatpush1.xpose.msra.mxu0 0.0
        %1124 = vmatprep.subr.mxu0 0.0
        %1125 = vmatpush1.xpose.msra.mxu0 0.0
        %1126 = vmatprep.subr.mxu0 0.0
        %1127 = vmatpush1.xpose.msra.mxu0 0.0
        %1128 = vmatprep.subr.mxu0 0.0
        %1129 = vmatpush1.xpose.msra.mxu0 0.0
        %1130 = vmatprep.subr.mxu0 0.0
        %1131 = vmatpush1.xpose.msra.mxu0 0.0
        %1132 = vmatprep.subr.mxu0 0.0
        %1133 = vmatpush1.xpose.msra.mxu0 0.0
        %1134 = vmatprep.subr.mxu0 0.0
        %1135 = vmatpush1.xpose.msra.mxu0 0.0
        %1136 = vmatprep.subr.mxu0 0.0
        %1137 = vmatpush1.xpose.msra.mxu0 0.0
        %1138 = vmatprep.subr.mxu0 0.0
        %1139 = vmatpush1.xpose.msra.mxu0 0.0
        %1140 = vmatprep.subr.mxu0 0.0
        %1141 = vmatpush1.xpose.msra.mxu0 0.0
        %1142 = vmatprep.subr.mxu0 0.0
        %1143 = vmatpush1.xpose.msra.mxu0 0.0
        %1144 = vmatprep.subr.mxu0 0.0
        %1145 = vmatpush1.xpose.msra.mxu0 0.0
        %1146 = vmatprep.subr.mxu0 0.0
        %1147 = vmatpush1.xpose.msra.mxu0 0.0
        %1148 = vmatprep.subr.mxu0 0.0
        %1149 = vmatpush1.xpose.msra.mxu0 0.0
        %1150 = vmatprep.subr.mxu0 0.0
        %1151 = vmatpush1.xpose.msra.mxu0 0.0
        %1152 = vmatprep.subr.mxu0 0.0
        %1153 = vmatpush1.xpose.msra.mxu0 0.0
        %1154 = vmatprep.subr.mxu0 0.0
        %1155 = vmatpush1.xpose.msra.mxu0 0.0
        %1156 = vmatprep.subr.mxu0 0.0
        %1157 = vmatpush1.xpose.msra.mxu0 0.0
        %1158 = vmatprep.subr.mxu0 0.0
        %1159 = vmatpush1.xpose.msra.mxu0 0.0
        %1160 = vmatprep.subr.mxu0 0.0
        %1161 = vmatpush1.xpose.msra.mxu0 0.0
        %1162 = vmatprep.subr.mxu0 0.0
        %1163 = vmatpush1.xpose.msra.mxu0 0.0
        %1164 = vmatprep.subr.mxu0 0.0
        %1165 = vmatpush1.xpose.msra.mxu0 0.0
        %1166 = vmatprep.mubr.f32.mxu0 0.0
        %1167 = vmatmul.mubr.f32.gmra.mrb[0].mxu0 %v1094
        %v1168 = vpop.f32.mrb[0].mxu0
        %v1169 = vadd.f32 0.0, %v1168
        %v1170 = vpop.f32.mrb[0].mxu0
        %1171 = vmatprep.mubr.f32.mxu0 0.0
        %1172 = vmatmul.mubr.f32.gmra.mrb[0].mxu0 %v1096
        %v1173 = vpop.f32.mrb[0].mxu0
        %v1174 = vadd.f32 0.0, %v1173
        %v1175 = vpop.f32.mrb[0].mxu0
        %1176 = vdwg.mxu0
        %v1177 = vmul.f32 %v1169, 0.25
        %v1178 = vmul.f32 %v1174, 0.25
        %v1179 = vsel %vm888, -1e+09, %v1177
        %v1180 = vsel %vm888, -1e+09, %v1178
        %v1181 = vsel %vm889, %v1179, -inf
        %1182 = vmax.xlane.f32.xlu0 %v1181
        %v1183 = vpop.xlane.xlu0 %1182
        %v1184 = vsel %vm889, %v1180, -inf
        %1185 = vmax.xlane.f32.xlu0 %v1184
        %v1186 = vpop.xlane.xlu0 %1185
        %v1187 = vsub.f32 %v1179, %v1183
        %v1188 = vsub.f32 %v1180, %v1186
        %v1189 = vmul.f32 %v1187, 1.442695
        %v1190 = vpow.pop %v1189
        %v1191 = vmul.f32 %v1188, 1.442695
        %v1192 = vpow.pop %v1191
        %v1193 = vsel %vm889, %v1190, 0.0
        %1194 = vadd.xlane.f32.xlu0 %v1193
        %v1195 = vpop.xlane.xlu0 %1194
        %v1196 = vsel %vm889, %v1192, 0.0
        %1197 = vadd.xlane.f32.xlu0 %v1196
        %v1198 = vpop.xlane.xlu0 %1197
        %1201 = vrot.lane.b32.xlu0 %v873, 112
        %v1202 = vpop.permute.xlu0 %1201
        %1203 = vrot.lane.b32.xlu0 %v878, 112
        %v1204 = vpop.permute.xlu0 %1203
        %v1208 = vsel %vm889, %v1190, 0
        %v1211 = vsel %vm889, %v1192, 0
        %1213 = vmatprep.subr.mxu0 0.0
        %1214 = vmatpush1.msra.mxu0 %v1202
        %1215 = vmatprep.subr.mxu0 0.0
        %1216 = vmatpush1.msra.mxu0 %v1204
        %1217 = vmatprep.subr.mxu0 0.0
        %1218 = vmatpush1.msra.mxu0 0.0
        %1219 = vmatprep.subr.mxu0 0.0
        %1220 = vmatpush1.msra.mxu0 0.0
        %1221 = vmatprep.subr.mxu0 0.0
        %1222 = vmatpush1.msra.mxu0 0.0
        %1223 = vmatprep.subr.mxu0 0.0
        %1224 = vmatpush1.msra.mxu0 0.0
        %1225 = vmatprep.subr.mxu0 0.0
        %1226 = vmatpush1.msra.mxu0 0.0
        %1227 = vmatprep.subr.mxu0 0.0
        %1228 = vmatpush1.msra.mxu0 0.0
        %1229 = vmatprep.subr.mxu0 0.0
        %1230 = vmatpush1.msra.mxu0 0.0
        %1231 = vmatprep.subr.mxu0 0.0
        %1232 = vmatpush1.msra.mxu0 0.0
        %1233 = vmatprep.subr.mxu0 0.0
        %1234 = vmatpush1.msra.mxu0 0.0
        %1235 = vmatprep.subr.mxu0 0.0
        %1236 = vmatpush1.msra.mxu0 0.0
        %1237 = vmatprep.subr.mxu0 0.0
        %1238 = vmatpush1.msra.mxu0 0.0
        %1239 = vmatprep.subr.mxu0 0.0
        %1240 = vmatpush1.msra.mxu0 0.0
        %1241 = vmatprep.subr.mxu0 0.0
        %1242 = vmatpush1.msra.mxu0 0.0
        %1243 = vmatprep.subr.mxu0 0.0
        %1244 = vmatpush1.msra.mxu0 0.0
        %1245 = vmatprep.subr.mxu0 0.0
        %1246 = vmatpush1.msra.mxu0 0.0
        %1247 = vmatprep.subr.mxu0 0.0
        %1248 = vmatpush1.msra.mxu0 0.0
        %1249 = vmatprep.subr.mxu0 0.0
        %1250 = vmatpush1.msra.mxu0 0.0
        %1251 = vmatprep.subr.mxu0 0.0
        %1252 = vmatpush1.msra.mxu0 0.0
        %1253 = vmatprep.subr.mxu0 0.0
        %1254 = vmatpush1.msra.mxu0 0.0
        %1255 = vmatprep.subr.mxu0 0.0
        %1256 = vmatpush1.msra.mxu0 0.0
        %1257 = vmatprep.subr.mxu0 0.0
        %1258 = vmatpush1.msra.mxu0 0.0
        %1259 = vmatprep.subr.mxu0 0.0
        %1260 = vmatpush1.msra.mxu0 0.0
        %1261 = vmatprep.subr.mxu0 0.0
        %1262 = vmatpush1.msra.mxu0 0.0
        %1263 = vmatprep.subr.mxu0 0.0
        %1264 = vmatpush1.msra.mxu0 0.0
        %1265 = vmatprep.subr.mxu0 0.0
        %1266 = vmatpush1.msra.mxu0 0.0
        %1267 = vmatprep.subr.mxu0 0.0
        %1268 = vmatpush1.msra.mxu0 0.0
        %1269 = vmatprep.subr.mxu0 0.0
        %1270 = vmatpush1.msra.mxu0 0.0
        %1271 = vmatprep.subr.mxu0 0.0
        %1272 = vmatpush1.msra.mxu0 0.0
        %1273 = vmatprep.subr.mxu0 0.0
        %1274 = vmatpush1.msra.mxu0 0.0
        %1275 = vmatprep.subr.mxu0 0.0
        %1276 = vmatpush1.msra.mxu0 0.0
        %1277 = vmatprep.mubr.f32.mxu0 0.0
        %1278 = vmatmul.mubr.f32.gmra.mrb[0].mxu0 %v1208
        %v1279 = vpop.f32.mrb[0].mxu0
        %v1280 = vadd.f32 0.0, %v1279
        %v1281 = vpop.f32.mrb[0].mxu0
        %1282 = vmatprep.mubr.f32.mxu0 0.0
        %1283 = vmatmul.mubr.f32.gmra.mrb[0].mxu0 %v1211
        %v1284 = vpop.f32.mrb[0].mxu0
        %v1285 = vadd.f32 0.0, %v1284
        %v1286 = vpop.f32.mrb[0].mxu0
        %1287 = vdwg.mxu0
        %v1288 = vrcp.pop %v1195
        %v1289 = vrcp.pop %v1198
        %v1290 = vmul.f32 %v1280, %v1288
        %v1291 = vmul.f32 %v1285, %v1289
        %1294 = vrot.lane.b32.xlu0 %v1290, 16
        %v1295 = vpop.permute.xlu0 %1294
        %1296 = vrot.lane.b32.xlu0 %v1291, 16
        %v1297 = vpop.permute.xlu0 %1296
        %vm1300 = vcmask 261248
        %1301 = vst.msk [vmem:[#allocation2] sm:$0xff] %vm1300, %v1295
        %1302 = vst.msk [vmem:[#allocation2 + $0x8] sm:$0xff] %vm1300, %v1297
        %1303 = vrot.lane.b32.xlu0 %v677, 96
        %v1304 = vpop.permute.xlu0 %1303
        %1305 = vrot.lane.b32.xlu0 %v682, 96
        %v1306 = vpop.permute.xlu0 %1305
        %1307 = vrot.lane.b32.xlu0 %v775, 96
        %v1308 = vpop.permute.xlu0 %1307
        %1309 = vrot.lane.b32.xlu0 %v780, 96
        %v1310 = vpop.permute.xlu0 %1309
        %v1311 = vsel %vm889, %v1304, 0
        %v1313 = vsel %vm889, %v1306, 0
        %v1315 = vsel %vm889, %v1308, 0
        %v1317 = vsel %vm889, %v1310, 0
        %1319 = vmatprep.subr.mxu0 0.0
        %1320 = vmatpush1.xpose.msra.mxu0 %v1315
        %1321 = vmatprep.subr.mxu0 0.0
        %1322 = vmatpush1.xpose.msra.mxu0 %v1317
        %1323 = vmatprep.subr.mxu0 0.0
        %1324 = vmatpush1.xpose.msra.mxu0 0.0
        %1325 = vmatprep.subr.mxu0 0.0
        %1326 = vmatpush1.xpose.msra.mxu0 0.0
        %1327 = vmatprep.subr.mxu0 0.0
        %1328 = vmatpush1.xpose.msra.mxu0 0.0
        %1329 = vmatprep.subr.mxu0 0.0
        %1330 = vmatpush1.xpose.msra.mxu0 0.0
        %1331 = vmatprep.subr.mxu0 0.0
        %1332 = vmatpush1.xpose.msra.mxu0 0.0
        %1333 = vmatprep.subr.mxu0 0.0
        %1334 = vmatpush1.xpose.msra.mxu0 0.0
        %1335 = vmatprep.subr.mxu0 0.0
        %1336 = vmatpush1.xpose.msra.mxu0 0.0
        %1337 = vmatprep.subr.mxu0 0.0
        %1338 = vmatpush1.xpose.msra.mxu0 0.0
        %1339 = vmatprep.subr.mxu0 0.0
        %1340 = vmatpush1.xpose.msra.mxu0 0.0
        %1341 = vmatprep.subr.mxu0 0.0
        %1342 = vmatpush1.xpose.msra.mxu0 0.0
        %1343 = vmatprep.subr.mxu0 0.0
        %1344 = vmatpush1.xpose.msra.mxu0 0.0
        %1345 = vmatprep.subr.mxu0 0.0
        %1346 = vmatpush1.xpose.msra.mxu0 0.0
        %1347 = vmatprep.subr.mxu0 0.0
        %1348 = vmatpush1.xpose.msra.mxu0 0.0
        %1349 = vmatprep.subr.mxu0 0.0
        %1350 = vmatpush1.xpose.msra.mxu0 0.0
        %1351 = vmatprep.subr.mxu0 0.0
        %1352 = vmatpush1.xpose.msra.mxu0 0.0
        %1353 = vmatprep.subr.mxu0 0.0
        %1354 = vmatpush1.xpose.msra.mxu0 0.0
        %1355 = vmatprep.subr.mxu0 0.0
        %1356 = vmatpush1.xpose.msra.mxu0 0.0
        %1357 = vmatprep.subr.mxu0 0.0
        %1358 = vmatpush1.xpose.msra.mxu0 0.0
        %1359 = vmatprep.subr.mxu0 0.0
        %1360 = vmatpush1.xpose.msra.mxu0 0.0
        %1361 = vmatprep.subr.mxu0 0.0
        %1362 = vmatpush1.xpose.msra.mxu0 0.0
        %1363 = vmatprep.subr.mxu0 0.0
        %1364 = vmatpush1.xpose.msra.mxu0 0.0
        %1365 = vmatprep.subr.mxu0 0.0
        %1366 = vmatpush1.xpose.msra.mxu0 0.0
        %1367 = vmatprep.subr.mxu0 0.0
        %1368 = vmatpush1.xpose.msra.mxu0 0.0
        %1369 = vmatprep.subr.mxu0 0.0
        %1370 = vmatpush1.xpose.msra.mxu0 0.0
        %1371 = vmatprep.subr.mxu0 0.0
        %1372 = vmatpush1.xpose.msra.mxu0 0.0
        %1373 = vmatprep.subr.mxu0 0.0
        %1374 = vmatpush1.xpose.msra.mxu0 0.0
        %1375 = vmatprep.subr.mxu0 0.0
        %1376 = vmatpush1.xpose.msra.mxu0 0.0
        %1377 = vmatprep.subr.mxu0 0.0
        %1378 = vmatpush1.xpose.msra.mxu0 0.0
        %1379 = vmatprep.subr.mxu0 0.0
        %1380 = vmatpush1.xpose.msra.mxu0 0.0
        %1381 = vmatprep.subr.mxu0 0.0
        %1382 = vmatpush1.xpose.msra.mxu0 0.0
        %1383 = vmatprep.mubr.f32.mxu0 0.0
        %1384 = vmatmul.mubr.f32.gmra.mrb[0].mxu0 %v1311
        %v1385 = vpop.f32.mrb[0].mxu0
        %v1386 = vadd.f32 0.0, %v1385
        %v1387 = vpop.f32.mrb[0].mxu0
        %1388 = vmatprep.mubr.f32.mxu0 0.0
        %1389 = vmatmul.mubr.f32.gmra.mrb[0].mxu0 %v1313
        %v1390 = vpop.f32.mrb[0].mxu0
        %v1391 = vadd.f32 0.0, %v1390
        %v1392 = vpop.f32.mrb[0].mxu0
        %1393 = vdwg.mxu0
        %v1394 = vmul.f32 %v1386, 0.25
        %v1395 = vmul.f32 %v1391, 0.25
        %v1396 = vsel %vm888, -1e+09, %v1394
        %v1397 = vsel %vm888, -1e+09, %v1395
        %v1398 = vsel %vm889, %v1396, -inf
        %1399 = vmax.xlane.f32.xlu0 %v1398
        %v1400 = vpop.xlane.xlu0 %1399
        %v1401 = vsel %vm889, %v1397, -inf
        %1402 = vmax.xlane.f32.xlu0 %v1401
        %v1403 = vpop.xlane.xlu0 %1402
        %v1404 = vsub.f32 %v1396, %v1400
        %v1405 = vsub.f32 %v1397, %v1403
        %v1406 = vmul.f32 %v1404, 1.442695
        %v1407 = vpow.pop %v1406
        %v1408 = vmul.f32 %v1405, 1.442695
        %v1409 = vpow.pop %v1408
        %v1410 = vsel %vm889, %v1407, 0.0
        %1411 = vadd.xlane.f32.xlu0 %v1410
        %v1412 = vpop.xlane.xlu0 %1411
        %v1413 = vsel %vm889, %v1409, 0.0
        %1414 = vadd.xlane.f32.xlu0 %v1413
        %v1415 = vpop.xlane.xlu0 %1414
        %1416 = vrot.lane.b32.xlu0 %v873, 96
        %v1417 = vpop.permute.xlu0 %1416
        %1418 = vrot.lane.b32.xlu0 %v878, 96
        %v1419 = vpop.permute.xlu0 %1418
        %v1423 = vsel %vm889, %v1407, 0
        %v1426 = vsel %vm889, %v1409, 0
        %1428 = vmatprep.subr.mxu0 0.0
        %1429 = vmatpush1.msra.mxu0 %v1417
        %1430 = vmatprep.subr.mxu0 0.0
        %1431 = vmatpush1.msra.mxu0 %v1419
        %1432 = vmatprep.subr.mxu0 0.0
        %1433 = vmatpush1.msra.mxu0 0.0
        %1434 = vmatprep.subr.mxu0 0.0
        %1435 = vmatpush1.msra.mxu0 0.0
        %1436 = vmatprep.subr.mxu0 0.0
        %1437 = vmatpush1.msra.mxu0 0.0
        %1438 = vmatprep.subr.mxu0 0.0
        %1439 = vmatpush1.msra.mxu0 0.0
        %1440 = vmatprep.subr.mxu0 0.0
        %1441 = vmatpush1.msra.mxu0 0.0
        %1442 = vmatprep.subr.mxu0 0.0
        %1443 = vmatpush1.msra.mxu0 0.0
        %1444 = vmatprep.subr.mxu0 0.0
        %1445 = vmatpush1.msra.mxu0 0.0
        %1446 = vmatprep.subr.mxu0 0.0
        %1447 = vmatpush1.msra.mxu0 0.0
        %1448 = vmatprep.subr.mxu0 0.0
        %1449 = vmatpush1.msra.mxu0 0.0
        %1450 = vmatprep.subr.mxu0 0.0
        %1451 = vmatpush1.msra.mxu0 0.0
        %1452 = vmatprep.subr.mxu0 0.0
        %1453 = vmatpush1.msra.mxu0 0.0
        %1454 = vmatprep.subr.mxu0 0.0
        %1455 = vmatpush1.msra.mxu0 0.0
        %1456 = vmatprep.subr.mxu0 0.0
        %1457 = vmatpush1.msra.mxu0 0.0
        %1458 = vmatprep.subr.mxu0 0.0
        %1459 = vmatpush1.msra.mxu0 0.0
        %1460 = vmatprep.subr.mxu0 0.0
        %1461 = vmatpush1.msra.mxu0 0.0
        %1462 = vmatprep.subr.mxu0 0.0
        %1463 = vmatpush1.msra.mxu0 0.0
        %1464 = vmatprep.subr.mxu0 0.0
        %1465 = vmatpush1.msra.mxu0 0.0
        %1466 = vmatprep.subr.mxu0 0.0
        %1467 = vmatpush1.msra.mxu0 0.0
        %1468 = vmatprep.subr.mxu0 0.0
        %1469 = vmatpush1.msra.mxu0 0.0
        %1470 = vmatprep.subr.mxu0 0.0
        %1471 = vmatpush1.msra.mxu0 0.0
        %1472 = vmatprep.subr.mxu0 0.0
        %1473 = vmatpush1.msra.mxu0 0.0
        %1474 = vmatprep.subr.mxu0 0.0
        %1475 = vmatpush1.msra.mxu0 0.0
        %1476 = vmatprep.subr.mxu0 0.0
        %1477 = vmatpush1.msra.mxu0 0.0
        %1478 = vmatprep.subr.mxu0 0.0
        %1479 = vmatpush1.msra.mxu0 0.0
        %1480 = vmatprep.subr.mxu0 0.0
        %1481 = vmatpush1.msra.mxu0 0.0
        %1482 = vmatprep.subr.mxu0 0.0
        %1483 = vmatpush1.msra.mxu0 0.0
        %1484 = vmatprep.subr.mxu0 0.0
        %1485 = vmatpush1.msra.mxu0 0.0
        %1486 = vmatprep.subr.mxu0 0.0
        %1487 = vmatpush1.msra.mxu0 0.0
        %1488 = vmatprep.subr.mxu0 0.0
        %1489 = vmatpush1.msra.mxu0 0.0
        %1490 = vmatprep.subr.mxu0 0.0
        %1491 = vmatpush1.msra.mxu0 0.0
        %1492 = vmatprep.mubr.f32.mxu0 0.0
        %1493 = vmatmul.mubr.f32.gmra.mrb[0].mxu0 %v1423
        %v1494 = vpop.f32.mrb[0].mxu0
        %v1495 = vadd.f32 0.0, %v1494
        %v1496 = vpop.f32.mrb[0].mxu0
        %1497 = vmatprep.mubr.f32.mxu0 0.0
        %1498 = vmatmul.mubr.f32.gmra.mrb[0].mxu0 %v1426
        %v1499 = vpop.f32.mrb[0].mxu0
        %v1500 = vadd.f32 0.0, %v1499
        %v1501 = vpop.f32.mrb[0].mxu0
        %1502 = vdwg.mxu0
        %v1503 = vrcp.pop %v1412
        %v1504 = vrcp.pop %v1415
        %v1505 = vmul.f32 %v1495, %v1503
        %v1506 = vmul.f32 %v1500, %v1504
        %1509 = vrot.lane.b32.xlu0 %v1505, 32
        %v1510 = vpop.permute.xlu0 %1509
        %1511 = vrot.lane.b32.xlu0 %v1506, 32
        %v1512 = vpop.permute.xlu0 %1511
        %vm1515 = vcmask 392448
        %1516 = vst.msk [vmem:[#allocation2] sm:$0xff] %vm1515, %v1510
        %1517 = vst.msk [vmem:[#allocation2 + $0x8] sm:$0xff] %vm1515, %v1512
        %1518 = vrot.lane.b32.xlu0 %v677, 80
        %v1519 = vpop.permute.xlu0 %1518
        %1520 = vrot.lane.b32.xlu0 %v682, 80
        %v1521 = vpop.permute.xlu0 %1520
        %1522 = vrot.lane.b32.xlu0 %v775, 80
        %v1523 = vpop.permute.xlu0 %1522
        %1524 = vrot.lane.b32.xlu0 %v780, 80
        %v1525 = vpop.permute.xlu0 %1524
        %v1526 = vsel %vm889, %v1519, 0
        %v1528 = vsel %vm889, %v1521, 0
        %v1530 = vsel %vm889, %v1523, 0
        %v1532 = vsel %vm889, %v1525, 0
        %1534 = vmatprep.subr.mxu0 0.0
        %1535 = vmatpush1.xpose.msra.mxu0 %v1530
        %1536 = vmatprep.subr.mxu0 0.0
        %1537 = vmatpush1.xpose.msra.mxu0 %v1532
        %1538 = vmatprep.subr.mxu0 0.0
        %1539 = vmatpush1.xpose.msra.mxu0 0.0
        %1540 = vmatprep.subr.mxu0 0.0
        %1541 = vmatpush1.xpose.msra.mxu0 0.0
        %1542 = vmatprep.subr.mxu0 0.0
        %1543 = vmatpush1.xpose.msra.mxu0 0.0
        %1544 = vmatprep.subr.mxu0 0.0
        %1545 = vmatpush1.xpose.msra.mxu0 0.0
        %1546 = vmatprep.subr.mxu0 0.0
        %1547 = vmatpush1.xpose.msra.mxu0 0.0
        %1548 = vmatprep.subr.mxu0 0.0
        %1549 = vmatpush1.xpose.msra.mxu0 0.0
        %1550 = vmatprep.subr.mxu0 0.0
        %1551 = vmatpush1.xpose.msra.mxu0 0.0
        %1552 = vmatprep.subr.mxu0 0.0
        %1553 = vmatpush1.xpose.msra.mxu0 0.0
        %1554 = vmatprep.subr.mxu0 0.0
        %1555 = vmatpush1.xpose.msra.mxu0 0.0
        %1556 = vmatprep.subr.mxu0 0.0
        %1557 = vmatpush1.xpose.msra.mxu0 0.0
        %1558 = vmatprep.subr.mxu0 0.0
        %1559 = vmatpush1.xpose.msra.mxu0 0.0
        %1560 = vmatprep.subr.mxu0 0.0
        %1561 = vmatpush1.xpose.msra.mxu0 0.0
        %1562 = vmatprep.subr.mxu0 0.0
        %1563 = vmatpush1.xpose.msra.mxu0 0.0
        %1564 = vmatprep.subr.mxu0 0.0
        %1565 = vmatpush1.xpose.msra.mxu0 0.0
        %1566 = vmatprep.subr.mxu0 0.0
        %1567 = vmatpush1.xpose.msra.mxu0 0.0
        %1568 = vmatprep.subr.mxu0 0.0
        %1569 = vmatpush1.xpose.msra.mxu0 0.0
        %1570 = vmatprep.subr.mxu0 0.0
        %1571 = vmatpush1.xpose.msra.mxu0 0.0
        %1572 = vmatprep.subr.mxu0 0.0
        %1573 = vmatpush1.xpose.msra.mxu0 0.0
        %1574 = vmatprep.subr.mxu0 0.0
        %1575 = vmatpush1.xpose.msra.mxu0 0.0
        %1576 = vmatprep.subr.mxu0 0.0
        %1577 = vmatpush1.xpose.msra.mxu0 0.0
        %1578 = vmatprep.subr.mxu0 0.0
        %1579 = vmatpush1.xpose.msra.mxu0 0.0
        %1580 = vmatprep.subr.mxu0 0.0
        %1581 = vmatpush1.xpose.msra.mxu0 0.0
        %1582 = vmatprep.subr.mxu0 0.0
        %1583 = vmatpush1.xpose.msra.mxu0 0.0
        %1584 = vmatprep.subr.mxu0 0.0
        %1585 = vmatpush1.xpose.msra.mxu0 0.0
        %1586 = vmatprep.subr.mxu0 0.0
        %1587 = vmatpush1.xpose.msra.mxu0 0.0
        %1588 = vmatprep.subr.mxu0 0.0
        %1589 = vmatpush1.xpose.msra.mxu0 0.0
        %1590 = vmatprep.subr.mxu0 0.0
        %1591 = vmatpush1.xpose.msra.mxu0 0.0
        %1592 = vmatprep.subr.mxu0 0.0
        %1593 = vmatpush1.xpose.msra.mxu0 0.0
        %1594 = vmatprep.subr.mxu0 0.0
        %1595 = vmatpush1.xpose.msra.mxu0 0.0
        %1596 = vmatprep.subr.mxu0 0.0
        %1597 = vmatpush1.xpose.msra.mxu0 0.0
        %1598 = vmatprep.mubr.f32.mxu0 0.0
        %1599 = vmatmul.mubr.f32.gmra.mrb[0].mxu0 %v1526
        %v1600 = vpop.f32.mrb[0].mxu0
        %v1601 = vadd.f32 0.0, %v1600
        %v1602 = vpop.f32.mrb[0].mxu0
        %1603 = vmatprep.mubr.f32.mxu0 0.0
        %1604 = vmatmul.mubr.f32.gmra.mrb[0].mxu0 %v1528
        %v1605 = vpop.f32.mrb[0].mxu0
        %v1606 = vadd.f32 0.0, %v1605
        %v1607 = vpop.f32.mrb[0].mxu0
        %1608 = vdwg.mxu0
        %v1609 = vmul.f32 %v1601, 0.25
        %v1610 = vmul.f32 %v1606, 0.25
        %v1611 = vsel %vm888, -1e+09, %v1609
        %v1612 = vsel %vm888, -1e+09, %v1610
        %v1613 = vsel %vm889, %v1611, -inf
        %1614 = vmax.xlane.f32.xlu0 %v1613
        %v1615 = vpop.xlane.xlu0 %1614
        %v1616 = vsel %vm889, %v1612, -inf
        %1617 = vmax.xlane.f32.xlu0 %v1616
        %v1618 = vpop.xlane.xlu0 %1617
        %v1619 = vsub.f32 %v1611, %v1615
        %v1620 = vsub.f32 %v1612, %v1618
        %v1621 = vmul.f32 %v1619, 1.442695
        %v1622 = vpow.pop %v1621
        %v1623 = vmul.f32 %v1620, 1.442695
        %v1624 = vpow.pop %v1623
        %v1625 = vsel %vm889, %v1622, 0.0
        %1626 = vadd.xlane.f32.xlu0 %v1625
        %v1627 = vpop.xlane.xlu0 %1626
        %v1628 = vsel %vm889, %v1624, 0.0
        %1629 = vadd.xlane.f32.xlu0 %v1628
        %v1630 = vpop.xlane.xlu0 %1629
        %1631 = vrot.lane.b32.xlu0 %v873, 80
        %v1632 = vpop.permute.xlu0 %1631
        %1633 = vrot.lane.b32.xlu0 %v878, 80
        %v1634 = vpop.permute.xlu0 %1633
        %v1638 = vsel %vm889, %v1622, 0
        %v1641 = vsel %vm889, %v1624, 0
        %1643 = vmatprep.subr.mxu0 0.0
        %1644 = vmatpush1.msra.mxu0 %v1632
        %1645 = vmatprep.subr.mxu0 0.0
        %1646 = vmatpush1.msra.mxu0 %v1634
        %1647 = vmatprep.subr.mxu0 0.0
        %1648 = vmatpush1.msra.mxu0 0.0
        %1649 = vmatprep.subr.mxu0 0.0
        %1650 = vmatpush1.msra.mxu0 0.0
        %1651 = vmatprep.subr.mxu0 0.0
        %1652 = vmatpush1.msra.mxu0 0.0
        %1653 = vmatprep.subr.mxu0 0.0
        %1654 = vmatpush1.msra.mxu0 0.0
        %1655 = vmatprep.subr.mxu0 0.0
        %1656 = vmatpush1.msra.mxu0 0.0
        %1657 = vmatprep.subr.mxu0 0.0
        %1658 = vmatpush1.msra.mxu0 0.0
        %1659 = vmatprep.subr.mxu0 0.0
        %1660 = vmatpush1.msra.mxu0 0.0
        %1661 = vmatprep.subr.mxu0 0.0
        %1662 = vmatpush1.msra.mxu0 0.0
        %1663 = vmatprep.subr.mxu0 0.0
        %1664 = vmatpush1.msra.mxu0 0.0
        %1665 = vmatprep.subr.mxu0 0.0
        %1666 = vmatpush1.msra.mxu0 0.0
        %1667 = vmatprep.subr.mxu0 0.0
        %1668 = vmatpush1.msra.mxu0 0.0
        %1669 = vmatprep.subr.mxu0 0.0
        %1670 = vmatpush1.msra.mxu0 0.0
        %1671 = vmatprep.subr.mxu0 0.0
        %1672 = vmatpush1.msra.mxu0 0.0
        %1673 = vmatprep.subr.mxu0 0.0
        %1674 = vmatpush1.msra.mxu0 0.0
        %1675 = vmatprep.subr.mxu0 0.0
        %1676 = vmatpush1.msra.mxu0 0.0
        %1677 = vmatprep.subr.mxu0 0.0
        %1678 = vmatpush1.msra.mxu0 0.0
        %1679 = vmatprep.subr.mxu0 0.0
        %1680 = vmatpush1.msra.mxu0 0.0
        %1681 = vmatprep.subr.mxu0 0.0
        %1682 = vmatpush1.msra.mxu0 0.0
        %1683 = vmatprep.subr.mxu0 0.0
        %1684 = vmatpush1.msra.mxu0 0.0
        %1685 = vmatprep.subr.mxu0 0.0
        %1686 = vmatpush1.msra.mxu0 0.0
        %1687 = vmatprep.subr.mxu0 0.0
        %1688 = vmatpush1.msra.mxu0 0.0
        %1689 = vmatprep.subr.mxu0 0.0
        %1690 = vmatpush1.msra.mxu0 0.0
        %1691 = vmatprep.subr.mxu0 0.0
        %1692 = vmatpush1.msra.mxu0 0.0
        %1693 = vmatprep.subr.mxu0 0.0
        %1694 = vmatpush1.msra.mxu0 0.0
        %1695 = vmatprep.subr.mxu0 0.0
        %1696 = vmatpush1.msra.mxu0 0.0
        %1697 = vmatprep.subr.mxu0 0.0
        %1698 = vmatpush1.msra.mxu0 0.0
        %1699 = vmatprep.subr.mxu0 0.0
        %1700 = vmatpush1.msra.mxu0 0.0
        %1701 = vmatprep.subr.mxu0 0.0
        %1702 = vmatpush1.msra.mxu0 0.0
        %1703 = vmatprep.subr.mxu0 0.0
        %1704 = vmatpush1.msra.mxu0 0.0
        %1705 = vmatprep.subr.mxu0 0.0
        %1706 = vmatpush1.msra.mxu0 0.0
        %1707 = vmatprep.mubr.f32.mxu0 0.0
        %1708 = vmatmul.mubr.f32.gmra.mrb[0].mxu0 %v1638
        %v1709 = vpop.f32.mrb[0].mxu0
        %v1710 = vadd.f32 0.0, %v1709
        %v1711 = vpop.f32.mrb[0].mxu0
        %1712 = vmatprep.mubr.f32.mxu0 0.0
        %1713 = vmatmul.mubr.f32.gmra.mrb[0].mxu0 %v1641
        %v1714 = vpop.f32.mrb[0].mxu0
        %v1715 = vadd.f32 0.0, %v1714
        %v1716 = vpop.f32.mrb[0].mxu0
        %1717 = vdwg.mxu0
        %v1718 = vrcp.pop %v1627
        %v1719 = vrcp.pop %v1630
        %v1720 = vmul.f32 %v1710, %v1718
        %v1721 = vmul.f32 %v1715, %v1719
        %1724 = vrot.lane.b32.xlu0 %v1720, 48
        %v1725 = vpop.permute.xlu0 %1724
        %1726 = vrot.lane.b32.xlu0 %v1721, 48
        %v1727 = vpop.permute.xlu0 %1726
        %vm1730 = vcmask 523648
        %1731 = vst.msk [vmem:[#allocation2] sm:$0xff] %vm1730, %v1725
        %1732 = vst.msk [vmem:[#allocation2 + $0x8] sm:$0xff] %vm1730, %v1727
        %1733 = vrot.lane.b32.xlu0 %v677, 64
        %v1734 = vpop.permute.xlu0 %1733
        %1735 = vrot.lane.b32.xlu0 %v682, 64
        %v1736 = vpop.permute.xlu0 %1735
        %1737 = vrot.lane.b32.xlu0 %v775, 64
        %v1738 = vpop.permute.xlu0 %1737
        %1739 = vrot.lane.b32.xlu0 %v780, 64
        %v1740 = vpop.permute.xlu0 %1739
        %v1741 = vsel %vm889, %v1734, 0
        %v1743 = vsel %vm889, %v1736, 0
        %v1745 = vsel %vm889, %v1738, 0
        %v1747 = vsel %vm889, %v1740, 0
        %1749 = vmatprep.subr.mxu0 0.0
        %1750 = vmatpush1.xpose.msra.mxu0 %v1745
        %1751 = vmatprep.subr.mxu0 0.0
        %1752 = vmatpush1.xpose.msra.mxu0 %v1747
        %1753 = vmatprep.subr.mxu0 0.0
        %1754 = vmatpush1.xpose.msra.mxu0 0.0
        %1755 = vmatprep.subr.mxu0 0.0
        %1756 = vmatpush1.xpose.msra.mxu0 0.0
        %1757 = vmatprep.subr.mxu0 0.0
        %1758 = vmatpush1.xpose.msra.mxu0 0.0
        %1759 = vmatprep.subr.mxu0 0.0
        %1760 = vmatpush1.xpose.msra.mxu0 0.0
        %1761 = vmatprep.subr.mxu0 0.0
        %1762 = vmatpush1.xpose.msra.mxu0 0.0
        %1763 = vmatprep.subr.mxu0 0.0
        %1764 = vmatpush1.xpose.msra.mxu0 0.0
        %1765 = vmatprep.subr.mxu0 0.0
        %1766 = vmatpush1.xpose.msra.mxu0 0.0
        %1767 = vmatprep.subr.mxu0 0.0
        %1768 = vmatpush1.xpose.msra.mxu0 0.0
        %1769 = vmatprep.subr.mxu0 0.0
        %1770 = vmatpush1.xpose.msra.mxu0 0.0
        %1771 = vmatprep.subr.mxu0 0.0
        %1772 = vmatpush1.xpose.msra.mxu0 0.0
        %1773 = vmatprep.subr.mxu0 0.0
        %1774 = vmatpush1.xpose.msra.mxu0 0.0
        %1775 = vmatprep.subr.mxu0 0.0
        %1776 = vmatpush1.xpose.msra.mxu0 0.0
        %1777 = vmatprep.subr.mxu0 0.0
        %1778 = vmatpush1.xpose.msra.mxu0 0.0
        %1779 = vmatprep.subr.mxu0 0.0
        %1780 = vmatpush1.xpose.msra.mxu0 0.0
        %1781 = vmatprep.subr.mxu0 0.0
        %1782 = vmatpush1.xpose.msra.mxu0 0.0
        %1783 = vmatprep.subr.mxu0 0.0
        %1784 = vmatpush1.xpose.msra.mxu0 0.0
        %1785 = vmatprep.subr.mxu0 0.0
        %1786 = vmatpush1.xpose.msra.mxu0 0.0
        %1787 = vmatprep.subr.mxu0 0.0
        %1788 = vmatpush1.xpose.msra.mxu0 0.0
        %1789 = vmatprep.subr.mxu0 0.0
        %1790 = vmatpush1.xpose.msra.mxu0 0.0
        %1791 = vmatprep.subr.mxu0 0.0
        %1792 = vmatpush1.xpose.msra.mxu0 0.0
        %1793 = vmatprep.subr.mxu0 0.0
        %1794 = vmatpush1.xpose.msra.mxu0 0.0
        %1795 = vmatprep.subr.mxu0 0.0
        %1796 = vmatpush1.xpose.msra.mxu0 0.0
        %1797 = vmatprep.subr.mxu0 0.0
        %1798 = vmatpush1.xpose.msra.mxu0 0.0
        %1799 = vmatprep.subr.mxu0 0.0
        %1800 = vmatpush1.xpose.msra.mxu0 0.0
        %1801 = vmatprep.subr.mxu0 0.0
        %1802 = vmatpush1.xpose.msra.mxu0 0.0
        %1803 = vmatprep.subr.mxu0 0.0
        %1804 = vmatpush1.xpose.msra.mxu0 0.0
        %1805 = vmatprep.subr.mxu0 0.0
        %1806 = vmatpush1.xpose.msra.mxu0 0.0
        %1807 = vmatprep.subr.mxu0 0.0
        %1808 = vmatpush1.xpose.msra.mxu0 0.0
        %1809 = vmatprep.subr.mxu0 0.0
        %1810 = vmatpush1.xpose.msra.mxu0 0.0
        %1811 = vmatprep.subr.mxu0 0.0
        %1812 = vmatpush1.xpose.msra.mxu0 0.0
        %1813 = vmatprep.mubr.f32.mxu0 0.0
        %1814 = vmatmul.mubr.f32.gmra.mrb[0].mxu0 %v1741
        %v1815 = vpop.f32.mrb[0].mxu0
        %v1816 = vadd.f32 0.0, %v1815
        %v1817 = vpop.f32.mrb[0].mxu0
        %1818 = vmatprep.mubr.f32.mxu0 0.0
        %1819 = vmatmul.mubr.f32.gmra.mrb[0].mxu0 %v1743
        %v1820 = vpop.f32.mrb[0].mxu0
        %v1821 = vadd.f32 0.0, %v1820
        %v1822 = vpop.f32.mrb[0].mxu0
        %1823 = vdwg.mxu0
        %v1824 = vmul.f32 %v1816, 0.25
        %v1825 = vmul.f32 %v1821, 0.25
        %v1826 = vsel %vm888, -1e+09, %v1824
        %v1827 = vsel %vm888, -1e+09, %v1825
        %v1828 = vsel %vm889, %v1826, -inf
        %1829 = vmax.xlane.f32.xlu0 %v1828
        %v1830 = vpop.xlane.xlu0 %1829
        %v1831 = vsel %vm889, %v1827, -inf
        %1832 = vmax.xlane.f32.xlu0 %v1831
        %v1833 = vpop.xlane.xlu0 %1832
        %v1834 = vsub.f32 %v1826, %v1830
        %v1835 = vsub.f32 %v1827, %v1833
        %v1836 = vmul.f32 %v1834, 1.442695
        %v1837 = vpow.pop %v1836
        %v1838 = vmul.f32 %v1835, 1.442695
        %v1839 = vpow.pop %v1838
        %v1840 = vsel %vm889, %v1837, 0.0
        %1841 = vadd.xlane.f32.xlu0 %v1840
        %v1842 = vpop.xlane.xlu0 %1841
        %v1843 = vsel %vm889, %v1839, 0.0
        %1844 = vadd.xlane.f32.xlu0 %v1843
        %v1845 = vpop.xlane.xlu0 %1844
        %1846 = vrot.lane.b32.xlu0 %v873, 64
        %v1847 = vpop.permute.xlu0 %1846
        %1848 = vrot.lane.b32.xlu0 %v878, 64
        %v1849 = vpop.permute.xlu0 %1848
        %v1853 = vsel %vm889, %v1837, 0
        %v1856 = vsel %vm889, %v1839, 0
        %1858 = vmatprep.subr.mxu0 0.0
        %1859 = vmatpush1.msra.mxu0 %v1847
        %1860 = vmatprep.subr.mxu0 0.0
        %1861 = vmatpush1.msra.mxu0 %v1849
        %1862 = vmatprep.subr.mxu0 0.0
        %1863 = vmatpush1.msra.mxu0 0.0
        %1864 = vmatprep.subr.mxu0 0.0
        %1865 = vmatpush1.msra.mxu0 0.0
        %1866 = vmatprep.subr.mxu0 0.0
        %1867 = vmatpush1.msra.mxu0 0.0
        %1868 = vmatprep.subr.mxu0 0.0
        %1869 = vmatpush1.msra.mxu0 0.0
        %1870 = vmatprep.subr.mxu0 0.0
        %1871 = vmatpush1.msra.mxu0 0.0
        %1872 = vmatprep.subr.mxu0 0.0
        %1873 = vmatpush1.msra.mxu0 0.0
        %1874 = vmatprep.subr.mxu0 0.0
        %1875 = vmatpush1.msra.mxu0 0.0
        %1876 = vmatprep.subr.mxu0 0.0
        %1877 = vmatpush1.msra.mxu0 0.0
        %1878 = vmatprep.subr.mxu0 0.0
        %1879 = vmatpush1.msra.mxu0 0.0
        %1880 = vmatprep.subr.mxu0 0.0
        %1881 = vmatpush1.msra.mxu0 0.0
        %1882 = vmatprep.subr.mxu0 0.0
        %1883 = vmatpush1.msra.mxu0 0.0
        %1884 = vmatprep.subr.mxu0 0.0
        %1885 = vmatpush1.msra.mxu0 0.0
        %1886 = vmatprep.subr.mxu0 0.0
        %1887 = vmatpush1.msra.mxu0 0.0
        %1888 = vmatprep.subr.mxu0 0.0
        %1889 = vmatpush1.msra.mxu0 0.0
        %1890 = vmatprep.subr.mxu0 0.0
        %1891 = vmatpush1.msra.mxu0 0.0
        %1892 = vmatprep.subr.mxu0 0.0
        %1893 = vmatpush1.msra.mxu0 0.0
        %1894 = vmatprep.subr.mxu0 0.0
        %1895 = vmatpush1.msra.mxu0 0.0
        %1896 = vmatprep.subr.mxu0 0.0
        %1897 = vmatpush1.msra.mxu0 0.0
        %1898 = vmatprep.subr.mxu0 0.0
        %1899 = vmatpush1.msra.mxu0 0.0
        %1900 = vmatprep.subr.mxu0 0.0
        %1901 = vmatpush1.msra.mxu0 0.0
        %1902 = vmatprep.subr.mxu0 0.0
        %1903 = vmatpush1.msra.mxu0 0.0
        %1904 = vmatprep.subr.mxu0 0.0
        %1905 = vmatpush1.msra.mxu0 0.0
        %1906 = vmatprep.subr.mxu0 0.0
        %1907 = vmatpush1.msra.mxu0 0.0
        %1908 = vmatprep.subr.mxu0 0.0
        %1909 = vmatpush1.msra.mxu0 0.0
        %1910 = vmatprep.subr.mxu0 0.0
        %1911 = vmatpush1.msra.mxu0 0.0
        %1912 = vmatprep.subr.mxu0 0.0
        %1913 = vmatpush1.msra.mxu0 0.0
        %1914 = vmatprep.subr.mxu0 0.0
        %1915 = vmatpush1.msra.mxu0 0.0
        %1916 = vmatprep.subr.mxu0 0.0
        %1917 = vmatpush1.msra.mxu0 0.0
        %1918 = vmatprep.subr.mxu0 0.0
        %1919 = vmatpush1.msra.mxu0 0.0
        %1920 = vmatprep.subr.mxu0 0.0
        %1921 = vmatpush1.msra.mxu0 0.0
        %1922 = vmatprep.mubr.f32.mxu0 0.0
        %1923 = vmatmul.mubr.f32.gmra.mrb[0].mxu0 %v1853
        %v1924 = vpop.f32.mrb[0].mxu0
        %v1925 = vadd.f32 0.0, %v1924
        %v1926 = vpop.f32.mrb[0].mxu0
        %1927 = vmatprep.mubr.f32.mxu0 0.0
        %1928 = vmatmul.mubr.f32.gmra.mrb[0].mxu0 %v1856
        %v1929 = vpop.f32.mrb[0].mxu0
        %v1930 = vadd.f32 0.0, %v1929
        %v1931 = vpop.f32.mrb[0].mxu0
        %1932 = vdwg.mxu0
        %v1933 = vrcp.pop %v1842
        %v1934 = vrcp.pop %v1845
        %v1935 = vmul.f32 %v1925, %v1933
        %v1936 = vmul.f32 %v1930, %v1934
        %1939 = vrot.lane.b32.xlu0 %v1935, 64
        %v1940 = vpop.permute.xlu0 %1939
        %1941 = vrot.lane.b32.xlu0 %v1936, 64
        %v1942 = vpop.permute.xlu0 %1941
        %vm1945 = vcmask 654848
        %1946 = vst.msk [vmem:[#allocation2] sm:$0xff] %vm1945, %v1940
        %1947 = vst.msk [vmem:[#allocation2 + $0x8] sm:$0xff] %vm1945, %v1942
        %1948 = vrot.lane.b32.xlu0 %v677, 48
        %v1949 = vpop.permute.xlu0 %1948
        %1950 = vrot.lane.b32.xlu0 %v682, 48
        %v1951 = vpop.permute.xlu0 %1950
        %1952 = vrot.lane.b32.xlu0 %v775, 48
        %v1953 = vpop.permute.xlu0 %1952
        %1954 = vrot.lane.b32.xlu0 %v780, 48
        %v1955 = vpop.permute.xlu0 %1954
        %v1956 = vsel %vm889, %v1949, 0
        %v1958 = vsel %vm889, %v1951, 0
        %v1960 = vsel %vm889, %v1953, 0
        %v1962 = vsel %vm889, %v1955, 0
        %1964 = vmatprep.subr.mxu0 0.0
        %1965 = vmatpush1.xpose.msra.mxu0 %v1960
        %1966 = vmatprep.subr.mxu0 0.0
        %1967 = vmatpush1.xpose.msra.mxu0 %v1962
        %1968 = vmatprep.subr.mxu0 0.0
        %1969 = vmatpush1.xpose.msra.mxu0 0.0
        %1970 = vmatprep.subr.mxu0 0.0
        %1971 = vmatpush1.xpose.msra.mxu0 0.0
        %1972 = vmatprep.subr.mxu0 0.0
        %1973 = vmatpush1.xpose.msra.mxu0 0.0
        %1974 = vmatprep.subr.mxu0 0.0
        %1975 = vmatpush1.xpose.msra.mxu0 0.0
        %1976 = vmatprep.subr.mxu0 0.0
        %1977 = vmatpush1.xpose.msra.mxu0 0.0
        %1978 = vmatprep.subr.mxu0 0.0
        %1979 = vmatpush1.xpose.msra.mxu0 0.0
        %1980 = vmatprep.subr.mxu0 0.0
        %1981 = vmatpush1.xpose.msra.mxu0 0.0
        %1982 = vmatprep.subr.mxu0 0.0
        %1983 = vmatpush1.xpose.msra.mxu0 0.0
        %1984 = vmatprep.subr.mxu0 0.0
        %1985 = vmatpush1.xpose.msra.mxu0 0.0
        %1986 = vmatprep.subr.mxu0 0.0
        %1987 = vmatpush1.xpose.msra.mxu0 0.0
        %1988 = vmatprep.subr.mxu0 0.0
        %1989 = vmatpush1.xpose.msra.mxu0 0.0
        %1990 = vmatprep.subr.mxu0 0.0
        %1991 = vmatpush1.xpose.msra.mxu0 0.0
        %1992 = vmatprep.subr.mxu0 0.0
        %1993 = vmatpush1.xpose.msra.mxu0 0.0
        %1994 = vmatprep.subr.mxu0 0.0
        %1995 = vmatpush1.xpose.msra.mxu0 0.0
        %1996 = vmatprep.subr.mxu0 0.0
        %1997 = vmatpush1.xpose.msra.mxu0 0.0
        %1998 = vmatprep.subr.mxu0 0.0
        %1999 = vmatpush1.xpose.msra.mxu0 0.0
        %2000 = vmatprep.subr.mxu0 0.0
        %2001 = vmatpush1.xpose.msra.mxu0 0.0
        %2002 = vmatprep.subr.mxu0 0.0
        %2003 = vmatpush1.xpose.msra.mxu0 0.0
        %2004 = vmatprep.subr.mxu0 0.0
        %2005 = vmatpush1.xpose.msra.mxu0 0.0
        %2006 = vmatprep.subr.mxu0 0.0
        %2007 = vmatpush1.xpose.msra.mxu0 0.0
        %2008 = vmatprep.subr.mxu0 0.0
        %2009 = vmatpush1.xpose.msra.mxu0 0.0
        %2010 = vmatprep.subr.mxu0 0.0
        %2011 = vmatpush1.xpose.msra.mxu0 0.0
        %2012 = vmatprep.subr.mxu0 0.0
        %2013 = vmatpush1.xpose.msra.mxu0 0.0
        %2014 = vmatprep.subr.mxu0 0.0
        %2015 = vmatpush1.xpose.msra.mxu0 0.0
        %2016 = vmatprep.subr.mxu0 0.0
        %2017 = vmatpush1.xpose.msra.mxu0 0.0
        %2018 = vmatprep.subr.mxu0 0.0
        %2019 = vmatpush1.xpose.msra.mxu0 0.0
        %2020 = vmatprep.subr.mxu0 0.0
        %2021 = vmatpush1.xpose.msra.mxu0 0.0
        %2022 = vmatprep.subr.mxu0 0.0
        %2023 = vmatpush1.xpose.msra.mxu0 0.0
        %2024 = vmatprep.subr.mxu0 0.0
        %2025 = vmatpush1.xpose.msra.mxu0 0.0
        %2026 = vmatprep.subr.mxu0 0.0
        %2027 = vmatpush1.xpose.msra.mxu0 0.0
        %2028 = vmatprep.mubr.f32.mxu0 0.0
        %2029 = vmatmul.mubr.f32.gmra.mrb[0].mxu0 %v1956
        %v2030 = vpop.f32.mrb[0].mxu0
        %v2031 = vadd.f32 0.0, %v2030
        %v2032 = vpop.f32.mrb[0].mxu0
        %2033 = vmatprep.mubr.f32.mxu0 0.0
        %2034 = vmatmul.mubr.f32.gmra.mrb[0].mxu0 %v1958
        %v2035 = vpop.f32.mrb[0].mxu0
        %v2036 = vadd.f32 0.0, %v2035
        %v2037 = vpop.f32.mrb[0].mxu0
        %2038 = vdwg.mxu0
        %v2039 = vmul.f32 %v2031, 0.25
        %v2040 = vmul.f32 %v2036, 0.25
        %v2041 = vsel %vm888, -1e+09, %v2039
        %v2042 = vsel %vm888, -1e+09, %v2040
        %v2043 = vsel %vm889, %v2041, -inf
        %2044 = vmax.xlane.f32.xlu0 %v2043
        %v2045 = vpop.xlane.xlu0 %2044
        %v2046 = vsel %vm889, %v2042, -inf
        %2047 = vmax.xlane.f32.xlu0 %v2046
        %v2048 = vpop.xlane.xlu0 %2047
        %v2049 = vsub.f32 %v2041, %v2045
        %v2050 = vsub.f32 %v2042, %v2048
        %v2051 = vmul.f32 %v2049, 1.442695
        %v2052 = vpow.pop %v2051
        %v2053 = vmul.f32 %v2050, 1.442695
        %v2054 = vpow.pop %v2053
        %v2055 = vsel %vm889, %v2052, 0.0
        %2056 = vadd.xlane.f32.xlu0 %v2055
        %v2057 = vpop.xlane.xlu0 %2056
        %v2058 = vsel %vm889, %v2054, 0.0
        %2059 = vadd.xlane.f32.xlu0 %v2058
        %v2060 = vpop.xlane.xlu0 %2059
        %2061 = vrot.lane.b32.xlu0 %v873, 48
        %v2062 = vpop.permute.xlu0 %2061
        %2063 = vrot.lane.b32.xlu0 %v878, 48
        %v2064 = vpop.permute.xlu0 %2063
        %v2068 = vsel %vm889, %v2052, 0
        %v2071 = vsel %vm889, %v2054, 0
        %2073 = vmatprep.subr.mxu0 0.0
        %2074 = vmatpush1.msra.mxu0 %v2062
        %2075 = vmatprep.subr.mxu0 0.0
        %2076 = vmatpush1.msra.mxu0 %v2064
        %2077 = vmatprep.subr.mxu0 0.0
        %2078 = vmatpush1.msra.mxu0 0.0
        %2079 = vmatprep.subr.mxu0 0.0
        %2080 = vmatpush1.msra.mxu0 0.0
        %2081 = vmatprep.subr.mxu0 0.0
        %2082 = vmatpush1.msra.mxu0 0.0
        %2083 = vmatprep.subr.mxu0 0.0
        %2084 = vmatpush1.msra.mxu0 0.0
        %2085 = vmatprep.subr.mxu0 0.0
        %2086 = vmatpush1.msra.mxu0 0.0
        %2087 = vmatprep.subr.mxu0 0.0
        %2088 = vmatpush1.msra.mxu0 0.0
        %2089 = vmatprep.subr.mxu0 0.0
        %2090 = vmatpush1.msra.mxu0 0.0
        %2091 = vmatprep.subr.mxu0 0.0
        %2092 = vmatpush1.msra.mxu0 0.0
        %2093 = vmatprep.subr.mxu0 0.0
        %2094 = vmatpush1.msra.mxu0 0.0
        %2095 = vmatprep.subr.mxu0 0.0
        %2096 = vmatpush1.msra.mxu0 0.0
        %2097 = vmatprep.subr.mxu0 0.0
        %2098 = vmatpush1.msra.mxu0 0.0
        %2099 = vmatprep.subr.mxu0 0.0
        %2100 = vmatpush1.msra.mxu0 0.0
        %2101 = vmatprep.subr.mxu0 0.0
        %2102 = vmatpush1.msra.mxu0 0.0
        %2103 = vmatprep.subr.mxu0 0.0
        %2104 = vmatpush1.msra.mxu0 0.0
        %2105 = vmatprep.subr.mxu0 0.0
        %2106 = vmatpush1.msra.mxu0 0.0
        %2107 = vmatprep.subr.mxu0 0.0
        %2108 = vmatpush1.msra.mxu0 0.0
        %2109 = vmatprep.subr.mxu0 0.0
        %2110 = vmatpush1.msra.mxu0 0.0
        %2111 = vmatprep.subr.mxu0 0.0
        %2112 = vmatpush1.msra.mxu0 0.0
        %2113 = vmatprep.subr.mxu0 0.0
        %2114 = vmatpush1.msra.mxu0 0.0
        %2115 = vmatprep.subr.mxu0 0.0
        %2116 = vmatpush1.msra.mxu0 0.0
        %2117 = vmatprep.subr.mxu0 0.0
        %2118 = vmatpush1.msra.mxu0 0.0
        %2119 = vmatprep.subr.mxu0 0.0
        %2120 = vmatpush1.msra.mxu0 0.0
        %2121 = vmatprep.subr.mxu0 0.0
        %2122 = vmatpush1.msra.mxu0 0.0
        %2123 = vmatprep.subr.mxu0 0.0
        %2124 = vmatpush1.msra.mxu0 0.0
        %2125 = vmatprep.subr.mxu0 0.0
        %2126 = vmatpush1.msra.mxu0 0.0
        %2127 = vmatprep.subr.mxu0 0.0
        %2128 = vmatpush1.msra.mxu0 0.0
        %2129 = vmatprep.subr.mxu0 0.0
        %2130 = vmatpush1.msra.mxu0 0.0
        %2131 = vmatprep.subr.mxu0 0.0
        %2132 = vmatpush1.msra.mxu0 0.0
        %2133 = vmatprep.subr.mxu0 0.0
        %2134 = vmatpush1.msra.mxu0 0.0
        %2135 = vmatprep.subr.mxu0 0.0
        %2136 = vmatpush1.msra.mxu0 0.0
        %2137 = vmatprep.mubr.f32.mxu0 0.0
        %2138 = vmatmul.mubr.f32.gmra.mrb[0].mxu0 %v2068
        %v2139 = vpop.f32.mrb[0].mxu0
        %v2140 = vadd.f32 0.0, %v2139
        %v2141 = vpop.f32.mrb[0].mxu0
        %2142 = vmatprep.mubr.f32.mxu0 0.0
        %2143 = vmatmul.mubr.f32.gmra.mrb[0].mxu0 %v2071
        %v2144 = vpop.f32.mrb[0].mxu0
        %v2145 = vadd.f32 0.0, %v2144
        %v2146 = vpop.f32.mrb[0].mxu0
        %2147 = vdwg.mxu0
        %v2148 = vrcp.pop %v2057
        %v2149 = vrcp.pop %v2060
        %v2150 = vmul.f32 %v2140, %v2148
        %v2151 = vmul.f32 %v2145, %v2149
        %2154 = vrot.lane.b32.xlu0 %v2150, 80
        %v2155 = vpop.permute.xlu0 %2154
        %2156 = vrot.lane.b32.xlu0 %v2151, 80
        %v2157 = vpop.permute.xlu0 %2156
        %vm2160 = vcmask 786048
        %2161 = vst.msk [vmem:[#allocation2] sm:$0xff] %vm2160, %v2155
        %2162 = vst.msk [vmem:[#allocation2 + $0x8] sm:$0xff] %vm2160, %v2157
        %2163 = vrot.lane.b32.xlu0 %v677, 32
        %v2164 = vpop.permute.xlu0 %2163
        %2165 = vrot.lane.b32.xlu0 %v682, 32
        %v2166 = vpop.permute.xlu0 %2165
        %2167 = vrot.lane.b32.xlu0 %v775, 32
        %v2168 = vpop.permute.xlu0 %2167
        %2169 = vrot.lane.b32.xlu0 %v780, 32
        %v2170 = vpop.permute.xlu0 %2169
        %v2171 = vsel %vm889, %v2164, 0
        %v2173 = vsel %vm889, %v2166, 0
        %v2175 = vsel %vm889, %v2168, 0
        %v2177 = vsel %vm889, %v2170, 0
        %2179 = vmatprep.subr.mxu0 0.0
        %2180 = vmatpush1.xpose.msra.mxu0 %v2175
        %2181 = vmatprep.subr.mxu0 0.0
        %2182 = vmatpush1.xpose.msra.mxu0 %v2177
        %2183 = vmatprep.subr.mxu0 0.0
        %2184 = vmatpush1.xpose.msra.mxu0 0.0
        %2185 = vmatprep.subr.mxu0 0.0
        %2186 = vmatpush1.xpose.msra.mxu0 0.0
        %2187 = vmatprep.subr.mxu0 0.0
        %2188 = vmatpush1.xpose.msra.mxu0 0.0
        %2189 = vmatprep.subr.mxu0 0.0
        %2190 = vmatpush1.xpose.msra.mxu0 0.0
        %2191 = vmatprep.subr.mxu0 0.0
        %2192 = vmatpush1.xpose.msra.mxu0 0.0
        %2193 = vmatprep.subr.mxu0 0.0
        %2194 = vmatpush1.xpose.msra.mxu0 0.0
        %2195 = vmatprep.subr.mxu0 0.0
        %2196 = vmatpush1.xpose.msra.mxu0 0.0
        %2197 = vmatprep.subr.mxu0 0.0
        %2198 = vmatpush1.xpose.msra.mxu0 0.0
        %2199 = vmatprep.subr.mxu0 0.0
        %2200 = vmatpush1.xpose.msra.mxu0 0.0
        %2201 = vmatprep.subr.mxu0 0.0
        %2202 = vmatpush1.xpose.msra.mxu0 0.0
        %2203 = vmatprep.subr.mxu0 0.0
        %2204 = vmatpush1.xpose.msra.mxu0 0.0
        %2205 = vmatprep.subr.mxu0 0.0
        %2206 = vmatpush1.xpose.msra.mxu0 0.0
        %2207 = vmatprep.subr.mxu0 0.0
        %2208 = vmatpush1.xpose.msra.mxu0 0.0
        %2209 = vmatprep.subr.mxu0 0.0
        %2210 = vmatpush1.xpose.msra.mxu0 0.0
        %2211 = vmatprep.subr.mxu0 0.0
        %2212 = vmatpush1.xpose.msra.mxu0 0.0
        %2213 = vmatprep.subr.mxu0 0.0
        %2214 = vmatpush1.xpose.msra.mxu0 0.0
        %2215 = vmatprep.subr.mxu0 0.0
        %2216 = vmatpush1.xpose.msra.mxu0 0.0
        %2217 = vmatprep.subr.mxu0 0.0
        %2218 = vmatpush1.xpose.msra.mxu0 0.0
        %2219 = vmatprep.subr.mxu0 0.0
        %2220 = vmatpush1.xpose.msra.mxu0 0.0
        %2221 = vmatprep.subr.mxu0 0.0
        %2222 = vmatpush1.xpose.msra.mxu0 0.0
        %2223 = vmatprep.subr.mxu0 0.0
        %2224 = vmatpush1.xpose.msra.mxu0 0.0
        %2225 = vmatprep.subr.mxu0 0.0
        %2226 = vmatpush1.xpose.msra.mxu0 0.0
        %2227 = vmatprep.subr.mxu0 0.0
        %2228 = vmatpush1.xpose.msra.mxu0 0.0
        %2229 = vmatprep.subr.mxu0 0.0
        %2230 = vmatpush1.xpose.msra.mxu0 0.0
        %2231 = vmatprep.subr.mxu0 0.0
        %2232 = vmatpush1.xpose.msra.mxu0 0.0
        %2233 = vmatprep.subr.mxu0 0.0
        %2234 = vmatpush1.xpose.msra.mxu0 0.0
        %2235 = vmatprep.subr.mxu0 0.0
        %2236 = vmatpush1.xpose.msra.mxu0 0.0
        %2237 = vmatprep.subr.mxu0 0.0
        %2238 = vmatpush1.xpose.msra.mxu0 0.0
        %2239 = vmatprep.subr.mxu0 0.0
        %2240 = vmatpush1.xpose.msra.mxu0 0.0
        %2241 = vmatprep.subr.mxu0 0.0
        %2242 = vmatpush1.xpose.msra.mxu0 0.0
        %2243 = vmatprep.mubr.f32.mxu0 0.0
        %2244 = vmatmul.mubr.f32.gmra.mrb[0].mxu0 %v2171
        %v2245 = vpop.f32.mrb[0].mxu0
        %v2246 = vadd.f32 0.0, %v2245
        %v2247 = vpop.f32.mrb[0].mxu0
        %2248 = vmatprep.mubr.f32.mxu0 0.0
        %2249 = vmatmul.mubr.f32.gmra.mrb[0].mxu0 %v2173
        %v2250 = vpop.f32.mrb[0].mxu0
        %v2251 = vadd.f32 0.0, %v2250
        %v2252 = vpop.f32.mrb[0].mxu0
        %2253 = vdwg.mxu0
        %v2254 = vmul.f32 %v2246, 0.25
        %v2255 = vmul.f32 %v2251, 0.25
        %v2256 = vsel %vm888, -1e+09, %v2254
        %v2257 = vsel %vm888, -1e+09, %v2255
        %v2258 = vsel %vm889, %v2256, -inf
        %2259 = vmax.xlane.f32.xlu0 %v2258
        %v2260 = vpop.xlane.xlu0 %2259
        %v2261 = vsel %vm889, %v2257, -inf
        %2262 = vmax.xlane.f32.xlu0 %v2261
        %v2263 = vpop.xlane.xlu0 %2262
        %v2264 = vsub.f32 %v2256, %v2260
        %v2265 = vsub.f32 %v2257, %v2263
        %v2266 = vmul.f32 %v2264, 1.442695
        %v2267 = vpow.pop %v2266
        %v2268 = vmul.f32 %v2265, 1.442695
        %v2269 = vpow.pop %v2268
        %v2270 = vsel %vm889, %v2267, 0.0
        %2271 = vadd.xlane.f32.xlu0 %v2270
        %v2272 = vpop.xlane.xlu0 %2271
        %v2273 = vsel %vm889, %v2269, 0.0
        %2274 = vadd.xlane.f32.xlu0 %v2273
        %v2275 = vpop.xlane.xlu0 %2274
        %2276 = vrot.lane.b32.xlu0 %v873, 32
        %v2277 = vpop.permute.xlu0 %2276
        %2278 = vrot.lane.b32.xlu0 %v878, 32
        %v2279 = vpop.permute.xlu0 %2278
        %v2283 = vsel %vm889, %v2267, 0
        %v2286 = vsel %vm889, %v2269, 0
        %2288 = vmatprep.subr.mxu0 0.0
        %2289 = vmatpush1.msra.mxu0 %v2277
        %2290 = vmatprep.subr.mxu0 0.0
        %2291 = vmatpush1.msra.mxu0 %v2279
        %2292 = vmatprep.subr.mxu0 0.0
        %2293 = vmatpush1.msra.mxu0 0.0
        %2294 = vmatprep.subr.mxu0 0.0
        %2295 = vmatpush1.msra.mxu0 0.0
        %2296 = vmatprep.subr.mxu0 0.0
        %2297 = vmatpush1.msra.mxu0 0.0
        %2298 = vmatprep.subr.mxu0 0.0
        %2299 = vmatpush1.msra.mxu0 0.0
        %2300 = vmatprep.subr.mxu0 0.0
        %2301 = vmatpush1.msra.mxu0 0.0
        %2302 = vmatprep.subr.mxu0 0.0
        %2303 = vmatpush1.msra.mxu0 0.0
        %2304 = vmatprep.subr.mxu0 0.0
        %2305 = vmatpush1.msra.mxu0 0.0
        %2306 = vmatprep.subr.mxu0 0.0
        %2307 = vmatpush1.msra.mxu0 0.0
        %2308 = vmatprep.subr.mxu0 0.0
        %2309 = vmatpush1.msra.mxu0 0.0
        %2310 = vmatprep.subr.mxu0 0.0
        %2311 = vmatpush1.msra.mxu0 0.0
        %2312 = vmatprep.subr.mxu0 0.0
        %2313 = vmatpush1.msra.mxu0 0.0
        %2314 = vmatprep.subr.mxu0 0.0
        %2315 = vmatpush1.msra.mxu0 0.0
        %2316 = vmatprep.subr.mxu0 0.0
        %2317 = vmatpush1.msra.mxu0 0.0
        %2318 = vmatprep.subr.mxu0 0.0
        %2319 = vmatpush1.msra.mxu0 0.0
        %2320 = vmatprep.subr.mxu0 0.0
        %2321 = vmatpush1.msra.mxu0 0.0
        %2322 = vmatprep.subr.mxu0 0.0
        %2323 = vmatpush1.msra.mxu0 0.0
        %2324 = vmatprep.subr.mxu0 0.0
        %2325 = vmatpush1.msra.mxu0 0.0
        %2326 = vmatprep.subr.mxu0 0.0
        %2327 = vmatpush1.msra.mxu0 0.0
        %2328 = vmatprep.subr.mxu0 0.0
        %2329 = vmatpush1.msra.mxu0 0.0
        %2330 = vmatprep.subr.mxu0 0.0
        %2331 = vmatpush1.msra.mxu0 0.0
        %2332 = vmatprep.subr.mxu0 0.0
        %2333 = vmatpush1.msra.mxu0 0.0
        %2334 = vmatprep.subr.mxu0 0.0
        %2335 = vmatpush1.msra.mxu0 0.0
        %2336 = vmatprep.subr.mxu0 0.0
        %2337 = vmatpush1.msra.mxu0 0.0
        %2338 = vmatprep.subr.mxu0 0.0
        %2339 = vmatpush1.msra.mxu0 0.0
        %2340 = vmatprep.subr.mxu0 0.0
        %2341 = vmatpush1.msra.mxu0 0.0
        %2342 = vmatprep.subr.mxu0 0.0
        %2343 = vmatpush1.msra.mxu0 0.0
        %2344 = vmatprep.subr.mxu0 0.0
        %2345 = vmatpush1.msra.mxu0 0.0
        %2346 = vmatprep.subr.mxu0 0.0
        %2347 = vmatpush1.msra.mxu0 0.0
        %2348 = vmatprep.subr.mxu0 0.0
        %2349 = vmatpush1.msra.mxu0 0.0
        %2350 = vmatprep.subr.mxu0 0.0
        %2351 = vmatpush1.msra.mxu0 0.0
        %2352 = vmatprep.mubr.f32.mxu0 0.0
        %2353 = vmatmul.mubr.f32.gmra.mrb[0].mxu0 %v2283
        %v2354 = vpop.f32.mrb[0].mxu0
        %v2355 = vadd.f32 0.0, %v2354
        %v2356 = vpop.f32.mrb[0].mxu0
        %2357 = vmatprep.mubr.f32.mxu0 0.0
        %2358 = vmatmul.mubr.f32.gmra.mrb[0].mxu0 %v2286
        %v2359 = vpop.f32.mrb[0].mxu0
        %v2360 = vadd.f32 0.0, %v2359
        %v2361 = vpop.f32.mrb[0].mxu0
        %2362 = vdwg.mxu0
        %v2363 = vrcp.pop %v2272
        %v2364 = vrcp.pop %v2275
        %v2365 = vmul.f32 %v2355, %v2363
        %v2366 = vmul.f32 %v2360, %v2364
        %2369 = vrot.lane.b32.xlu0 %v2365, 96
        %v2370 = vpop.permute.xlu0 %2369
        %2371 = vrot.lane.b32.xlu0 %v2366, 96
        %v2372 = vpop.permute.xlu0 %2371
        %vm2375 = vcmask 917248
        %2376 = vst.msk [vmem:[#allocation2] sm:$0xff] %vm2375, %v2370
        %2377 = vst.msk [vmem:[#allocation2 + $0x8] sm:$0xff] %vm2375, %v2372
        %2378 = vrot.lane.b32.xlu0 %v677, 16
        %v2379 = vpop.permute.xlu0 %2378
        %2380 = vrot.lane.b32.xlu0 %v682, 16
        %v2381 = vpop.permute.xlu0 %2380
        %2382 = vrot.lane.b32.xlu0 %v775, 16
        %v2383 = vpop.permute.xlu0 %2382
        %2384 = vrot.lane.b32.xlu0 %v780, 16
        %v2385 = vpop.permute.xlu0 %2384
        %v2386 = vsel %vm889, %v2379, 0
        %v2388 = vsel %vm889, %v2381, 0
        %v2390 = vsel %vm889, %v2383, 0
        %v2392 = vsel %vm889, %v2385, 0
        %2394 = vmatprep.subr.mxu0 0.0
        %2395 = vmatpush1.xpose.msra.mxu0 %v2390
        %2396 = vmatprep.subr.mxu0 0.0
        %2397 = vmatpush1.xpose.msra.mxu0 %v2392
        %2398 = vmatprep.subr.mxu0 0.0
        %2399 = vmatpush1.xpose.msra.mxu0 0.0
        %2400 = vmatprep.subr.mxu0 0.0
        %2401 = vmatpush1.xpose.msra.mxu0 0.0
        %2402 = vmatprep.subr.mxu0 0.0
        %2403 = vmatpush1.xpose.msra.mxu0 0.0
        %2404 = vmatprep.subr.mxu0 0.0
        %2405 = vmatpush1.xpose.msra.mxu0 0.0
        %2406 = vmatprep.subr.mxu0 0.0
        %2407 = vmatpush1.xpose.msra.mxu0 0.0
        %2408 = vmatprep.subr.mxu0 0.0
        %2409 = vmatpush1.xpose.msra.mxu0 0.0
        %2410 = vmatprep.subr.mxu0 0.0
        %2411 = vmatpush1.xpose.msra.mxu0 0.0
        %2412 = vmatprep.subr.mxu0 0.0
        %2413 = vmatpush1.xpose.msra.mxu0 0.0
        %2414 = vmatprep.subr.mxu0 0.0
        %2415 = vmatpush1.xpose.msra.mxu0 0.0
        %2416 = vmatprep.subr.mxu0 0.0
        %2417 = vmatpush1.xpose.msra.mxu0 0.0
        %2418 = vmatprep.subr.mxu0 0.0
        %2419 = vmatpush1.xpose.msra.mxu0 0.0
        %2420 = vmatprep.subr.mxu0 0.0
        %2421 = vmatpush1.xpose.msra.mxu0 0.0
        %2422 = vmatprep.subr.mxu0 0.0
        %2423 = vmatpush1.xpose.msra.mxu0 0.0
        %2424 = vmatprep.subr.mxu0 0.0
        %2425 = vmatpush1.xpose.msra.mxu0 0.0
        %2426 = vmatprep.subr.mxu0 0.0
        %2427 = vmatpush1.xpose.msra.mxu0 0.0
        %2428 = vmatprep.subr.mxu0 0.0
        %2429 = vmatpush1.xpose.msra.mxu0 0.0
        %2430 = vmatprep.subr.mxu0 0.0
        %2431 = vmatpush1.xpose.msra.mxu0 0.0
        %2432 = vmatprep.subr.mxu0 0.0
        %2433 = vmatpush1.xpose.msra.mxu0 0.0
        %2434 = vmatprep.subr.mxu0 0.0
        %2435 = vmatpush1.xpose.msra.mxu0 0.0
        %2436 = vmatprep.subr.mxu0 0.0
        %2437 = vmatpush1.xpose.msra.mxu0 0.0
        %2438 = vmatprep.subr.mxu0 0.0
        %2439 = vmatpush1.xpose.msra.mxu0 0.0
        %2440 = vmatprep.subr.mxu0 0.0
        %2441 = vmatpush1.xpose.msra.mxu0 0.0
        %2442 = vmatprep.subr.mxu0 0.0
        %2443 = vmatpush1.xpose.msra.mxu0 0.0
        %2444 = vmatprep.subr.mxu0 0.0
        %2445 = vmatpush1.xpose.msra.mxu0 0.0
        %2446 = vmatprep.subr.mxu0 0.0
        %2447 = vmatpush1.xpose.msra.mxu0 0.0
        %2448 = vmatprep.subr.mxu0 0.0
        %2449 = vmatpush1.xpose.msra.mxu0 0.0
        %2450 = vmatprep.subr.mxu0 0.0
        %2451 = vmatpush1.xpose.msra.mxu0 0.0
        %2452 = vmatprep.subr.mxu0 0.0
        %2453 = vmatpush1.xpose.msra.mxu0 0.0
        %2454 = vmatprep.subr.mxu0 0.0
        %2455 = vmatpush1.xpose.msra.mxu0 0.0
        %2456 = vmatprep.subr.mxu0 0.0
        %2457 = vmatpush1.xpose.msra.mxu0 0.0
        %2458 = vmatprep.mubr.f32.mxu0 0.0
        %2459 = vmatmul.mubr.f32.gmra.mrb[0].mxu0 %v2386
        %v2460 = vpop.f32.mrb[0].mxu0
        %v2461 = vadd.f32 0.0, %v2460
        %v2462 = vpop.f32.mrb[0].mxu0
        %2463 = vmatprep.mubr.f32.mxu0 0.0
        %2464 = vmatmul.mubr.f32.gmra.mrb[0].mxu0 %v2388
        %v2465 = vpop.f32.mrb[0].mxu0
        %v2466 = vadd.f32 0.0, %v2465
        %v2467 = vpop.f32.mrb[0].mxu0
        %2468 = vdwg.mxu0
        %v2469 = vmul.f32 %v2461, 0.25
        %v2470 = vmul.f32 %v2466, 0.25
        %v2471 = vsel %vm888, -1e+09, %v2469
        %v2472 = vsel %vm888, -1e+09, %v2470
        %v2473 = vsel %vm889, %v2471, -inf
        %2474 = vmax.xlane.f32.xlu0 %v2473
        %v2475 = vpop.xlane.xlu0 %2474
        %v2476 = vsel %vm889, %v2472, -inf
        %2477 = vmax.xlane.f32.xlu0 %v2476
        %v2478 = vpop.xlane.xlu0 %2477
        %v2479 = vsub.f32 %v2471, %v2475
        %v2480 = vsub.f32 %v2472, %v2478
        %v2481 = vmul.f32 %v2479, 1.442695
        %v2482 = vpow.pop %v2481
        %v2483 = vmul.f32 %v2480, 1.442695
        %v2484 = vpow.pop %v2483
        %v2485 = vsel %vm889, %v2482, 0.0
        %2486 = vadd.xlane.f32.xlu0 %v2485
        %v2487 = vpop.xlane.xlu0 %2486
        %v2488 = vsel %vm889, %v2484, 0.0
        %2489 = vadd.xlane.f32.xlu0 %v2488
        %v2490 = vpop.xlane.xlu0 %2489
        %2491 = vrot.lane.b32.xlu0 %v873, 16
        %v2492 = vpop.permute.xlu0 %2491
        %2493 = vrot.lane.b32.xlu0 %v878, 16
        %v2494 = vpop.permute.xlu0 %2493
        %v2498 = vsel %vm889, %v2482, 0
        %v2501 = vsel %vm889, %v2484, 0
        %2503 = vmatprep.subr.mxu0 0.0
        %2504 = vmatpush1.msra.mxu0 %v2492
        %2505 = vmatprep.subr.mxu0 0.0
        %2506 = vmatpush1.msra.mxu0 %v2494
        %2507 = vmatprep.subr.mxu0 0.0
        %2508 = vmatpush1.msra.mxu0 0.0
        %2509 = vmatprep.subr.mxu0 0.0
        %2510 = vmatpush1.msra.mxu0 0.0
        %2511 = vmatprep.subr.mxu0 0.0
        %2512 = vmatpush1.msra.mxu0 0.0
        %2513 = vmatprep.subr.mxu0 0.0
        %2514 = vmatpush1.msra.mxu0 0.0
        %2515 = vmatprep.subr.mxu0 0.0
        %2516 = vmatpush1.msra.mxu0 0.0
        %2517 = vmatprep.subr.mxu0 0.0
        %2518 = vmatpush1.msra.mxu0 0.0
        %2519 = vmatprep.subr.mxu0 0.0
        %2520 = vmatpush1.msra.mxu0 0.0
        %2521 = vmatprep.subr.mxu0 0.0
        %2522 = vmatpush1.msra.mxu0 0.0
        %2523 = vmatprep.subr.mxu0 0.0
        %2524 = vmatpush1.msra.mxu0 0.0
        %2525 = vmatprep.subr.mxu0 0.0
        %2526 = vmatpush1.msra.mxu0 0.0
        %2527 = vmatprep.subr.mxu0 0.0
        %2528 = vmatpush1.msra.mxu0 0.0
        %2529 = vmatprep.subr.mxu0 0.0
        %2530 = vmatpush1.msra.mxu0 0.0
        %2531 = vmatprep.subr.mxu0 0.0
        %2532 = vmatpush1.msra.mxu0 0.0
        %2533 = vmatprep.subr.mxu0 0.0
        %2534 = vmatpush1.msra.mxu0 0.0
        %2535 = vmatprep.subr.mxu0 0.0
        %2536 = vmatpush1.msra.mxu0 0.0
        %2537 = vmatprep.subr.mxu0 0.0
        %2538 = vmatpush1.msra.mxu0 0.0
        %2539 = vmatprep.subr.mxu0 0.0
        %2540 = vmatpush1.msra.mxu0 0.0
        %2541 = vmatprep.subr.mxu0 0.0
        %2542 = vmatpush1.msra.mxu0 0.0
        %2543 = vmatprep.subr.mxu0 0.0
        %2544 = vmatpush1.msra.mxu0 0.0
        %2545 = vmatprep.subr.mxu0 0.0
        %2546 = vmatpush1.msra.mxu0 0.0
        %2547 = vmatprep.subr.mxu0 0.0
        %2548 = vmatpush1.msra.mxu0 0.0
        %2549 = vmatprep.subr.mxu0 0.0
        %2550 = vmatpush1.msra.mxu0 0.0
        %2551 = vmatprep.subr.mxu0 0.0
        %2552 = vmatpush1.msra.mxu0 0.0
        %2553 = vmatprep.subr.mxu0 0.0
        %2554 = vmatpush1.msra.mxu0 0.0
        %2555 = vmatprep.subr.mxu0 0.0
        %2556 = vmatpush1.msra.mxu0 0.0
        %2557 = vmatprep.subr.mxu0 0.0
        %2558 = vmatpush1.msra.mxu0 0.0
        %2559 = vmatprep.subr.mxu0 0.0
        %2560 = vmatpush1.msra.mxu0 0.0
        %2561 = vmatprep.subr.mxu0 0.0
        %2562 = vmatpush1.msra.mxu0 0.0
        %2563 = vmatprep.subr.mxu0 0.0
        %2564 = vmatpush1.msra.mxu0 0.0
        %2565 = vmatprep.subr.mxu0 0.0
        %2566 = vmatpush1.msra.mxu0 0.0
        %2567 = vmatprep.mubr.f32.mxu0 0.0
        %2568 = vmatmul.mubr.f32.gmra.mrb[0].mxu0 %v2498
        %v2569 = vpop.f32.mrb[0].mxu0
        %v2570 = vadd.f32 0.0, %v2569
        %v2571 = vpop.f32.mrb[0].mxu0
        %2572 = vmatprep.mubr.f32.mxu0 0.0
        %2573 = vmatmul.mubr.f32.gmra.mrb[0].mxu0 %v2501
        %v2574 = vpop.f32.mrb[0].mxu0
        %v2575 = vadd.f32 0.0, %v2574
        %v2576 = vpop.f32.mrb[0].mxu0
        %2577 = vdwg.mxu0
        %v2578 = vrcp.pop %v2487
        %v2579 = vrcp.pop %v2490
        %v2580 = vmul.f32 %v2570, %v2578
        %v2581 = vmul.f32 %v2575, %v2579
        %2584 = vrot.lane.b32.xlu0 %v2580, 112
        %v2585 = vpop.permute.xlu0 %2584
        %2586 = vrot.lane.b32.xlu0 %v2581, 112
        %v2587 = vpop.permute.xlu0 %2586
        %vm2590 = vcmask 1048448
        %2591 = vst.msk [vmem:[#allocation2] sm:$0xff] %vm2590, %v2585
        %2592 = vst.msk [vmem:[#allocation2 + $0x8] sm:$0xff] %vm2590, %v2587
        %v2593 = vld [vmem:[#allocation2] sm:$0xff]
        %v2594 = vld [vmem:[#allocation2 + $0x8] sm:$0xff]
        %v2595 = vld [vmem:[#allocation14] sm:$0xff]
        %v2596 = vld [vmem:[#allocation14 + $0x8] sm:$0xff]
        %v2597 = vld [vmem:[#allocation14 + $0x10] sm:$0xff]
        %v2598 = vld [vmem:[#allocation14 + $0x18] sm:$0xff]
        %v2599 = vld [vmem:[#allocation14 + $0x20] sm:$0xff]
        %v2600 = vld [vmem:[#allocation14 + $0x28] sm:$0xff]
        %v2601 = vld [vmem:[#allocation14 + $0x30] sm:$0xff]
        %v2602 = vld [vmem:[#allocation14 + $0x38] sm:$0xff]
        %v2603 = vld [vmem:[#allocation14 + $0x40] sm:$0xff]
        %v2604 = vld [vmem:[#allocation14 + $0x48] sm:$0xff]
        %v2605 = vld [vmem:[#allocation14 + $0x50] sm:$0xff]
        %v2606 = vld [vmem:[#allocation14 + $0x58] sm:$0xff]
        %v2607 = vld [vmem:[#allocation14 + $0x60] sm:$0xff]
        %v2608 = vld [vmem:[#allocation14 + $0x68] sm:$0xff]
        %v2609 = vld [vmem:[#allocation14 + $0x70] sm:$0xff]
        %v2610 = vld [vmem:[#allocation14 + $0x78] sm:$0xff]
        %v2611 = vld [vmem:[%s11] sm:$0x1]
        %v2613 = vlaneseq
        %v2614 = vshrl.u32 %v2613, 7
        %v2615 = vsub.s32 0, %v2614
        %v2616 = vrot.slane %v2611, %v2615
        %2618 = vmatprep.subr.mxu0 0.0
        %2619 = vmatpush1.msra.mxu0 %v2595
        %2620 = vmatprep.subr.mxu0 0.0
        %2621 = vmatpush1.msra.mxu0 %v2596
        %2622 = vmatprep.subr.mxu0 0.0
        %2623 = vmatpush1.msra.mxu0 %v2597
        %2624 = vmatprep.subr.mxu0 0.0
        %2625 = vmatpush1.msra.mxu0 %v2598
        %2626 = vmatprep.subr.mxu0 0.0
        %2627 = vmatpush1.msra.mxu0 %v2599
        %2628 = vmatprep.subr.mxu0 0.0
        %2629 = vmatpush1.msra.mxu0 %v2600
        %2630 = vmatprep.subr.mxu0 0.0
        %2631 = vmatpush1.msra.mxu0 %v2601
        %2632 = vmatprep.subr.mxu0 0.0
        %2633 = vmatpush1.msra.mxu0 %v2602
        %2634 = vmatprep.subr.mxu0 0.0
        %2635 = vmatpush1.msra.mxu0 %v2603
        %2636 = vmatprep.subr.mxu0 0.0
        %2637 = vmatpush1.msra.mxu0 %v2604
        %2638 = vmatprep.subr.mxu0 0.0
        %2639 = vmatpush1.msra.mxu0 %v2605
        %2640 = vmatprep.subr.mxu0 0.0
        %2641 = vmatpush1.msra.mxu0 %v2606
        %2642 = vmatprep.subr.mxu0 0.0
        %2643 = vmatpush1.msra.mxu0 %v2607
        %2644 = vmatprep.subr.mxu0 0.0
        %2645 = vmatpush1.msra.mxu0 %v2608
        %2646 = vmatprep.subr.mxu0 0.0
        %2647 = vmatpush1.msra.mxu0 %v2609
        %2648 = vmatprep.subr.mxu0 0.0
        %2649 = vmatpush1.msra.mxu0 %v2610
        %2650 = vmatprep.subr.mxu0 0.0
        %2651 = vmatpush1.msra.mxu0 0.0
        %2652 = vmatprep.subr.mxu0 0.0
        %2653 = vmatpush1.msra.mxu0 0.0
        %2654 = vmatprep.subr.mxu0 0.0
        %2655 = vmatpush1.msra.mxu0 0.0
        %2656 = vmatprep.subr.mxu0 0.0
        %2657 = vmatpush1.msra.mxu0 0.0
        %2658 = vmatprep.subr.mxu0 0.0
        %2659 = vmatpush1.msra.mxu0 0.0
        %2660 = vmatprep.subr.mxu0 0.0
        %2661 = vmatpush1.msra.mxu0 0.0
        %2662 = vmatprep.subr.mxu0 0.0
        %2663 = vmatpush1.msra.mxu0 0.0
        %2664 = vmatprep.subr.mxu0 0.0
        %2665 = vmatpush1.msra.mxu0 0.0
        %2666 = vmatprep.subr.mxu0 0.0
        %2667 = vmatpush1.msra.mxu0 0.0
        %2668 = vmatprep.subr.mxu0 0.0
        %2669 = vmatpush1.msra.mxu0 0.0
        %2670 = vmatprep.subr.mxu0 0.0
        %2671 = vmatpush1.msra.mxu0 0.0
        %2672 = vmatprep.subr.mxu0 0.0
        %2673 = vmatpush1.msra.mxu0 0.0
        %2674 = vmatprep.subr.mxu0 0.0
        %2675 = vmatpush1.msra.mxu0 0.0
        %2676 = vmatprep.subr.mxu0 0.0
        %2677 = vmatpush1.msra.mxu0 0.0
        %2678 = vmatprep.subr.mxu0 0.0
        %2679 = vmatpush1.msra.mxu0 0.0
        %2680 = vmatprep.subr.mxu0 0.0
        %2681 = vmatpush1.msra.mxu0 0.0
        %2682 = vmatprep.mubr.f32.mxu0 0.0
        %2683 = vmatmul.mubr.f32.gmra.mrb[0].mxu0 %v2593
        %v2684 = vpop.f32.mrb[0].mxu0
        %v2685 = vadd.f32 %v2616, %v2684
        %v2686 = vpop.f32.mrb[0].mxu0
        %2687 = vmatprep.mubr.f32.mxu0 0.0
        %2688 = vmatmul.mubr.f32.gmra.mrb[0].mxu0 %v2594
        %v2689 = vpop.f32.mrb[0].mxu0
        %v2690 = vadd.f32 %v2616, %v2689
        %v2691 = vpop.f32.mrb[0].mxu0
        %2692 = vdwg.mxu0
        %2693 = vst [vmem:[%s577] sm:$0xff] %v2685
        %2694 = vst [vmem:[%s577 + $0x8] sm:$0xff] %v2690
        %s2695 = sand.u32 %s314, 1
        %s2696 = scalar_lea.sflag [#allocation5], %s2695
        %s2697 = sand.u32 %s314, 1
        %s2698 = smul.addr %s2697, 16
        %s2699 = scalar_lea.vmem [#allocation15], %s2698
        // Predicated region
        $region97: #{tpu_custom_call.1} parent=67 // pred_check
          %p2700 = pneg %p324
        $region98: #{tpu_custom_call.1} parent=67 // pred_check_branch
          %2702 = sbr.rel (%p2700) target = $region100
        $region99: #{tpu_custom_call.1} parent=67 // pred_region
          %s2704 = ssub.s32 256, 256
          %2705 = vsyncadd %s2696, %s2704
          %s2706 = smul.addr %s34, 2
          %s2707 = smul.addr %s2706, 128
          %s2708 = scalar_lea.hbm %s12, %s2707
          %s2709 = sshll.u32 %s2699, 4
          %s2710 = int_to_ptr.vmem [resolvable:$true] %s2709
          %2715 = dma.vmem_to_hbm [thread:$0]  %s2710, 256, %s2708, %s2696, 128, 128, 8
        $region100: #{tpu_custom_call.1} parent=67 // pred_fallthru
          _
      $region68: #{tpu_custom_call.1} parent=5 // pred_fallthru
        _
      %p2716 = scmp.le.s32.totalorder 2, %s29
      // Predicated region
      $region101: #{tpu_custom_call.1} parent=5 // pred_check
        %p2717 = pneg %p2716
      $region102: #{tpu_custom_call.1} parent=5 // pred_check_branch
        %2719 = sbr.rel (%p2717) target = $region104
      $region103: #{tpu_custom_call.1} parent=5 // pred_region
        %s2720 = ssub.s32 %s29, 2
        // Predicated region
        $region105: #{tpu_custom_call.1} parent=103 // pred_check
          %p2721 = pneg %p330
        $region106: #{tpu_custom_call.1} parent=103 // pred_check_branch
          %2723 = sbr.rel (%p2721) target = $region108
        $region107: #{tpu_custom_call.1} parent=103 // pred_region
          %s2724 = sand.u32 %s315, 1
          %s2725 = scalar_lea.sflag [#allocation5], %s2724
          %s2726 = sand.u32 %s315, 1
          %s2727 = smul.addr %s2726, 16
          %s2728 = scalar_lea.vmem [#allocation15], %s2727
          %2729 = dma.done %s2725, 256
        $region108: #{tpu_custom_call.1} parent=103 // pred_fallthru
          _
      $region104: #{tpu_custom_call.1} parent=5 // pred_fallthru
        _
    $region6: #{tpu_custom_call.1} parent=1 // loop_footer
      %s33 = sadd.s32 1, %s29
    $region7: #{tpu_custom_call.1} parent=1 // loop_footer_branch
      %28 = sbr.rel target = $region3
    $region8: #{tpu_custom_call.1} parent=1 // loop_exit
      _
    %2730 = vsyncpa [#allocation4], 1
    %s2731 = scalar_lea.sflag [#allocation4], 1
    %2732 = vsyncpa %s2731, 1
    %2733 = vsyncpa [#allocation7], 1
    %s2734 = scalar_lea.sflag [#allocation7], 1
    %2735 = vsyncpa %s2734, 1
    %2736 = vsyncpa [#allocation10], 1
    %2737 = vsyncpa [#allocation13], 1
    %2738 = vsyncpa [#allocation5], 1
    %s2739 = scalar_lea.sflag [#allocation5], 1
    %2740 = vsyncpa %s2739, 1

</llo_original>
